<compile_context>
chip_gen: v7x
topology: tpu7x:2x2x1
jax: 0.10.0
libtpu: 0.0.40
codegen_flags: <defaults>
</compile_context>

<pallas_src>
import functools

import jax
import jax.numpy as jnp
from jax import lax
from jax.experimental import pallas as pl
from jax.experimental.pallas import tpu as pltpu

KH = KW = 3          # kernel_size=3, padding=1 -> SAME
NTAP = KH * KW       # 9 taps


def _im2col(xp_scr, patch_scr, H, W, C):
    """Fill patch_scr[(H*W), 9*C] with the 9 shifted windows of xp_scr."""
    for dy in range(KH):
        for dx in range(KW):
            t = dy * KW + dx
            tap = xp_scr[dy:dy + H, dx:dx + W, :].reshape(H * W, C)
            patch_scr[:, t * C:(t + 1) * C] = tap


def res_layer_kernel(x_ref, w1_ref, b1_ref, w2_ref, b2_ref, o_ref,
                     xp_scr, patch_scr, *, H, W, C):
    # Zero the padded scratch once; only the interior is written afterwards,
    # so the halo stays zero for both convs.
    xp_scr[...] = jnp.zeros_like(xp_scr)

    # Residual stays resident in VMEM for the whole kernel.
    x_hwc = x_ref[...].astype(jnp.float32)                       # (H, W, C)

    # ---- conv1 + ReLU ------------------------------------------------------
    xp_scr[1:H + 1, 1:W + 1, :] = x_hwc
    _im2col(xp_scr, patch_scr, H, W, C)
    h1 = jnp.dot(patch_scr[...], w1_ref[...],                    # (H*W, C)
                 preferred_element_type=jnp.float32)             # K = 9*C
    h1 = jnp.maximum(h1 + b1_ref[...], 0.0)

    # ---- conv2 + residual + ReLU --------------------------------------------
    xp_scr[1:H + 1, 1:W + 1, :] = h1.reshape(H, W, C)
    _im2col(xp_scr, patch_scr, H, W, C)
    y = jnp.dot(patch_scr[...], w2_ref[...],
                preferred_element_type=jnp.float32)
    y = jnp.maximum(y + b2_ref[...] + x_hwc.reshape(H * W, C), 0.0)

    o_ref[...] = y.reshape(H, W, C).astype(o_ref.dtype)


@jax.jit
def res_layer_2d(x_nchw, w1, b1, w2, b2):
    """ResLayer2D forward. x_nchw: (B, C, H, W); conv weights in OIHW."""
    B, C, H, W = x_nchw.shape
    x_nhwc = jnp.transpose(x_nchw, (0, 2, 3, 1))                 # NCHW -> NHWC

    def to_mat(w):  # OIHW -> HWIO -> (9*Cin, Cout), matching im2col ordering
        return jnp.transpose(w, (2, 3, 1, 0)).reshape(KH * KW * C, C)

    kernel = functools.partial(res_layer_kernel, H=H, W=W, C=C)
    out_nhwc = pl.pallas_call(
        kernel,
        out_shape=jax.ShapeDtypeStruct((B, H, W, C), x_nchw.dtype),
        grid=(B,),
        in_specs=[
            pl.BlockSpec((None, H, W, C), lambda b: (b, 0, 0, 0)),   # x (resident residual)
            pl.BlockSpec((KH * KW * C, C), lambda b: (0, 0)),        # w1 (9C, C)
            pl.BlockSpec((1, C), lambda b: (0, 0)),                  # b1
            pl.BlockSpec((KH * KW * C, C), lambda b: (0, 0)),        # w2
            pl.BlockSpec((1, C), lambda b: (0, 0)),                  # b2
        ],
        out_specs=pl.BlockSpec((None, H, W, C), lambda b: (b, 0, 0, 0)),
        scratch_shapes=[
            pltpu.VMEM((H + 2, W + 2, C), jnp.float32),          # padded activations
            pltpu.VMEM((H * W, KH * KW * C), jnp.float32),       # im2col patch
        ],
        compiler_params=pltpu.CompilerParams(
            dimension_semantics=("parallel",)),                  # v7x: one image per TC
    )(x_nhwc, to_mat(w1), b1.reshape(1, C), to_mat(w2), b2.reshape(1, C))

    return jnp.transpose(out_nhwc, (0, 3, 1, 2))                 # NHWC -> NCHW


def _ref_forward(x_nchw, w1, b1, w2, b2):
    """Pure-JAX reference (matches PyTorch Conv2d cross-correlation)."""
    x = jnp.transpose(x_nchw, (0, 2, 3, 1))
    dn = ('NHWC', 'HWIO', 'NHWC')

    def conv(v, w, b):
        w_hwio = jnp.transpose(w, (2, 3, 1, 0))
        y = lax.conv_general_dilated(v, w_hwio, (1, 1), 'SAME',
                                     dimension_numbers=dn)
        return y + b.reshape(1, 1, 1, -1)

    h = jnp.maximum(conv(x, w1, b1), 0.0)
    y = jnp.maximum(conv(h, w2, b2) + x, 0.0)
    return jnp.transpose(y, (0, 3, 1, 2))


if __name__ == "__main__":
    n, B, H, W = 16, 2, 16, 16   # module default n=16 (in=out channels)
    key = jax.random.PRNGKey(0)
    kx, kw1, kb1, kw2, kb2 = jax.random.split(key, 5)

    x = jax.random.normal(kx, (B, n, H, W), jnp.float32)

    # Deterministic Conv2d-style init: U(-1/sqrt(fan_in), 1/sqrt(fan_in))
    fan_in = n * KH * KW
    bound = 1.0 / (fan_in ** 0.5)
    w1 = jax.random.uniform(kw1, (n, n, KH, KW), jnp.float32, -bound, bound)
    b1 = jax.random.uniform(kb1, (n,), jnp.float32, -bound, bound)
    w2 = jax.random.uniform(kw2, (n, n, KH, KW), jnp.float32, -bound, bound)
    b2 = jax.random.uniform(kb2, (n,), jnp.float32, -bound, bound)

    out = jax.block_until_ready(res_layer_2d(x, w1, b1, w2, b2))
    ref = _ref_forward(x, w1, b1, w2, b2)

    assert out.shape == (B, n, H, W), out.shape
    err = float(jnp.max(jnp.abs(out - ref)))
    assert jnp.allclose(out, ref, atol=1e-4, rtol=1e-4), f"max abs err {err}"
    print("KERNEL_OK")
</pallas_src>

<mosaic_0001>
module attributes {stable_mosaic.version = 11 : i64} {
  func.func @res_layer_kernel(%arg0: i32, %arg1: memref<1x16x16x16xf32, #tpu.memory_space<vmem>>, %arg2: memref<144x16xf32, #tpu.memory_space<vmem>>, %arg3: memref<1x16xf32, #tpu.memory_space<vmem>>, %arg4: memref<144x16xf32, #tpu.memory_space<vmem>>, %arg5: memref<1x16xf32, #tpu.memory_space<vmem>>, %arg6: memref<1x16x16x16xf32, #tpu.memory_space<vmem>>, %arg7: memref<18x18x16xf32, #tpu.memory_space<vmem>>, %arg8: memref<256x144xf32, #tpu.memory_space<vmem>>) attributes {dimension_semantics = [#tpu.dimension_semantics<parallel>], iteration_bounds = array<i64: 2>, scalar_prefetch = 0 : i64, scratch_operands = 2 : i64, tpu.core_type = #tpu.core_type<tc>, window_params = [{transform_indices = @transform_0, window_bounds = array<i64: 1, 16, 16, 16>}, {pipeline_mode = #tpu.pipeline_mode<synchronous>, transform_indices = @transform_1, window_bounds = array<i64: 144, 16>}, {pipeline_mode = #tpu.pipeline_mode<synchronous>, transform_indices = @transform_2, window_bounds = array<i64: 1, 16>}, {pipeline_mode = #tpu.pipeline_mode<synchronous>, transform_indices = @transform_3, window_bounds = array<i64: 144, 16>}, {pipeline_mode = #tpu.pipeline_mode<synchronous>, transform_indices = @transform_4, window_bounds = array<i64: 1, 16>}, {transform_indices = @transform_5, window_bounds = array<i64: 1, 16, 16, 16>}]} {
    %cst = arith.constant 0.000000e+00 : f32
    %0 = vector.broadcast %cst : f32 to vector<18x18x16xf32>
    %c0 = arith.constant 0 : index
    %c0_0 = arith.constant 0 : index
    %c0_1 = arith.constant 0 : index
    %1 = vector.load %arg7[%c0, %c0_0, %c0_1] : memref<18x18x16xf32, #tpu.memory_space<vmem>>, vector<18x18x16xf32>
    tpu.vector_store %arg7[%c0, %c0_0, %c0_1], %0 {strides = array<i32>} : memref<18x18x16xf32, #tpu.memory_space<vmem>>, vector<18x18x16xf32>,
    %c0_2 = arith.constant 0 : index
    %c0_3 = arith.constant 0 : index
    %c0_4 = arith.constant 0 : index
    %c0_5 = arith.constant 0 : index
    %2 = vector.load %arg1[%c0_2, %c0_3, %c0_4, %c0_5] : memref<1x16x16x16xf32, #tpu.memory_space<vmem>>, vector<1x16x16x16xf32>
    %3 = vector.shape_cast %2 : vector<1x16x16x16xf32> to vector<16x16x16xf32>
    %c1 = arith.constant 1 : index
    %c1_6 = arith.constant 1 : index
    %c0_7 = arith.constant 0 : index
    %4 = vector.load %arg7[%c1, %c1_6, %c0_7] : memref<18x18x16xf32, #tpu.memory_space<vmem>>, vector<16x16x16xf32>
    tpu.vector_store %arg7[%c1, %c1_6, %c0_7], %3 {strides = array<i32>} : memref<18x18x16xf32, #tpu.memory_space<vmem>>, vector<16x16x16xf32>,
    %c0_8 = arith.constant 0 : index
    %c0_9 = arith.constant 0 : index
    %c0_10 = arith.constant 0 : index
    %5 = vector.load %arg7[%c0_8, %c0_9, %c0_10] : memref<18x18x16xf32, #tpu.memory_space<vmem>>, vector<16x16x16xf32>
    %6 = vector.shape_cast %5 : vector<16x16x16xf32> to vector<256x16xf32>
    %c0_11 = arith.constant 0 : index
    %c0_12 = arith.constant 0 : index
    %7 = vector.load %arg8[%c0_11, %c0_12] : memref<256x144xf32, #tpu.memory_space<vmem>>, vector<256x16xf32>
    tpu.vector_store %arg8[%c0_11, %c0_12], %6 {strides = array<i32>} : memref<256x144xf32, #tpu.memory_space<vmem>>, vector<256x16xf32>,
    %c0_13 = arith.constant 0 : index
    %c1_14 = arith.constant 1 : index
    %c0_15 = arith.constant 0 : index
    %8 = vector.load %arg7[%c0_13, %c1_14, %c0_15] : memref<18x18x16xf32, #tpu.memory_space<vmem>>, vector<16x16x16xf32>
    %9 = vector.shape_cast %8 : vector<16x16x16xf32> to vector<256x16xf32>
    %c0_16 = arith.constant 0 : index
    %c16 = arith.constant 16 : index
    %10 = vector.load %arg8[%c0_16, %c16] : memref<256x144xf32, #tpu.memory_space<vmem>>, vector<256x16xf32>
    tpu.vector_store %arg8[%c0_16, %c16], %9 {strides = array<i32>} : memref<256x144xf32, #tpu.memory_space<vmem>>, vector<256x16xf32>,
    %c0_17 = arith.constant 0 : index
    %c2 = arith.constant 2 : index
    %c0_18 = arith.constant 0 : index
    %11 = vector.load %arg7[%c0_17, %c2, %c0_18] : memref<18x18x16xf32, #tpu.memory_space<vmem>>, vector<16x16x16xf32>
    %12 = vector.shape_cast %11 : vector<16x16x16xf32> to vector<256x16xf32>
    %c0_19 = arith.constant 0 : index
    %c32 = arith.constant 32 : index
    %13 = vector.load %arg8[%c0_19, %c32] : memref<256x144xf32, #tpu.memory_space<vmem>>, vector<256x16xf32>
    tpu.vector_store %arg8[%c0_19, %c32], %12 {strides = array<i32>} : memref<256x144xf32, #tpu.memory_space<vmem>>, vector<256x16xf32>,
    %c1_20 = arith.constant 1 : index
    %c0_21 = arith.constant 0 : index
    %c0_22 = arith.constant 0 : index
    %14 = vector.load %arg7[%c1_20, %c0_21, %c0_22] : memref<18x18x16xf32, #tpu.memory_space<vmem>>, vector<16x16x16xf32>
    %15 = vector.shape_cast %14 : vector<16x16x16xf32> to vector<256x16xf32>
    %c0_23 = arith.constant 0 : index
    %c48 = arith.constant 48 : index
    %16 = vector.load %arg8[%c0_23, %c48] : memref<256x144xf32, #tpu.memory_space<vmem>>, vector<256x16xf32>
    tpu.vector_store %arg8[%c0_23, %c48], %15 {strides = array<i32>} : memref<256x144xf32, #tpu.memory_space<vmem>>, vector<256x16xf32>,
    %c1_24 = arith.constant 1 : index
    %c1_25 = arith.constant 1 : index
    %c0_26 = arith.constant 0 : index
    %17 = vector.load %arg7[%c1_24, %c1_25, %c0_26] : memref<18x18x16xf32, #tpu.memory_space<vmem>>, vector<16x16x16xf32>
    %18 = vector.shape_cast %17 : vector<16x16x16xf32> to vector<256x16xf32>
    %c0_27 = arith.constant 0 : index
    %c64 = arith.constant 64 : index
    %19 = vector.load %arg8[%c0_27, %c64] : memref<256x144xf32, #tpu.memory_space<vmem>>, vector<256x16xf32>
    tpu.vector_store %arg8[%c0_27, %c64], %18 {strides = array<i32>} : memref<256x144xf32, #tpu.memory_space<vmem>>, vector<256x16xf32>,
    %c1_28 = arith.constant 1 : index
    %c2_29 = arith.constant 2 : index
    %c0_30 = arith.constant 0 : index
    %20 = vector.load %arg7[%c1_28, %c2_29, %c0_30] : memref<18x18x16xf32, #tpu.memory_space<vmem>>, vector<16x16x16xf32>
    %21 = vector.shape_cast %20 : vector<16x16x16xf32> to vector<256x16xf32>
    %c0_31 = arith.constant 0 : index
    %c80 = arith.constant 80 : index
    %22 = vector.load %arg8[%c0_31, %c80] : memref<256x144xf32, #tpu.memory_space<vmem>>, vector<256x16xf32>
    tpu.vector_store %arg8[%c0_31, %c80], %21 {strides = array<i32>} : memref<256x144xf32, #tpu.memory_space<vmem>>, vector<256x16xf32>,
    %c2_32 = arith.constant 2 : index
    %c0_33 = arith.constant 0 : index
    %c0_34 = arith.constant 0 : index
    %23 = vector.load %arg7[%c2_32, %c0_33, %c0_34] : memref<18x18x16xf32, #tpu.memory_space<vmem>>, vector<16x16x16xf32>
    %24 = vector.shape_cast %23 : vector<16x16x16xf32> to vector<256x16xf32>
    %c0_35 = arith.constant 0 : index
    %c96 = arith.constant 96 : index
    %25 = vector.load %arg8[%c0_35, %c96] : memref<256x144xf32, #tpu.memory_space<vmem>>, vector<256x16xf32>
    tpu.vector_store %arg8[%c0_35, %c96], %24 {strides = array<i32>} : memref<256x144xf32, #tpu.memory_space<vmem>>, vector<256x16xf32>,
    %c2_36 = arith.constant 2 : index
    %c1_37 = arith.constant 1 : index
    %c0_38 = arith.constant 0 : index
    %26 = vector.load %arg7[%c2_36, %c1_37, %c0_38] : memref<18x18x16xf32, #tpu.memory_space<vmem>>, vector<16x16x16xf32>
    %27 = vector.shape_cast %26 : vector<16x16x16xf32> to vector<256x16xf32>
    %c0_39 = arith.constant 0 : index
    %c112 = arith.constant 112 : index
    %28 = vector.load %arg8[%c0_39, %c112] : memref<256x144xf32, #tpu.memory_space<vmem>>, vector<256x16xf32>
    tpu.vector_store %arg8[%c0_39, %c112], %27 {strides = array<i32>} : memref<256x144xf32, #tpu.memory_space<vmem>>, vector<256x16xf32>,
    %c2_40 = arith.constant 2 : index
    %c2_41 = arith.constant 2 : index
    %c0_42 = arith.constant 0 : index
    %29 = vector.load %arg7[%c2_40, %c2_41, %c0_42] : memref<18x18x16xf32, #tpu.memory_space<vmem>>, vector<16x16x16xf32>
    %30 = vector.shape_cast %29 : vector<16x16x16xf32> to vector<256x16xf32>
    %c0_43 = arith.constant 0 : index
    %c128 = arith.constant 128 : index
    %31 = vector.load %arg8[%c0_43, %c128] : memref<256x144xf32, #tpu.memory_space<vmem>>, vector<256x16xf32>
    tpu.vector_store %arg8[%c0_43, %c128], %30 {strides = array<i32>} : memref<256x144xf32, #tpu.memory_space<vmem>>, vector<256x16xf32>,
    %c0_44 = arith.constant 0 : index
    %c0_45 = arith.constant 0 : index
    %32 = vector.load %arg8[%c0_44, %c0_45] : memref<256x144xf32, #tpu.memory_space<vmem>>, vector<256x144xf32>
    %c0_46 = arith.constant 0 : index
    %c0_47 = arith.constant 0 : index
    %33 = vector.load %arg2[%c0_46, %c0_47] : memref<144x16xf32, #tpu.memory_space<vmem>>, vector<144x16xf32>
    %cst_48 = arith.constant dense<0.000000e+00> : vector<256x16xf32>
    %34 = tpu.matmul %32, %33, %cst_48 {dimension_numbers = #tpu.dot_dimension_numbers<[1], [0], [0], [1], [0, 0, 1, 1], [], []>} : vector<256x144xf32>, vector<144x16xf32>, vector<256x16xf32> -> vector<256x16xf32>
    %c0_49 = arith.constant 0 : index
    %c0_50 = arith.constant 0 : index
    %35 = vector.load %arg3[%c0_49, %c0_50] : memref<1x16xf32, #tpu.memory_space<vmem>>, vector<1x16xf32>
    %36 = vector.broadcast %35 : vector<1x16xf32> to vector<256x16xf32>
    %37 = arith.addf %34, %36 : vector<256x16xf32>
    %cst_51 = arith.constant 0.000000e+00 : f32
    %38 = vector.broadcast %cst_51 : f32 to vector<256x16xf32>
    %39 = arith.maximumf %37, %38 : vector<256x16xf32>
    %40 = vector.shape_cast %39 : vector<256x16xf32> to vector<16x16x16xf32>
    %c1_52 = arith.constant 1 : index
    %c1_53 = arith.constant 1 : index
    %c0_54 = arith.constant 0 : index
    %41 = vector.load %arg7[%c1_52, %c1_53, %c0_54] : memref<18x18x16xf32, #tpu.memory_space<vmem>>, vector<16x16x16xf32>
    tpu.vector_store %arg7[%c1_52, %c1_53, %c0_54], %40 {strides = array<i32>} : memref<18x18x16xf32, #tpu.memory_space<vmem>>, vector<16x16x16xf32>,
    %c0_55 = arith.constant 0 : index
    %c0_56 = arith.constant 0 : index
    %c0_57 = arith.constant 0 : index
    %42 = vector.load %arg7[%c0_55, %c0_56, %c0_57] : memref<18x18x16xf32, #tpu.memory_space<vmem>>, vector<16x16x16xf32>
    %43 = vector.shape_cast %42 : vector<16x16x16xf32> to vector<256x16xf32>
    %c0_58 = arith.constant 0 : index
    %c0_59 = arith.constant 0 : index
    %44 = vector.load %arg8[%c0_58, %c0_59] : memref<256x144xf32, #tpu.memory_space<vmem>>, vector<256x16xf32>
    tpu.vector_store %arg8[%c0_58, %c0_59], %43 {strides = array<i32>} : memref<256x144xf32, #tpu.memory_space<vmem>>, vector<256x16xf32>,
    %c0_60 = arith.constant 0 : index
    %c1_61 = arith.constant 1 : index
    %c0_62 = arith.constant 0 : index
    %45 = vector.load %arg7[%c0_60, %c1_61, %c0_62] : memref<18x18x16xf32, #tpu.memory_space<vmem>>, vector<16x16x16xf32>
    %46 = vector.shape_cast %45 : vector<16x16x16xf32> to vector<256x16xf32>
    %c0_63 = arith.constant 0 : index
    %c16_64 = arith.constant 16 : index
    %47 = vector.load %arg8[%c0_63, %c16_64] : memref<256x144xf32, #tpu.memory_space<vmem>>, vector<256x16xf32>
    tpu.vector_store %arg8[%c0_63, %c16_64], %46 {strides = array<i32>} : memref<256x144xf32, #tpu.memory_space<vmem>>, vector<256x16xf32>,
    %c0_65 = arith.constant 0 : index
    %c2_66 = arith.constant 2 : index
    %c0_67 = arith.constant 0 : index
    %48 = vector.load %arg7[%c0_65, %c2_66, %c0_67] : memref<18x18x16xf32, #tpu.memory_space<vmem>>, vector<16x16x16xf32>
    %49 = vector.shape_cast %48 : vector<16x16x16xf32> to vector<256x16xf32>
    %c0_68 = arith.constant 0 : index
    %c32_69 = arith.constant 32 : index
    %50 = vector.load %arg8[%c0_68, %c32_69] : memref<256x144xf32, #tpu.memory_space<vmem>>, vector<256x16xf32>
    tpu.vector_store %arg8[%c0_68, %c32_69], %49 {strides = array<i32>} : memref<256x144xf32, #tpu.memory_space<vmem>>, vector<256x16xf32>,
    %c1_70 = arith.constant 1 : index
    %c0_71 = arith.constant 0 : index
    %c0_72 = arith.constant 0 : index
    %51 = vector.load %arg7[%c1_70, %c0_71, %c0_72] : memref<18x18x16xf32, #tpu.memory_space<vmem>>, vector<16x16x16xf32>
    %52 = vector.shape_cast %51 : vector<16x16x16xf32> to vector<256x16xf32>
    %c0_73 = arith.constant 0 : index
    %c48_74 = arith.constant 48 : index
    %53 = vector.load %arg8[%c0_73, %c48_74] : memref<256x144xf32, #tpu.memory_space<vmem>>, vector<256x16xf32>
    tpu.vector_store %arg8[%c0_73, %c48_74], %52 {strides = array<i32>} : memref<256x144xf32, #tpu.memory_space<vmem>>, vector<256x16xf32>,
    %c1_75 = arith.constant 1 : index
    %c1_76 = arith.constant 1 : index
    %c0_77 = arith.constant 0 : index
    %54 = vector.load %arg7[%c1_75, %c1_76, %c0_77] : memref<18x18x16xf32, #tpu.memory_space<vmem>>, vector<16x16x16xf32>
    %55 = vector.shape_cast %54 : vector<16x16x16xf32> to vector<256x16xf32>
    %c0_78 = arith.constant 0 : index
    %c64_79 = arith.constant 64 : index
    %56 = vector.load %arg8[%c0_78, %c64_79] : memref<256x144xf32, #tpu.memory_space<vmem>>, vector<256x16xf32>
    tpu.vector_store %arg8[%c0_78, %c64_79], %55 {strides = array<i32>} : memref<256x144xf32, #tpu.memory_space<vmem>>, vector<256x16xf32>,
    %c1_80 = arith.constant 1 : index
    %c2_81 = arith.constant 2 : index
    %c0_82 = arith.constant 0 : index
    %57 = vector.load %arg7[%c1_80, %c2_81, %c0_82] : memref<18x18x16xf32, #tpu.memory_space<vmem>>, vector<16x16x16xf32>
    %58 = vector.shape_cast %57 : vector<16x16x16xf32> to vector<256x16xf32>
    %c0_83 = arith.constant 0 : index
    %c80_84 = arith.constant 80 : index
    %59 = vector.load %arg8[%c0_83, %c80_84] : memref<256x144xf32, #tpu.memory_space<vmem>>, vector<256x16xf32>
    tpu.vector_store %arg8[%c0_83, %c80_84], %58 {strides = array<i32>} : memref<256x144xf32, #tpu.memory_space<vmem>>, vector<256x16xf32>,
    %c2_85 = arith.constant 2 : index
    %c0_86 = arith.constant 0 : index
    %c0_87 = arith.constant 0 : index
    %60 = vector.load %arg7[%c2_85, %c0_86, %c0_87] : memref<18x18x16xf32, #tpu.memory_space<vmem>>, vector<16x16x16xf32>
    %61 = vector.shape_cast %60 : vector<16x16x16xf32> to vector<256x16xf32>
    %c0_88 = arith.constant 0 : index
    %c96_89 = arith.constant 96 : index
    %62 = vector.load %arg8[%c0_88, %c96_89] : memref<256x144xf32, #tpu.memory_space<vmem>>, vector<256x16xf32>
    tpu.vector_store %arg8[%c0_88, %c96_89], %61 {strides = array<i32>} : memref<256x144xf32, #tpu.memory_space<vmem>>, vector<256x16xf32>,
    %c2_90 = arith.constant 2 : index
    %c1_91 = arith.constant 1 : index
    %c0_92 = arith.constant 0 : index
    %63 = vector.load %arg7[%c2_90, %c1_91, %c0_92] : memref<18x18x16xf32, #tpu.memory_space<vmem>>, vector<16x16x16xf32>
    %64 = vector.shape_cast %63 : vector<16x16x16xf32> to vector<256x16xf32>
    %c0_93 = arith.constant 0 : index
    %c112_94 = arith.constant 112 : index
    %65 = vector.load %arg8[%c0_93, %c112_94] : memref<256x144xf32, #tpu.memory_space<vmem>>, vector<256x16xf32>
    tpu.vector_store %arg8[%c0_93, %c112_94], %64 {strides = array<i32>} : memref<256x144xf32, #tpu.memory_space<vmem>>, vector<256x16xf32>,
    %c2_95 = arith.constant 2 : index
    %c2_96 = arith.constant 2 : index
    %c0_97 = arith.constant 0 : index
    %66 = vector.load %arg7[%c2_95, %c2_96, %c0_97] : memref<18x18x16xf32, #tpu.memory_space<vmem>>, vector<16x16x16xf32>
    %67 = vector.shape_cast %66 : vector<16x16x16xf32> to vector<256x16xf32>
    %c0_98 = arith.constant 0 : index
    %c128_99 = arith.constant 128 : index
    %68 = vector.load %arg8[%c0_98, %c128_99] : memref<256x144xf32, #tpu.memory_space<vmem>>, vector<256x16xf32>
    tpu.vector_store %arg8[%c0_98, %c128_99], %67 {strides = array<i32>} : memref<256x144xf32, #tpu.memory_space<vmem>>, vector<256x16xf32>,
    %c0_100 = arith.constant 0 : index
    %c0_101 = arith.constant 0 : index
    %69 = vector.load %arg8[%c0_100, %c0_101] : memref<256x144xf32, #tpu.memory_space<vmem>>, vector<256x144xf32>
    %c0_102 = arith.constant 0 : index
    %c0_103 = arith.constant 0 : index
    %70 = vector.load %arg4[%c0_102, %c0_103] : memref<144x16xf32, #tpu.memory_space<vmem>>, vector<144x16xf32>
    %cst_104 = arith.constant dense<0.000000e+00> : vector<256x16xf32>
    %71 = tpu.matmul %69, %70, %cst_104 {dimension_numbers = #tpu.dot_dimension_numbers<[1], [0], [0], [1], [0, 0, 1, 1], [], []>} : vector<256x144xf32>, vector<144x16xf32>, vector<256x16xf32> -> vector<256x16xf32>
    %c0_105 = arith.constant 0 : index
    %c0_106 = arith.constant 0 : index
    %72 = vector.load %arg5[%c0_105, %c0_106] : memref<1x16xf32, #tpu.memory_space<vmem>>, vector<1x16xf32>
    %73 = vector.broadcast %72 : vector<1x16xf32> to vector<256x16xf32>
    %74 = arith.addf %71, %73 : vector<256x16xf32>
    %75 = vector.shape_cast %3 : vector<16x16x16xf32> to vector<256x16xf32>
    %76 = arith.addf %74, %75 : vector<256x16xf32>
    %cst_107 = arith.constant 0.000000e+00 : f32
    %77 = vector.broadcast %cst_107 : f32 to vector<256x16xf32>
    %78 = arith.maximumf %76, %77 : vector<256x16xf32>
    %79 = vector.shape_cast %78 : vector<256x16xf32> to vector<16x16x16xf32>
    %c0_108 = arith.constant 0 : index
    %c0_109 = arith.constant 0 : index
    %c0_110 = arith.constant 0 : index
    %c0_111 = arith.constant 0 : index
    %80 = vector.load %arg6[%c0_108, %c0_109, %c0_110, %c0_111] : memref<1x16x16x16xf32, #tpu.memory_space<vmem>>, vector<1x16x16x16xf32>
    %81 = vector.shape_cast %80 : vector<1x16x16x16xf32> to vector<16x16x16xf32>
    %82 = vector.shape_cast %79 : vector<16x16x16xf32> to vector<1x16x16x16xf32>
    tpu.vector_store %arg6[%c0_108, %c0_109, %c0_110, %c0_111], %82 {strides = array<i32>} : memref<1x16x16x16xf32, #tpu.memory_space<vmem>>, vector<1x16x16x16xf32>,
    return
  }
  func.func @transform_0(%arg0: i32) -> (i32, i32, i32, i32) {
    %c0_i32 = arith.constant 0 : i32
    %c0_i32_0 = arith.constant 0 : i32
    %c0_i32_1 = arith.constant 0 : i32
    %c0_i32_2 = arith.constant 0 : i32
    return %arg0, %c0_i32, %c0_i32_0, %c0_i32_1 : i32, i32, i32, i32
  }
  func.func @transform_1(%arg0: i32) -> (i32, i32) {
    %c0_i32 = arith.constant 0 : i32
    %c0_i32_0 = arith.constant 0 : i32
    %c0_i32_1 = arith.constant 0 : i32
    return %c0_i32, %c0_i32_0 : i32, i32
  }
  func.func @transform_2(%arg0: i32) -> (i32, i32) {
    %c0_i32 = arith.constant 0 : i32
    %c0_i32_0 = arith.constant 0 : i32
    %c0_i32_1 = arith.constant 0 : i32
    return %c0_i32, %c0_i32_0 : i32, i32
  }
  func.func @transform_3(%arg0: i32) -> (i32, i32) {
    %c0_i32 = arith.constant 0 : i32
    %c0_i32_0 = arith.constant 0 : i32
    %c0_i32_1 = arith.constant 0 : i32
    return %c0_i32, %c0_i32_0 : i32, i32
  }
  func.func @transform_4(%arg0: i32) -> (i32, i32) {
    %c0_i32 = arith.constant 0 : i32
    %c0_i32_0 = arith.constant 0 : i32
    %c0_i32_1 = arith.constant 0 : i32
    return %c0_i32, %c0_i32_0 : i32, i32
  }
  func.func @transform_5(%arg0: i32) -> (i32, i32, i32, i32) {
    %c0_i32 = arith.constant 0 : i32
    %c0_i32_0 = arith.constant 0 : i32
    %c0_i32_1 = arith.constant 0 : i32
    %c0_i32_2 = arith.constant 0 : i32
    return %arg0, %c0_i32, %c0_i32_0, %c0_i32_1 : i32, i32, i32, i32
  }
}

</mosaic_0001>

<llo_original>
// kernel: res_layer_2d.1
$region0: #{res_layer_2d.1}
  #allocation0 [shape = 'u32[]', space=smem, size = 0x4, offset = 0x4, fixed_abs, tag = 'smem constant byte address 0x4 - core index']
  #allocation1 [shape = 'u32[144,128]{1,0:T(1,128)}', space=vmem, size = 0x12000, scoped, tag = 'internal scratch']
  #allocation2 [shape = 'f32[18,18,16]{2,1,0:T(8,128)}', space=vmem, size = 0x36000, scoped, tag = 'scratch operand']
  #allocation3 [shape = 'f32[256,144]{1,0:T(8,128)}', space=vmem, size = 0x40000, scoped, tag = 'scratch operand']
  %s0 = inlined_call_operand.vmem [shape: f32[2,16,16,16], index: 0, kind: input, shape index: {}]
  %s1 = inlined_call_operand.vmem [shape: f32[144,16], index: 1, kind: input, shape index: {}]
  %s2 = inlined_call_operand.vmem [shape: f32[1,16], index: 2, kind: input, shape index: {}]
  %s3 = inlined_call_operand.vmem [shape: f32[144,16], index: 3, kind: input, shape index: {}]
  %s4 = inlined_call_operand.vmem [shape: f32[1,16], index: 4, kind: input, shape index: {}]
  %s5 = inlined_call_operand.vmem [shape: f32[2,16,16,16], index: 5, kind: output, shape index: {}]
  %s6 = sld [smem:[#allocation0]]
  $region53: #{res_layer_2d.1} parent=0
    _
  %s8 = ssub.s32 1, %s6
  %s9 = scalar_select 0, %s8, %s6
  loop: start=0, step=1, limit=4
  $region2: #{res_layer_2d.1} parent=0 // loop_pre_header
    _
  $region3: #{res_layer_2d.1} parent=0 // loop_header
    %s11 = sphi 0, %s15
    %p12 = scmp.ge.s32.totalorder %s11, 4
    %s21 = sphi 0, %s23
    %s24 = sphi 0, %s21
    %s25 = sphi 0, %s24
    %s41 = sphi 0, %s25
    %s45 = sphi 0, %s45
    %s47 = sphi 0, %s45
    %s48 = sphi 0, %s47
    %s62 = sphi 0, %s48
    %s66 = sphi 0, %s66
    %s68 = sphi 0, %s66
    %s69 = sphi 0, %s68
    %s83 = sphi 0, %s69
    %s87 = sphi 0, %s87
    %s89 = sphi 0, %s87
    %s90 = sphi 0, %s89
    %s104 = sphi 0, %s90
    %s108 = sphi 0, %s108
    %s110 = sphi 0, %s108
    %s111 = sphi 0, %s110
    %s125 = sphi 0, %s111
    %s131 = sphi 0, %s133
    %s134 = sphi 0, %s131
    %s135 = sphi 0, %s134
    %s151 = sphi 0, %s135
  $region4: #{res_layer_2d.1} parent=0 // loop_header_branch
    %14 = sbr.rel (%p12) target = $region8
  $region5: #{res_layer_2d.1} parent=0 // loop_body
    %s16 = ssub.s32 %s11, 1
    %s17 = ssub.s32 %s11, 2
    %s18 = sadd.s32 %s11, 1
    %s19 = ssub.s32 %s11, %s18
    %p20 = scmp.eq.s32.totalorder %s19, 0
    %s22 = sadd.s32 %s21, 1
    %s23 = scalar_select %p20, %s21, %s22
    %p26 = pneg %p20
    %p27 = scmp.eq.s32.totalorder %s11, 1
    %p28 = por %p26, %p27
    %p29 = scmp.ne.s32.totalorder %s21, %s24
    %p30 = scmp.eq.s32.totalorder %s11, 0
    %p31 = por %p29, %p30
    %p32 = scmp.ne.s32.totalorder %s21, %s24
    %p33 = scmp.eq.s32.totalorder %s16, 1
    %p34 = por %p32, %p33
    %p35 = scmp.ne.s32.totalorder %s24, %s25
    %p36 = scmp.eq.s32.totalorder %s16, 0
    %p37 = por %p35, %p36
    %p38 = scmp.ne.s32.totalorder %s24, %s25
    %p39 = scmp.eq.s32.totalorder %s17, 1
    %p40 = por %p38, %p39
    %p42 = scmp.ne.s32.totalorder %s25, %s41
    %p43 = scmp.eq.s32.totalorder %s17, 0
    %p44 = por %p42, %p43
    %s46 = sadd.s32 %s45, 1
    %p49 = scmp.eq.s32.totalorder %s11, 1
    %p50 = scmp.ne.s32.totalorder %s45, %s47
    %p51 = scmp.eq.s32.totalorder %s11, 0
    %p52 = por %p50, %p51
    %p53 = scmp.ne.s32.totalorder %s45, %s47
    %p54 = scmp.eq.s32.totalorder %s16, 1
    %p55 = por %p53, %p54
    %p56 = scmp.ne.s32.totalorder %s47, %s48
    %p57 = scmp.eq.s32.totalorder %s16, 0
    %p58 = por %p56, %p57
    %p59 = scmp.ne.s32.totalorder %s47, %s48
    %p60 = scmp.eq.s32.totalorder %s17, 1
    %p61 = por %p59, %p60
    %p63 = scmp.ne.s32.totalorder %s48, %s62
    %p64 = scmp.eq.s32.totalorder %s17, 0
    %p65 = por %p63, %p64
    %s67 = sadd.s32 %s66, 1
    %p70 = scmp.eq.s32.totalorder %s11, 1
    %p71 = scmp.ne.s32.totalorder %s66, %s68
    %p72 = scmp.eq.s32.totalorder %s11, 0
    %p73 = por %p71, %p72
    %p74 = scmp.ne.s32.totalorder %s66, %s68
    %p75 = scmp.eq.s32.totalorder %s16, 1
    %p76 = por %p74, %p75
    %p77 = scmp.ne.s32.totalorder %s68, %s69
    %p78 = scmp.eq.s32.totalorder %s16, 0
    %p79 = por %p77, %p78
    %p80 = scmp.ne.s32.totalorder %s68, %s69
    %p81 = scmp.eq.s32.totalorder %s17, 1
    %p82 = por %p80, %p81
    %p84 = scmp.ne.s32.totalorder %s69, %s83
    %p85 = scmp.eq.s32.totalorder %s17, 0
    %p86 = por %p84, %p85
    %s88 = sadd.s32 %s87, 1
    %p91 = scmp.eq.s32.totalorder %s11, 1
    %p92 = scmp.ne.s32.totalorder %s87, %s89
    %p93 = scmp.eq.s32.totalorder %s11, 0
    %p94 = por %p92, %p93
    %p95 = scmp.ne.s32.totalorder %s87, %s89
    %p96 = scmp.eq.s32.totalorder %s16, 1
    %p97 = por %p95, %p96
    %p98 = scmp.ne.s32.totalorder %s89, %s90
    %p99 = scmp.eq.s32.totalorder %s16, 0
    %p100 = por %p98, %p99
    %p101 = scmp.ne.s32.totalorder %s89, %s90
    %p102 = scmp.eq.s32.totalorder %s17, 1
    %p103 = por %p101, %p102
    %p105 = scmp.ne.s32.totalorder %s90, %s104
    %p106 = scmp.eq.s32.totalorder %s17, 0
    %p107 = por %p105, %p106
    %s109 = sadd.s32 %s108, 1
    %p112 = scmp.eq.s32.totalorder %s11, 1
    %p113 = scmp.ne.s32.totalorder %s108, %s110
    %p114 = scmp.eq.s32.totalorder %s11, 0
    %p115 = por %p113, %p114
    %p116 = scmp.ne.s32.totalorder %s108, %s110
    %p117 = scmp.eq.s32.totalorder %s16, 1
    %p118 = por %p116, %p117
    %p119 = scmp.ne.s32.totalorder %s110, %s111
    %p120 = scmp.eq.s32.totalorder %s16, 0
    %p121 = por %p119, %p120
    %p122 = scmp.ne.s32.totalorder %s110, %s111
    %p123 = scmp.eq.s32.totalorder %s17, 1
    %p124 = por %p122, %p123
    %p126 = scmp.ne.s32.totalorder %s111, %s125
    %p127 = scmp.eq.s32.totalorder %s17, 0
    %p128 = por %p126, %p127
    %s129 = ssub.s32 %s11, %s18
    %p130 = scmp.eq.s32.totalorder %s129, 0
    %s132 = sadd.s32 %s131, 1
    %s133 = scalar_select %p130, %s131, %s132
    %p136 = pneg %p130
    %p137 = scmp.eq.s32.totalorder %s11, 1
    %p138 = por %p136, %p137
    %p139 = scmp.ne.s32.totalorder %s131, %s134
    %p140 = scmp.eq.s32.totalorder %s11, 0
    %p141 = por %p139, %p140
    %p142 = scmp.ne.s32.totalorder %s131, %s134
    %p143 = scmp.eq.s32.totalorder %s16, 1
    %p144 = por %p142, %p143
    %p145 = scmp.ne.s32.totalorder %s134, %s135
    %p146 = scmp.eq.s32.totalorder %s16, 0
    %p147 = por %p145, %p146
    %p148 = scmp.ne.s32.totalorder %s134, %s135
    %p149 = scmp.eq.s32.totalorder %s17, 1
    %p150 = por %p148, %p149
    %p152 = scmp.ne.s32.totalorder %s135, %s151
    %p153 = scmp.eq.s32.totalorder %s17, 0
    %p154 = por %p152, %p153
    %p155 = scmp.le.s32.totalorder 1, %s11
    %p156 = scmp.lt.s32.totalorder %s11, 3
    %p157 = pnand %p155, %p156
    %p158 = pneg %p157
    // Predicated region
    $region9: #{res_layer_2d.1} parent=5 // pred_check
      _
    $region10: #{res_layer_2d.1} parent=5 // pred_check_branch
      %160 = sbr.rel (%p157) target = $region12
    $region11: #{res_layer_2d.1} parent=5 // pred_region
      %s161 = ssub.s32 %s11, 1
      // Predicated region
      $region13: #{res_layer_2d.1} parent=11 // pred_check
        %p162 = pneg %p58
      $region14: #{res_layer_2d.1} parent=11 // pred_check_branch
        %164 = sbr.rel (%p162) target = $region16
      $region15: #{res_layer_2d.1} parent=11 // pred_region
        _
      $region16: #{res_layer_2d.1} parent=11 // pred_fallthru
        _
      // Predicated region
      $region17: #{res_layer_2d.1} parent=11 // pred_check
        %p165 = pneg %p79
      $region18: #{res_layer_2d.1} parent=11 // pred_check_branch
        %167 = sbr.rel (%p165) target = $region20
      $region19: #{res_layer_2d.1} parent=11 // pred_region
        _
      $region20: #{res_layer_2d.1} parent=11 // pred_fallthru
        _
      // Predicated region
      $region21: #{res_layer_2d.1} parent=11 // pred_check
        %p168 = pneg %p100
      $region22: #{res_layer_2d.1} parent=11 // pred_check_branch
        %170 = sbr.rel (%p168) target = $region24
      $region23: #{res_layer_2d.1} parent=11 // pred_region
        _
      $region24: #{res_layer_2d.1} parent=11 // pred_fallthru
        _
      // Predicated region
      $region25: #{res_layer_2d.1} parent=11 // pred_check
        %p171 = pneg %p121
      $region26: #{res_layer_2d.1} parent=11 // pred_check_branch
        %173 = sbr.rel (%p171) target = $region28
      $region27: #{res_layer_2d.1} parent=11 // pred_region
        _
      $region28: #{res_layer_2d.1} parent=11 // pred_fallthru
        _
    $region12: #{res_layer_2d.1} parent=5 // pred_fallthru
      _
    %p174 = scmp.lt.s32.totalorder %s11, 2
    // Predicated region
    $region29: #{res_layer_2d.1} parent=5 // pred_check
      %p175 = pneg %p174
    $region30: #{res_layer_2d.1} parent=5 // pred_check_branch
      %177 = sbr.rel (%p175) target = $region32
    $region31: #{res_layer_2d.1} parent=5 // pred_region
      // Predicated region
      $region33: #{res_layer_2d.1} parent=31 // pred_check
        %p178 = pneg %p31
      $region34: #{res_layer_2d.1} parent=31 // pred_check_branch
        %180 = sbr.rel (%p178) target = $region36
      $region35: #{res_layer_2d.1} parent=31 // pred_region
        %p181 = scmp.lt.s32.totalorder %s11, 1
        %s182 = scalar_select %p181, %s11, 1
        %s183 = smul.addr %s182, 32
        %s184 = smul.addr %s183, 8
        %s185 = scalar_lea.vmem %s0, %s184
      $region36: #{res_layer_2d.1} parent=31 // pred_fallthru
        _
    $region32: #{res_layer_2d.1} parent=5 // pred_fallthru
      _
    %p186 = scmp.le.s32.totalorder 1, %s11
    %p187 = scmp.lt.s32.totalorder %s11, 3
    %p188 = pnand %p186, %p187
    %p189 = pneg %p188
    // Predicated region
    $region37: #{res_layer_2d.1} parent=5 // pred_check
      _
    $region38: #{res_layer_2d.1} parent=5 // pred_check_branch
      %191 = sbr.rel (%p188) target = $region40
    $region39: #{res_layer_2d.1} parent=5 // pred_region
      %s192 = ssub.s32 %s11, 1
      %p193 = scmp.lt.s32.totalorder %s16, 1
      %s194 = scalar_select %p193, %s16, 1
      %s195 = smul.addr %s194, 32
      %s196 = smul.addr %s195, 8
      %s197 = scalar_lea.vmem %s0, %s196
      %p198 = pneg %p37
      %p199 = pneg %p34
      %p200 = pneg %p58
      %p201 = pneg %p55
      %p202 = pneg %p79
      %p203 = pneg %p76
      %p204 = pneg %p100
      %p205 = pneg %p97
      %p206 = pneg %p121
      %p207 = pneg %p118
      %p208 = pneg %p147
      %p209 = pneg %p144
      %p210 = scmp.lt.s32.totalorder %s16, 1
      %s211 = scalar_select %p210, %s16, 1
      %s212 = smul.addr %s211, 32
      %s213 = smul.addr %s212, 8
      %s214 = scalar_lea.vmem %s5, %s213
      %p215 = scmp.lt.s32.totalorder %s16, 1
      %s216 = scalar_select %p215, %s16, 1
      %s217 = smul.addr %s216, 32
      %s218 = smul.addr %s217, 8
      %s219 = scalar_lea.vmem %s0, %s218
      %p220 = scmp.lt.s32.totalorder %s16, 1
      %s221 = scalar_select %p220, %s16, 1
      %s222 = smul.addr %s221, 32
      %s223 = smul.addr %s222, 8
      %s224 = scalar_lea.vmem %s5, %s223
      %vm225 = vcmask 130048
      %226 = vst.msk [vmem:[#allocation2] sm:$0xff] %vm225, 0.0
      %227 = vst.msk [vmem:[#allocation2 + $0x8] sm:$0xff] %vm225, 0.0
      %vm228 = vcmask 123904
      %229 = vst.msk [vmem:[#allocation2 + $0x10] sm:$0x3] %vm228, 0.0
      %230 = vst.msk [vmem:[#allocation2 + $0x18] sm:$0xff] %vm225, 0.0
      %231 = vst.msk [vmem:[#allocation2 + $0x20] sm:$0xff] %vm225, 0.0
      %232 = vst.msk [vmem:[#allocation2 + $0x28] sm:$0x3] %vm228, 0.0
      %233 = vst.msk [vmem:[#allocation2 + $0x30] sm:$0xff] %vm225, 0.0
      %234 = vst.msk [vmem:[#allocation2 + $0x38] sm:$0xff] %vm225, 0.0
      %235 = vst.msk [vmem:[#allocation2 + $0x40] sm:$0x3] %vm228, 0.0
      %236 = vst.msk [vmem:[#allocation2 + $0x48] sm:$0xff] %vm225, 0.0
      %237 = vst.msk [vmem:[#allocation2 + $0x50] sm:$0xff] %vm225, 0.0
      %238 = vst.msk [vmem:[#allocation2 + $0x58] sm:$0x3] %vm228, 0.0
      %239 = vst.msk [vmem:[#allocation2 + $0x60] sm:$0xff] %vm225, 0.0
      %240 = vst.msk [vmem:[#allocation2 + $0x68] sm:$0xff] %vm225, 0.0
      %241 = vst.msk [vmem:[#allocation2 + $0x70] sm:$0x3] %vm228, 0.0
      %242 = vst.msk [vmem:[#allocation2 + $0x78] sm:$0xff] %vm225, 0.0
      %243 = vst.msk [vmem:[#allocation2 + $0x80] sm:$0xff] %vm225, 0.0
      %244 = vst.msk [vmem:[#allocation2 + $0x88] sm:$0x3] %vm228, 0.0
      %245 = vst.msk [vmem:[#allocation2 + $0x90] sm:$0xff] %vm225, 0.0
      %246 = vst.msk [vmem:[#allocation2 + $0x98] sm:$0xff] %vm225, 0.0
      %247 = vst.msk [vmem:[#allocation2 + $0xa0] sm:$0x3] %vm228, 0.0
      %248 = vst.msk [vmem:[#allocation2 + $0xa8] sm:$0xff] %vm225, 0.0
      %249 = vst.msk [vmem:[#allocation2 + $0xb0] sm:$0xff] %vm225, 0.0
      %250 = vst.msk [vmem:[#allocation2 + $0xb8] sm:$0x3] %vm228, 0.0
      %251 = vst.msk [vmem:[#allocation2 + $0xc0] sm:$0xff] %vm225, 0.0
      %252 = vst.msk [vmem:[#allocation2 + $0xc8] sm:$0xff] %vm225, 0.0
      %253 = vst.msk [vmem:[#allocation2 + $0xd0] sm:$0x3] %vm228, 0.0
      %254 = vst.msk [vmem:[#allocation2 + $0xd8] sm:$0xff] %vm225, 0.0
      %255 = vst.msk [vmem:[#allocation2 + $0xe0] sm:$0xff] %vm225, 0.0
      %256 = vst.msk [vmem:[#allocation2 + $0xe8] sm:$0x3] %vm228, 0.0
      %257 = vst.msk [vmem:[#allocation2 + $0xf0] sm:$0xff] %vm225, 0.0
      %258 = vst.msk [vmem:[#allocation2 + $0xf8] sm:$0xff] %vm225, 0.0
      %259 = vst.msk [vmem:[#allocation2 + $0x100] sm:$0x3] %vm228, 0.0
      %260 = vst.msk [vmem:[#allocation2 + $0x108] sm:$0xff] %vm225, 0.0
      %261 = vst.msk [vmem:[#allocation2 + $0x110] sm:$0xff] %vm225, 0.0
      %262 = vst.msk [vmem:[#allocation2 + $0x118] sm:$0x3] %vm228, 0.0
      %263 = vst.msk [vmem:[#allocation2 + $0x120] sm:$0xff] %vm225, 0.0
      %264 = vst.msk [vmem:[#allocation2 + $0x128] sm:$0xff] %vm225, 0.0
      %265 = vst.msk [vmem:[#allocation2 + $0x130] sm:$0x3] %vm228, 0.0
      %266 = vst.msk [vmem:[#allocation2 + $0x138] sm:$0xff] %vm225, 0.0
      %267 = vst.msk [vmem:[#allocation2 + $0x140] sm:$0xff] %vm225, 0.0
      %268 = vst.msk [vmem:[#allocation2 + $0x148] sm:$0x3] %vm228, 0.0
      %269 = vst.msk [vmem:[#allocation2 + $0x150] sm:$0xff] %vm225, 0.0
      %270 = vst.msk [vmem:[#allocation2 + $0x158] sm:$0xff] %vm225, 0.0
      %271 = vst.msk [vmem:[#allocation2 + $0x160] sm:$0x3] %vm228, 0.0
      %272 = vst.msk [vmem:[#allocation2 + $0x168] sm:$0xff] %vm225, 0.0
      %273 = vst.msk [vmem:[#allocation2 + $0x170] sm:$0xff] %vm225, 0.0
      %274 = vst.msk [vmem:[#allocation2 + $0x178] sm:$0x3] %vm228, 0.0
      %275 = vst.msk [vmem:[#allocation2 + $0x180] sm:$0xff] %vm225, 0.0
      %276 = vst.msk [vmem:[#allocation2 + $0x188] sm:$0xff] %vm225, 0.0
      %277 = vst.msk [vmem:[#allocation2 + $0x190] sm:$0x3] %vm228, 0.0
      %278 = vst.msk [vmem:[#allocation2 + $0x198] sm:$0xff] %vm225, 0.0
      %279 = vst.msk [vmem:[#allocation2 + $0x1a0] sm:$0xff] %vm225, 0.0
      %280 = vst.msk [vmem:[#allocation2 + $0x1a8] sm:$0x3] %vm228, 0.0
      %v281 = vld [vmem:[%s219] sm:$0xff]
      %v282 = vld [vmem:[%s219 + $0x8] sm:$0xff]
      %v283 = vld [vmem:[%s219 + $0x10] sm:$0xff]
      %v284 = vld [vmem:[%s219 + $0x18] sm:$0xff]
      %v285 = vld [vmem:[%s219 + $0x20] sm:$0xff]
      %v286 = vld [vmem:[%s219 + $0x28] sm:$0xff]
      %v287 = vld [vmem:[%s219 + $0x30] sm:$0xff]
      %v288 = vld [vmem:[%s219 + $0x38] sm:$0xff]
      %v289 = vld [vmem:[%s219 + $0x40] sm:$0xff]
      %v290 = vld [vmem:[%s219 + $0x48] sm:$0xff]
      %v291 = vld [vmem:[%s219 + $0x50] sm:$0xff]
      %v292 = vld [vmem:[%s219 + $0x58] sm:$0xff]
      %v293 = vld [vmem:[%s219 + $0x60] sm:$0xff]
      %v294 = vld [vmem:[%s219 + $0x68] sm:$0xff]
      %v295 = vld [vmem:[%s219 + $0x70] sm:$0xff]
      %v296 = vld [vmem:[%s219 + $0x78] sm:$0xff]
      %v297 = vld [vmem:[%s219 + $0x80] sm:$0xff]
      %v298 = vld [vmem:[%s219 + $0x88] sm:$0xff]
      %v299 = vld [vmem:[%s219 + $0x90] sm:$0xff]
      %v300 = vld [vmem:[%s219 + $0x98] sm:$0xff]
      %v301 = vld [vmem:[%s219 + $0xa0] sm:$0xff]
      %v302 = vld [vmem:[%s219 + $0xa8] sm:$0xff]
      %v303 = vld [vmem:[%s219 + $0xb0] sm:$0xff]
      %v304 = vld [vmem:[%s219 + $0xb8] sm:$0xff]
      %v305 = vld [vmem:[%s219 + $0xc0] sm:$0xff]
      %v306 = vld [vmem:[%s219 + $0xc8] sm:$0xff]
      %v307 = vld [vmem:[%s219 + $0xd0] sm:$0xff]
      %v308 = vld [vmem:[%s219 + $0xd8] sm:$0xff]
      %v309 = vld [vmem:[%s219 + $0xe0] sm:$0xff]
      %v310 = vld [vmem:[%s219 + $0xe8] sm:$0xff]
      %v311 = vld [vmem:[%s219 + $0xf0] sm:$0xff]
      %v312 = vld [vmem:[%s219 + $0xf8] sm:$0xff]
      %s313 = scalar_lea.vmem [#allocation2], 24
      %314 = vst.msk [vmem:[%s313 + $0x1] sm:$0xff] %vm225, %v281
      %315 = vst.msk [vmem:[%s313 + $0x9] sm:$0xff] %vm225, %v282
      %316 = vst.msk [vmem:[%s313 + $0x19] sm:$0xff] %vm225, %v283
      %317 = vst.msk [vmem:[%s313 + $0x21] sm:$0xff] %vm225, %v284
      %318 = vst.msk [vmem:[%s313 + $0x31] sm:$0xff] %vm225, %v285
      %319 = vst.msk [vmem:[%s313 + $0x39] sm:$0xff] %vm225, %v286
      %320 = vst.msk [vmem:[%s313 + $0x49] sm:$0xff] %vm225, %v287
      %321 = vst.msk [vmem:[%s313 + $0x51] sm:$0xff] %vm225, %v288
      %322 = vst.msk [vmem:[%s313 + $0x61] sm:$0xff] %vm225, %v289
      %323 = vst.msk [vmem:[%s313 + $0x69] sm:$0xff] %vm225, %v290
      %324 = vst.msk [vmem:[%s313 + $0x79] sm:$0xff] %vm225, %v291
      %325 = vst.msk [vmem:[%s313 + $0x81] sm:$0xff] %vm225, %v292
      %326 = vst.msk [vmem:[%s313 + $0x91] sm:$0xff] %vm225, %v293
      %327 = vst.msk [vmem:[%s313 + $0x99] sm:$0xff] %vm225, %v294
      %328 = vst.msk [vmem:[%s313 + $0xa9] sm:$0xff] %vm225, %v295
      %329 = vst.msk [vmem:[%s313 + $0xb1] sm:$0xff] %vm225, %v296
      %330 = vst.msk [vmem:[%s313 + $0xc1] sm:$0xff] %vm225, %v297
      %331 = vst.msk [vmem:[%s313 + $0xc9] sm:$0xff] %vm225, %v298
      %332 = vst.msk [vmem:[%s313 + $0xd9] sm:$0xff] %vm225, %v299
      %333 = vst.msk [vmem:[%s313 + $0xe1] sm:$0xff] %vm225, %v300
      %334 = vst.msk [vmem:[%s313 + $0xf1] sm:$0xff] %vm225, %v301
      %335 = vst.msk [vmem:[%s313 + $0xf9] sm:$0xff] %vm225, %v302
      %336 = vst.msk [vmem:[%s313 + $0x109] sm:$0xff] %vm225, %v303
      %337 = vst.msk [vmem:[%s313 + $0x111] sm:$0xff] %vm225, %v304
      %338 = vst.msk [vmem:[%s313 + $0x121] sm:$0xff] %vm225, %v305
      %339 = vst.msk [vmem:[%s313 + $0x129] sm:$0xff] %vm225, %v306
      %340 = vst.msk [vmem:[%s313 + $0x139] sm:$0xff] %vm225, %v307
      %341 = vst.msk [vmem:[%s313 + $0x141] sm:$0xff] %vm225, %v308
      %342 = vst.msk [vmem:[%s313 + $0x151] sm:$0xff] %vm225, %v309
      %343 = vst.msk [vmem:[%s313 + $0x159] sm:$0xff] %vm225, %v310
      %344 = vst.msk [vmem:[%s313 + $0x169] sm:$0xff] %vm225, %v311
      %345 = vst.msk [vmem:[%s313 + $0x171] sm:$0xff] %vm225, %v312
      %v346 = vld [vmem:[#allocation2] sm:$0xff]
      %v347 = vld [vmem:[#allocation2 + $0x8] sm:$0xff]
      %v348 = vld [vmem:[#allocation2 + $0x18] sm:$0xff]
      %v349 = vld [vmem:[#allocation2 + $0x20] sm:$0xff]
      %v350 = vld [vmem:[#allocation2 + $0x30] sm:$0xff]
      %v351 = vld [vmem:[#allocation2 + $0x38] sm:$0xff]
      %v352 = vld [vmem:[#allocation2 + $0x48] sm:$0xff]
      %v353 = vld [vmem:[#allocation2 + $0x50] sm:$0xff]
      %v354 = vld [vmem:[#allocation2 + $0x60] sm:$0xff]
      %v355 = vld [vmem:[#allocation2 + $0x68] sm:$0xff]
      %v356 = vld [vmem:[#allocation2 + $0x78] sm:$0xff]
      %v357 = vld [vmem:[#allocation2 + $0x80] sm:$0xff]
      %v358 = vld [vmem:[#allocation2 + $0x90] sm:$0xff]
      %v359 = vld [vmem:[#allocation2 + $0x98] sm:$0xff]
      %v360 = vld [vmem:[#allocation2 + $0xa8] sm:$0xff]
      %v361 = vld [vmem:[#allocation2 + $0xb0] sm:$0xff]
      %v362 = vld [vmem:[#allocation2 + $0xc0] sm:$0xff]
      %v363 = vld [vmem:[#allocation2 + $0xc8] sm:$0xff]
      %v364 = vld [vmem:[#allocation2 + $0xd8] sm:$0xff]
      %v365 = vld [vmem:[#allocation2 + $0xe0] sm:$0xff]
      %v366 = vld [vmem:[#allocation2 + $0xf0] sm:$0xff]
      %v367 = vld [vmem:[#allocation2 + $0xf8] sm:$0xff]
      %v368 = vld [vmem:[#allocation2 + $0x108] sm:$0xff]
      %v369 = vld [vmem:[#allocation2 + $0x110] sm:$0xff]
      %v370 = vld [vmem:[#allocation2 + $0x120] sm:$0xff]
      %v371 = vld [vmem:[#allocation2 + $0x128] sm:$0xff]
      %v372 = vld [vmem:[#allocation2 + $0x138] sm:$0xff]
      %v373 = vld [vmem:[#allocation2 + $0x140] sm:$0xff]
      %v374 = vld [vmem:[#allocation2 + $0x150] sm:$0xff]
      %v375 = vld [vmem:[#allocation2 + $0x158] sm:$0xff]
      %v376 = vld [vmem:[#allocation2 + $0x168] sm:$0xff]
      %v377 = vld [vmem:[#allocation2 + $0x170] sm:$0xff]
      %378 = vst.msk [vmem:[#allocation3] sm:$0xff] %vm225, %v346
      %379 = vst.msk [vmem:[#allocation3 + $0x10] sm:$0xff] %vm225, %v347
      %380 = vst.msk [vmem:[#allocation3 + $0x20] sm:$0xff] %vm225, %v348
      %381 = vst.msk [vmem:[#allocation3 + $0x30] sm:$0xff] %vm225, %v349
      %382 = vst.msk [vmem:[#allocation3 + $0x40] sm:$0xff] %vm225, %v350
      %383 = vst.msk [vmem:[#allocation3 + $0x50] sm:$0xff] %vm225, %v351
      %384 = vst.msk [vmem:[#allocation3 + $0x60] sm:$0xff] %vm225, %v352
      %385 = vst.msk [vmem:[#allocation3 + $0x70] sm:$0xff] %vm225, %v353
      %386 = vst.msk [vmem:[#allocation3 + $0x80] sm:$0xff] %vm225, %v354
      %387 = vst.msk [vmem:[#allocation3 + $0x90] sm:$0xff] %vm225, %v355
      %388 = vst.msk [vmem:[#allocation3 + $0xa0] sm:$0xff] %vm225, %v356
      %389 = vst.msk [vmem:[#allocation3 + $0xb0] sm:$0xff] %vm225, %v357
      %390 = vst.msk [vmem:[#allocation3 + $0xc0] sm:$0xff] %vm225, %v358
      %391 = vst.msk [vmem:[#allocation3 + $0xd0] sm:$0xff] %vm225, %v359
      %392 = vst.msk [vmem:[#allocation3 + $0xe0] sm:$0xff] %vm225, %v360
      %393 = vst.msk [vmem:[#allocation3 + $0xf0] sm:$0xff] %vm225, %v361
      %394 = vst.msk [vmem:[#allocation3 + $0x100] sm:$0xff] %vm225, %v362
      %395 = vst.msk [vmem:[#allocation3 + $0x110] sm:$0xff] %vm225, %v363
      %396 = vst.msk [vmem:[#allocation3 + $0x120] sm:$0xff] %vm225, %v364
      %397 = vst.msk [vmem:[#allocation3 + $0x130] sm:$0xff] %vm225, %v365
      %398 = vst.msk [vmem:[#allocation3 + $0x140] sm:$0xff] %vm225, %v366
      %399 = vst.msk [vmem:[#allocation3 + $0x150] sm:$0xff] %vm225, %v367
      %400 = vst.msk [vmem:[#allocation3 + $0x160] sm:$0xff] %vm225, %v368
      %401 = vst.msk [vmem:[#allocation3 + $0x170] sm:$0xff] %vm225, %v369
      %402 = vst.msk [vmem:[#allocation3 + $0x180] sm:$0xff] %vm225, %v370
      %403 = vst.msk [vmem:[#allocation3 + $0x190] sm:$0xff] %vm225, %v371
      %404 = vst.msk [vmem:[#allocation3 + $0x1a0] sm:$0xff] %vm225, %v372
      %405 = vst.msk [vmem:[#allocation3 + $0x1b0] sm:$0xff] %vm225, %v373
      %406 = vst.msk [vmem:[#allocation3 + $0x1c0] sm:$0xff] %vm225, %v374
      %407 = vst.msk [vmem:[#allocation3 + $0x1d0] sm:$0xff] %vm225, %v375
      %408 = vst.msk [vmem:[#allocation3 + $0x1e0] sm:$0xff] %vm225, %v376
      %409 = vst.msk [vmem:[#allocation3 + $0x1f0] sm:$0xff] %vm225, %v377
      %v410 = vld [vmem:[#allocation2 + $0x1] sm:$0xff]
      %v411 = vld [vmem:[#allocation2 + $0x9] sm:$0xff]
      %v412 = vld [vmem:[#allocation2 + $0x19] sm:$0xff]
      %v413 = vld [vmem:[#allocation2 + $0x21] sm:$0xff]
      %v414 = vld [vmem:[#allocation2 + $0x31] sm:$0xff]
      %v415 = vld [vmem:[#allocation2 + $0x39] sm:$0xff]
      %v416 = vld [vmem:[#allocation2 + $0x49] sm:$0xff]
      %v417 = vld [vmem:[#allocation2 + $0x51] sm:$0xff]
      %v418 = vld [vmem:[#allocation2 + $0x61] sm:$0xff]
      %v419 = vld [vmem:[#allocation2 + $0x69] sm:$0xff]
      %v420 = vld [vmem:[#allocation2 + $0x79] sm:$0xff]
      %v421 = vld [vmem:[#allocation2 + $0x81] sm:$0xff]
      %v422 = vld [vmem:[#allocation2 + $0x91] sm:$0xff]
      %v423 = vld [vmem:[#allocation2 + $0x99] sm:$0xff]
      %v424 = vld [vmem:[#allocation2 + $0xa9] sm:$0xff]
      %v425 = vld [vmem:[#allocation2 + $0xb1] sm:$0xff]
      %v426 = vld [vmem:[#allocation2 + $0xc1] sm:$0xff]
      %v427 = vld [vmem:[#allocation2 + $0xc9] sm:$0xff]
      %v428 = vld [vmem:[#allocation2 + $0xd9] sm:$0xff]
      %v429 = vld [vmem:[#allocation2 + $0xe1] sm:$0xff]
      %v430 = vld [vmem:[#allocation2 + $0xf1] sm:$0xff]
      %v431 = vld [vmem:[#allocation2 + $0xf9] sm:$0xff]
      %v432 = vld [vmem:[#allocation2 + $0x109] sm:$0xff]
      %v433 = vld [vmem:[#allocation2 + $0x111] sm:$0xff]
      %v434 = vld [vmem:[#allocation2 + $0x121] sm:$0xff]
      %v435 = vld [vmem:[#allocation2 + $0x129] sm:$0xff]
      %v436 = vld [vmem:[#allocation2 + $0x139] sm:$0xff]
      %v437 = vld [vmem:[#allocation2 + $0x141] sm:$0xff]
      %v438 = vld [vmem:[#allocation2 + $0x151] sm:$0xff]
      %v439 = vld [vmem:[#allocation2 + $0x159] sm:$0xff]
      %v440 = vld [vmem:[#allocation2 + $0x169] sm:$0xff]
      %v441 = vld [vmem:[#allocation2 + $0x171] sm:$0xff]
      %474 = vrot.lane.b32.xlu0 %v410, 16
      %v475 = vpop.permute.xlu0 %474
      %476 = vrot.lane.b32.xlu0 %v411, 16
      %v477 = vpop.permute.xlu0 %476
      %478 = vrot.lane.b32.xlu0 %v412, 16
      %v479 = vpop.permute.xlu0 %478
      %480 = vrot.lane.b32.xlu0 %v413, 16
      %v481 = vpop.permute.xlu0 %480
      %482 = vrot.lane.b32.xlu0 %v414, 16
      %v483 = vpop.permute.xlu0 %482
      %484 = vrot.lane.b32.xlu0 %v415, 16
      %v485 = vpop.permute.xlu0 %484
      %486 = vrot.lane.b32.xlu0 %v416, 16
      %v487 = vpop.permute.xlu0 %486
      %488 = vrot.lane.b32.xlu0 %v417, 16
      %v489 = vpop.permute.xlu0 %488
      %490 = vrot.lane.b32.xlu0 %v418, 16
      %v491 = vpop.permute.xlu0 %490
      %492 = vrot.lane.b32.xlu0 %v419, 16
      %v493 = vpop.permute.xlu0 %492
      %494 = vrot.lane.b32.xlu0 %v420, 16
      %v495 = vpop.permute.xlu0 %494
      %496 = vrot.lane.b32.xlu0 %v421, 16
      %v497 = vpop.permute.xlu0 %496
      %498 = vrot.lane.b32.xlu0 %v422, 16
      %v499 = vpop.permute.xlu0 %498
      %500 = vrot.lane.b32.xlu0 %v423, 16
      %v501 = vpop.permute.xlu0 %500
      %502 = vrot.lane.b32.xlu0 %v424, 16
      %v503 = vpop.permute.xlu0 %502
      %504 = vrot.lane.b32.xlu0 %v425, 16
      %v505 = vpop.permute.xlu0 %504
      %506 = vrot.lane.b32.xlu0 %v426, 16
      %v507 = vpop.permute.xlu0 %506
      %508 = vrot.lane.b32.xlu0 %v427, 16
      %v509 = vpop.permute.xlu0 %508
      %510 = vrot.lane.b32.xlu0 %v428, 16
      %v511 = vpop.permute.xlu0 %510
      %512 = vrot.lane.b32.xlu0 %v429, 16
      %v513 = vpop.permute.xlu0 %512
      %514 = vrot.lane.b32.xlu0 %v430, 16
      %v515 = vpop.permute.xlu0 %514
      %516 = vrot.lane.b32.xlu0 %v431, 16
      %v517 = vpop.permute.xlu0 %516
      %518 = vrot.lane.b32.xlu0 %v432, 16
      %v519 = vpop.permute.xlu0 %518
      %520 = vrot.lane.b32.xlu0 %v433, 16
      %v521 = vpop.permute.xlu0 %520
      %522 = vrot.lane.b32.xlu0 %v434, 16
      %v523 = vpop.permute.xlu0 %522
      %524 = vrot.lane.b32.xlu0 %v435, 16
      %v525 = vpop.permute.xlu0 %524
      %526 = vrot.lane.b32.xlu0 %v436, 16
      %v527 = vpop.permute.xlu0 %526
      %528 = vrot.lane.b32.xlu0 %v437, 16
      %v529 = vpop.permute.xlu0 %528
      %530 = vrot.lane.b32.xlu0 %v438, 16
      %v531 = vpop.permute.xlu0 %530
      %532 = vrot.lane.b32.xlu0 %v439, 16
      %v533 = vpop.permute.xlu0 %532
      %534 = vrot.lane.b32.xlu0 %v440, 16
      %v535 = vpop.permute.xlu0 %534
      %536 = vrot.lane.b32.xlu0 %v441, 16
      %v537 = vpop.permute.xlu0 %536
      %vm570 = vcmask 261248
      %571 = vst.msk [vmem:[#allocation3] sm:$0xff] %vm570, %v475
      %572 = vst.msk [vmem:[#allocation3 + $0x10] sm:$0xff] %vm570, %v477
      %573 = vst.msk [vmem:[#allocation3 + $0x20] sm:$0xff] %vm570, %v479
      %574 = vst.msk [vmem:[#allocation3 + $0x30] sm:$0xff] %vm570, %v481
      %575 = vst.msk [vmem:[#allocation3 + $0x40] sm:$0xff] %vm570, %v483
      %576 = vst.msk [vmem:[#allocation3 + $0x50] sm:$0xff] %vm570, %v485
      %577 = vst.msk [vmem:[#allocation3 + $0x60] sm:$0xff] %vm570, %v487
      %578 = vst.msk [vmem:[#allocation3 + $0x70] sm:$0xff] %vm570, %v489
      %579 = vst.msk [vmem:[#allocation3 + $0x80] sm:$0xff] %vm570, %v491
      %580 = vst.msk [vmem:[#allocation3 + $0x90] sm:$0xff] %vm570, %v493
      %581 = vst.msk [vmem:[#allocation3 + $0xa0] sm:$0xff] %vm570, %v495
      %582 = vst.msk [vmem:[#allocation3 + $0xb0] sm:$0xff] %vm570, %v497
      %583 = vst.msk [vmem:[#allocation3 + $0xc0] sm:$0xff] %vm570, %v499
      %584 = vst.msk [vmem:[#allocation3 + $0xd0] sm:$0xff] %vm570, %v501
      %585 = vst.msk [vmem:[#allocation3 + $0xe0] sm:$0xff] %vm570, %v503
      %586 = vst.msk [vmem:[#allocation3 + $0xf0] sm:$0xff] %vm570, %v505
      %587 = vst.msk [vmem:[#allocation3 + $0x100] sm:$0xff] %vm570, %v507
      %588 = vst.msk [vmem:[#allocation3 + $0x110] sm:$0xff] %vm570, %v509
      %589 = vst.msk [vmem:[#allocation3 + $0x120] sm:$0xff] %vm570, %v511
      %590 = vst.msk [vmem:[#allocation3 + $0x130] sm:$0xff] %vm570, %v513
      %591 = vst.msk [vmem:[#allocation3 + $0x140] sm:$0xff] %vm570, %v515
      %592 = vst.msk [vmem:[#allocation3 + $0x150] sm:$0xff] %vm570, %v517
      %593 = vst.msk [vmem:[#allocation3 + $0x160] sm:$0xff] %vm570, %v519
      %594 = vst.msk [vmem:[#allocation3 + $0x170] sm:$0xff] %vm570, %v521
      %595 = vst.msk [vmem:[#allocation3 + $0x180] sm:$0xff] %vm570, %v523
      %596 = vst.msk [vmem:[#allocation3 + $0x190] sm:$0xff] %vm570, %v525
      %597 = vst.msk [vmem:[#allocation3 + $0x1a0] sm:$0xff] %vm570, %v527
      %598 = vst.msk [vmem:[#allocation3 + $0x1b0] sm:$0xff] %vm570, %v529
      %599 = vst.msk [vmem:[#allocation3 + $0x1c0] sm:$0xff] %vm570, %v531
      %600 = vst.msk [vmem:[#allocation3 + $0x1d0] sm:$0xff] %vm570, %v533
      %601 = vst.msk [vmem:[#allocation3 + $0x1e0] sm:$0xff] %vm570, %v535
      %602 = vst.msk [vmem:[#allocation3 + $0x1f0] sm:$0xff] %vm570, %v537
      %v603 = vld [vmem:[#allocation2 + $0x2] sm:$0xff]
      %v604 = vld [vmem:[#allocation2 + $0xa] sm:$0xff]
      %v605 = vld [vmem:[#allocation2 + $0x1a] sm:$0xff]
      %v606 = vld [vmem:[#allocation2 + $0x22] sm:$0xff]
      %v607 = vld [vmem:[#allocation2 + $0x32] sm:$0xff]
      %v608 = vld [vmem:[#allocation2 + $0x3a] sm:$0xff]
      %v609 = vld [vmem:[#allocation2 + $0x4a] sm:$0xff]
      %v610 = vld [vmem:[#allocation2 + $0x52] sm:$0xff]
      %v611 = vld [vmem:[#allocation2 + $0x62] sm:$0xff]
      %v612 = vld [vmem:[#allocation2 + $0x6a] sm:$0xff]
      %v613 = vld [vmem:[#allocation2 + $0x7a] sm:$0xff]
      %v614 = vld [vmem:[#allocation2 + $0x82] sm:$0xff]
      %v615 = vld [vmem:[#allocation2 + $0x92] sm:$0xff]
      %v616 = vld [vmem:[#allocation2 + $0x9a] sm:$0xff]
      %v617 = vld [vmem:[#allocation2 + $0xaa] sm:$0xff]
      %v618 = vld [vmem:[#allocation2 + $0xb2] sm:$0xff]
      %v619 = vld [vmem:[#allocation2 + $0xc2] sm:$0xff]
      %v620 = vld [vmem:[#allocation2 + $0xca] sm:$0xff]
      %v621 = vld [vmem:[#allocation2 + $0xda] sm:$0xff]
      %v622 = vld [vmem:[#allocation2 + $0xe2] sm:$0xff]
      %v623 = vld [vmem:[#allocation2 + $0xf2] sm:$0xff]
      %v624 = vld [vmem:[#allocation2 + $0xfa] sm:$0xff]
      %v625 = vld [vmem:[#allocation2 + $0x10a] sm:$0xff]
      %v626 = vld [vmem:[#allocation2 + $0x112] sm:$0xff]
      %v627 = vld [vmem:[#allocation2 + $0x122] sm:$0xff]
      %v628 = vld [vmem:[#allocation2 + $0x12a] sm:$0xff]
      %v629 = vld [vmem:[#allocation2 + $0x13a] sm:$0xff]
      %v630 = vld [vmem:[#allocation2 + $0x142] sm:$0xff]
      %v631 = vld [vmem:[#allocation2 + $0x152] sm:$0xff]
      %v632 = vld [vmem:[#allocation2 + $0x15a] sm:$0xff]
      %v633 = vld [vmem:[#allocation2 + $0x16a] sm:$0xff]
      %v634 = vld [vmem:[#allocation2 + $0x172] sm:$0xff]
      %667 = vrot.lane.b32.xlu0 %v603, 32
      %v668 = vpop.permute.xlu0 %667
      %669 = vrot.lane.b32.xlu0 %v604, 32
      %v670 = vpop.permute.xlu0 %669
      %671 = vrot.lane.b32.xlu0 %v605, 32
      %v672 = vpop.permute.xlu0 %671
      %673 = vrot.lane.b32.xlu0 %v606, 32
      %v674 = vpop.permute.xlu0 %673
      %675 = vrot.lane.b32.xlu0 %v607, 32
      %v676 = vpop.permute.xlu0 %675
      %677 = vrot.lane.b32.xlu0 %v608, 32
      %v678 = vpop.permute.xlu0 %677
      %679 = vrot.lane.b32.xlu0 %v609, 32
      %v680 = vpop.permute.xlu0 %679
      %681 = vrot.lane.b32.xlu0 %v610, 32
      %v682 = vpop.permute.xlu0 %681
      %683 = vrot.lane.b32.xlu0 %v611, 32
      %v684 = vpop.permute.xlu0 %683
      %685 = vrot.lane.b32.xlu0 %v612, 32
      %v686 = vpop.permute.xlu0 %685
      %687 = vrot.lane.b32.xlu0 %v613, 32
      %v688 = vpop.permute.xlu0 %687
      %689 = vrot.lane.b32.xlu0 %v614, 32
      %v690 = vpop.permute.xlu0 %689
      %691 = vrot.lane.b32.xlu0 %v615, 32
      %v692 = vpop.permute.xlu0 %691
      %693 = vrot.lane.b32.xlu0 %v616, 32
      %v694 = vpop.permute.xlu0 %693
      %695 = vrot.lane.b32.xlu0 %v617, 32
      %v696 = vpop.permute.xlu0 %695
      %697 = vrot.lane.b32.xlu0 %v618, 32
      %v698 = vpop.permute.xlu0 %697
      %699 = vrot.lane.b32.xlu0 %v619, 32
      %v700 = vpop.permute.xlu0 %699
      %701 = vrot.lane.b32.xlu0 %v620, 32
      %v702 = vpop.permute.xlu0 %701
      %703 = vrot.lane.b32.xlu0 %v621, 32
      %v704 = vpop.permute.xlu0 %703
      %705 = vrot.lane.b32.xlu0 %v622, 32
      %v706 = vpop.permute.xlu0 %705
      %707 = vrot.lane.b32.xlu0 %v623, 32
      %v708 = vpop.permute.xlu0 %707
      %709 = vrot.lane.b32.xlu0 %v624, 32
      %v710 = vpop.permute.xlu0 %709
      %711 = vrot.lane.b32.xlu0 %v625, 32
      %v712 = vpop.permute.xlu0 %711
      %713 = vrot.lane.b32.xlu0 %v626, 32
      %v714 = vpop.permute.xlu0 %713
      %715 = vrot.lane.b32.xlu0 %v627, 32
      %v716 = vpop.permute.xlu0 %715
      %717 = vrot.lane.b32.xlu0 %v628, 32
      %v718 = vpop.permute.xlu0 %717
      %719 = vrot.lane.b32.xlu0 %v629, 32
      %v720 = vpop.permute.xlu0 %719
      %721 = vrot.lane.b32.xlu0 %v630, 32
      %v722 = vpop.permute.xlu0 %721
      %723 = vrot.lane.b32.xlu0 %v631, 32
      %v724 = vpop.permute.xlu0 %723
      %725 = vrot.lane.b32.xlu0 %v632, 32
      %v726 = vpop.permute.xlu0 %725
      %727 = vrot.lane.b32.xlu0 %v633, 32
      %v728 = vpop.permute.xlu0 %727
      %729 = vrot.lane.b32.xlu0 %v634, 32
      %v730 = vpop.permute.xlu0 %729
      %vm763 = vcmask 392448
      %764 = vst.msk [vmem:[#allocation3] sm:$0xff] %vm763, %v668
      %765 = vst.msk [vmem:[#allocation3 + $0x10] sm:$0xff] %vm763, %v670
      %766 = vst.msk [vmem:[#allocation3 + $0x20] sm:$0xff] %vm763, %v672
      %767 = vst.msk [vmem:[#allocation3 + $0x30] sm:$0xff] %vm763, %v674
      %768 = vst.msk [vmem:[#allocation3 + $0x40] sm:$0xff] %vm763, %v676
      %769 = vst.msk [vmem:[#allocation3 + $0x50] sm:$0xff] %vm763, %v678
      %770 = vst.msk [vmem:[#allocation3 + $0x60] sm:$0xff] %vm763, %v680
      %771 = vst.msk [vmem:[#allocation3 + $0x70] sm:$0xff] %vm763, %v682
      %772 = vst.msk [vmem:[#allocation3 + $0x80] sm:$0xff] %vm763, %v684
      %773 = vst.msk [vmem:[#allocation3 + $0x90] sm:$0xff] %vm763, %v686
      %774 = vst.msk [vmem:[#allocation3 + $0xa0] sm:$0xff] %vm763, %v688
      %775 = vst.msk [vmem:[#allocation3 + $0xb0] sm:$0xff] %vm763, %v690
      %776 = vst.msk [vmem:[#allocation3 + $0xc0] sm:$0xff] %vm763, %v692
      %777 = vst.msk [vmem:[#allocation3 + $0xd0] sm:$0xff] %vm763, %v694
      %778 = vst.msk [vmem:[#allocation3 + $0xe0] sm:$0xff] %vm763, %v696
      %779 = vst.msk [vmem:[#allocation3 + $0xf0] sm:$0xff] %vm763, %v698
      %780 = vst.msk [vmem:[#allocation3 + $0x100] sm:$0xff] %vm763, %v700
      %781 = vst.msk [vmem:[#allocation3 + $0x110] sm:$0xff] %vm763, %v702
      %782 = vst.msk [vmem:[#allocation3 + $0x120] sm:$0xff] %vm763, %v704
      %783 = vst.msk [vmem:[#allocation3 + $0x130] sm:$0xff] %vm763, %v706
      %784 = vst.msk [vmem:[#allocation3 + $0x140] sm:$0xff] %vm763, %v708
      %785 = vst.msk [vmem:[#allocation3 + $0x150] sm:$0xff] %vm763, %v710
      %786 = vst.msk [vmem:[#allocation3 + $0x160] sm:$0xff] %vm763, %v712
      %787 = vst.msk [vmem:[#allocation3 + $0x170] sm:$0xff] %vm763, %v714
      %788 = vst.msk [vmem:[#allocation3 + $0x180] sm:$0xff] %vm763, %v716
      %789 = vst.msk [vmem:[#allocation3 + $0x190] sm:$0xff] %vm763, %v718
      %790 = vst.msk [vmem:[#allocation3 + $0x1a0] sm:$0xff] %vm763, %v720
      %791 = vst.msk [vmem:[#allocation3 + $0x1b0] sm:$0xff] %vm763, %v722
      %792 = vst.msk [vmem:[#allocation3 + $0x1c0] sm:$0xff] %vm763, %v724
      %793 = vst.msk [vmem:[#allocation3 + $0x1d0] sm:$0xff] %vm763, %v726
      %794 = vst.msk [vmem:[#allocation3 + $0x1e0] sm:$0xff] %vm763, %v728
      %795 = vst.msk [vmem:[#allocation3 + $0x1f0] sm:$0xff] %vm763, %v730
      %v796 = vld [vmem:[%s313] sm:$0xff]
      %v797 = vld [vmem:[%s313 + $0x8] sm:$0xff]
      %v798 = vld [vmem:[%s313 + $0x18] sm:$0xff]
      %v799 = vld [vmem:[%s313 + $0x20] sm:$0xff]
      %v800 = vld [vmem:[%s313 + $0x30] sm:$0xff]
      %v801 = vld [vmem:[%s313 + $0x38] sm:$0xff]
      %v802 = vld [vmem:[%s313 + $0x48] sm:$0xff]
      %v803 = vld [vmem:[%s313 + $0x50] sm:$0xff]
      %v804 = vld [vmem:[%s313 + $0x60] sm:$0xff]
      %v805 = vld [vmem:[%s313 + $0x68] sm:$0xff]
      %v806 = vld [vmem:[%s313 + $0x78] sm:$0xff]
      %v807 = vld [vmem:[%s313 + $0x80] sm:$0xff]
      %v808 = vld [vmem:[%s313 + $0x90] sm:$0xff]
      %v809 = vld [vmem:[%s313 + $0x98] sm:$0xff]
      %v810 = vld [vmem:[%s313 + $0xa8] sm:$0xff]
      %v811 = vld [vmem:[%s313 + $0xb0] sm:$0xff]
      %v812 = vld [vmem:[%s313 + $0xc0] sm:$0xff]
      %v813 = vld [vmem:[%s313 + $0xc8] sm:$0xff]
      %v814 = vld [vmem:[%s313 + $0xd8] sm:$0xff]
      %v815 = vld [vmem:[%s313 + $0xe0] sm:$0xff]
      %v816 = vld [vmem:[%s313 + $0xf0] sm:$0xff]
      %v817 = vld [vmem:[%s313 + $0xf8] sm:$0xff]
      %v818 = vld [vmem:[%s313 + $0x108] sm:$0xff]
      %v819 = vld [vmem:[%s313 + $0x110] sm:$0xff]
      %v820 = vld [vmem:[%s313 + $0x120] sm:$0xff]
      %v821 = vld [vmem:[%s313 + $0x128] sm:$0xff]
      %v822 = vld [vmem:[%s313 + $0x138] sm:$0xff]
      %v823 = vld [vmem:[%s313 + $0x140] sm:$0xff]
      %v824 = vld [vmem:[%s313 + $0x150] sm:$0xff]
      %v825 = vld [vmem:[%s313 + $0x158] sm:$0xff]
      %v826 = vld [vmem:[%s313 + $0x168] sm:$0xff]
      %v827 = vld [vmem:[%s313 + $0x170] sm:$0xff]
      %860 = vrot.lane.b32.xlu0 %v796, 48
      %v861 = vpop.permute.xlu0 %860
      %862 = vrot.lane.b32.xlu0 %v797, 48
      %v863 = vpop.permute.xlu0 %862
      %864 = vrot.lane.b32.xlu0 %v798, 48
      %v865 = vpop.permute.xlu0 %864
      %866 = vrot.lane.b32.xlu0 %v799, 48
      %v867 = vpop.permute.xlu0 %866
      %868 = vrot.lane.b32.xlu0 %v800, 48
      %v869 = vpop.permute.xlu0 %868
      %870 = vrot.lane.b32.xlu0 %v801, 48
      %v871 = vpop.permute.xlu0 %870
      %872 = vrot.lane.b32.xlu0 %v802, 48
      %v873 = vpop.permute.xlu0 %872
      %874 = vrot.lane.b32.xlu0 %v803, 48
      %v875 = vpop.permute.xlu0 %874
      %876 = vrot.lane.b32.xlu0 %v804, 48
      %v877 = vpop.permute.xlu0 %876
      %878 = vrot.lane.b32.xlu0 %v805, 48
      %v879 = vpop.permute.xlu0 %878
      %880 = vrot.lane.b32.xlu0 %v806, 48
      %v881 = vpop.permute.xlu0 %880
      %882 = vrot.lane.b32.xlu0 %v807, 48
      %v883 = vpop.permute.xlu0 %882
      %884 = vrot.lane.b32.xlu0 %v808, 48
      %v885 = vpop.permute.xlu0 %884
      %886 = vrot.lane.b32.xlu0 %v809, 48
      %v887 = vpop.permute.xlu0 %886
      %888 = vrot.lane.b32.xlu0 %v810, 48
      %v889 = vpop.permute.xlu0 %888
      %890 = vrot.lane.b32.xlu0 %v811, 48
      %v891 = vpop.permute.xlu0 %890
      %892 = vrot.lane.b32.xlu0 %v812, 48
      %v893 = vpop.permute.xlu0 %892
      %894 = vrot.lane.b32.xlu0 %v813, 48
      %v895 = vpop.permute.xlu0 %894
      %896 = vrot.lane.b32.xlu0 %v814, 48
      %v897 = vpop.permute.xlu0 %896
      %898 = vrot.lane.b32.xlu0 %v815, 48
      %v899 = vpop.permute.xlu0 %898
      %900 = vrot.lane.b32.xlu0 %v816, 48
      %v901 = vpop.permute.xlu0 %900
      %902 = vrot.lane.b32.xlu0 %v817, 48
      %v903 = vpop.permute.xlu0 %902
      %904 = vrot.lane.b32.xlu0 %v818, 48
      %v905 = vpop.permute.xlu0 %904
      %906 = vrot.lane.b32.xlu0 %v819, 48
      %v907 = vpop.permute.xlu0 %906
      %908 = vrot.lane.b32.xlu0 %v820, 48
      %v909 = vpop.permute.xlu0 %908
      %910 = vrot.lane.b32.xlu0 %v821, 48
      %v911 = vpop.permute.xlu0 %910
      %912 = vrot.lane.b32.xlu0 %v822, 48
      %v913 = vpop.permute.xlu0 %912
      %914 = vrot.lane.b32.xlu0 %v823, 48
      %v915 = vpop.permute.xlu0 %914
      %916 = vrot.lane.b32.xlu0 %v824, 48
      %v917 = vpop.permute.xlu0 %916
      %918 = vrot.lane.b32.xlu0 %v825, 48
      %v919 = vpop.permute.xlu0 %918
      %920 = vrot.lane.b32.xlu0 %v826, 48
      %v921 = vpop.permute.xlu0 %920
      %922 = vrot.lane.b32.xlu0 %v827, 48
      %v923 = vpop.permute.xlu0 %922
      %vm956 = vcmask 523648
      %957 = vst.msk [vmem:[#allocation3] sm:$0xff] %vm956, %v861
      %958 = vst.msk [vmem:[#allocation3 + $0x10] sm:$0xff] %vm956, %v863
      %959 = vst.msk [vmem:[#allocation3 + $0x20] sm:$0xff] %vm956, %v865
      %960 = vst.msk [vmem:[#allocation3 + $0x30] sm:$0xff] %vm956, %v867
      %961 = vst.msk [vmem:[#allocation3 + $0x40] sm:$0xff] %vm956, %v869
      %962 = vst.msk [vmem:[#allocation3 + $0x50] sm:$0xff] %vm956, %v871
      %963 = vst.msk [vmem:[#allocation3 + $0x60] sm:$0xff] %vm956, %v873
      %964 = vst.msk [vmem:[#allocation3 + $0x70] sm:$0xff] %vm956, %v875
      %965 = vst.msk [vmem:[#allocation3 + $0x80] sm:$0xff] %vm956, %v877
      %966 = vst.msk [vmem:[#allocation3 + $0x90] sm:$0xff] %vm956, %v879
      %967 = vst.msk [vmem:[#allocation3 + $0xa0] sm:$0xff] %vm956, %v881
      %968 = vst.msk [vmem:[#allocation3 + $0xb0] sm:$0xff] %vm956, %v883
      %969 = vst.msk [vmem:[#allocation3 + $0xc0] sm:$0xff] %vm956, %v885
      %970 = vst.msk [vmem:[#allocation3 + $0xd0] sm:$0xff] %vm956, %v887
      %971 = vst.msk [vmem:[#allocation3 + $0xe0] sm:$0xff] %vm956, %v889
      %972 = vst.msk [vmem:[#allocation3 + $0xf0] sm:$0xff] %vm956, %v891
      %973 = vst.msk [vmem:[#allocation3 + $0x100] sm:$0xff] %vm956, %v893
      %974 = vst.msk [vmem:[#allocation3 + $0x110] sm:$0xff] %vm956, %v895
      %975 = vst.msk [vmem:[#allocation3 + $0x120] sm:$0xff] %vm956, %v897
      %976 = vst.msk [vmem:[#allocation3 + $0x130] sm:$0xff] %vm956, %v899
      %977 = vst.msk [vmem:[#allocation3 + $0x140] sm:$0xff] %vm956, %v901
      %978 = vst.msk [vmem:[#allocation3 + $0x150] sm:$0xff] %vm956, %v903
      %979 = vst.msk [vmem:[#allocation3 + $0x160] sm:$0xff] %vm956, %v905
      %980 = vst.msk [vmem:[#allocation3 + $0x170] sm:$0xff] %vm956, %v907
      %981 = vst.msk [vmem:[#allocation3 + $0x180] sm:$0xff] %vm956, %v909
      %982 = vst.msk [vmem:[#allocation3 + $0x190] sm:$0xff] %vm956, %v911
      %983 = vst.msk [vmem:[#allocation3 + $0x1a0] sm:$0xff] %vm956, %v913
      %984 = vst.msk [vmem:[#allocation3 + $0x1b0] sm:$0xff] %vm956, %v915
      %985 = vst.msk [vmem:[#allocation3 + $0x1c0] sm:$0xff] %vm956, %v917
      %986 = vst.msk [vmem:[#allocation3 + $0x1d0] sm:$0xff] %vm956, %v919
      %987 = vst.msk [vmem:[#allocation3 + $0x1e0] sm:$0xff] %vm956, %v921
      %988 = vst.msk [vmem:[#allocation3 + $0x1f0] sm:$0xff] %vm956, %v923
      %v989 = vld [vmem:[%s313 + $0x1] sm:$0xff]
      %v990 = vld [vmem:[%s313 + $0x9] sm:$0xff]
      %v991 = vld [vmem:[%s313 + $0x19] sm:$0xff]
      %v992 = vld [vmem:[%s313 + $0x21] sm:$0xff]
      %v993 = vld [vmem:[%s313 + $0x31] sm:$0xff]
      %v994 = vld [vmem:[%s313 + $0x39] sm:$0xff]
      %v995 = vld [vmem:[%s313 + $0x49] sm:$0xff]
      %v996 = vld [vmem:[%s313 + $0x51] sm:$0xff]
      %v997 = vld [vmem:[%s313 + $0x61] sm:$0xff]
      %v998 = vld [vmem:[%s313 + $0x69] sm:$0xff]
      %v999 = vld [vmem:[%s313 + $0x79] sm:$0xff]
      %v1000 = vld [vmem:[%s313 + $0x81] sm:$0xff]
      %v1001 = vld [vmem:[%s313 + $0x91] sm:$0xff]
      %v1002 = vld [vmem:[%s313 + $0x99] sm:$0xff]
      %v1003 = vld [vmem:[%s313 + $0xa9] sm:$0xff]
      %v1004 = vld [vmem:[%s313 + $0xb1] sm:$0xff]
      %v1005 = vld [vmem:[%s313 + $0xc1] sm:$0xff]
      %v1006 = vld [vmem:[%s313 + $0xc9] sm:$0xff]
      %v1007 = vld [vmem:[%s313 + $0xd9] sm:$0xff]
      %v1008 = vld [vmem:[%s313 + $0xe1] sm:$0xff]
      %v1009 = vld [vmem:[%s313 + $0xf1] sm:$0xff]
      %v1010 = vld [vmem:[%s313 + $0xf9] sm:$0xff]
      %v1011 = vld [vmem:[%s313 + $0x109] sm:$0xff]
      %v1012 = vld [vmem:[%s313 + $0x111] sm:$0xff]
      %v1013 = vld [vmem:[%s313 + $0x121] sm:$0xff]
      %v1014 = vld [vmem:[%s313 + $0x129] sm:$0xff]
      %v1015 = vld [vmem:[%s313 + $0x139] sm:$0xff]
      %v1016 = vld [vmem:[%s313 + $0x141] sm:$0xff]
      %v1017 = vld [vmem:[%s313 + $0x151] sm:$0xff]
      %v1018 = vld [vmem:[%s313 + $0x159] sm:$0xff]
      %v1019 = vld [vmem:[%s313 + $0x169] sm:$0xff]
      %v1020 = vld [vmem:[%s313 + $0x171] sm:$0xff]
      %1053 = vrot.lane.b32.xlu0 %v989, 64
      %v1054 = vpop.permute.xlu0 %1053
      %1055 = vrot.lane.b32.xlu0 %v990, 64
      %v1056 = vpop.permute.xlu0 %1055
      %1057 = vrot.lane.b32.xlu0 %v991, 64
      %v1058 = vpop.permute.xlu0 %1057
      %1059 = vrot.lane.b32.xlu0 %v992, 64
      %v1060 = vpop.permute.xlu0 %1059
      %1061 = vrot.lane.b32.xlu0 %v993, 64
      %v1062 = vpop.permute.xlu0 %1061
      %1063 = vrot.lane.b32.xlu0 %v994, 64
      %v1064 = vpop.permute.xlu0 %1063
      %1065 = vrot.lane.b32.xlu0 %v995, 64
      %v1066 = vpop.permute.xlu0 %1065
      %1067 = vrot.lane.b32.xlu0 %v996, 64
      %v1068 = vpop.permute.xlu0 %1067
      %1069 = vrot.lane.b32.xlu0 %v997, 64
      %v1070 = vpop.permute.xlu0 %1069
      %1071 = vrot.lane.b32.xlu0 %v998, 64
      %v1072 = vpop.permute.xlu0 %1071
      %1073 = vrot.lane.b32.xlu0 %v999, 64
      %v1074 = vpop.permute.xlu0 %1073
      %1075 = vrot.lane.b32.xlu0 %v1000, 64
      %v1076 = vpop.permute.xlu0 %1075
      %1077 = vrot.lane.b32.xlu0 %v1001, 64
      %v1078 = vpop.permute.xlu0 %1077
      %1079 = vrot.lane.b32.xlu0 %v1002, 64
      %v1080 = vpop.permute.xlu0 %1079
      %1081 = vrot.lane.b32.xlu0 %v1003, 64
      %v1082 = vpop.permute.xlu0 %1081
      %1083 = vrot.lane.b32.xlu0 %v1004, 64
      %v1084 = vpop.permute.xlu0 %1083
      %1085 = vrot.lane.b32.xlu0 %v1005, 64
      %v1086 = vpop.permute.xlu0 %1085
      %1087 = vrot.lane.b32.xlu0 %v1006, 64
      %v1088 = vpop.permute.xlu0 %1087
      %1089 = vrot.lane.b32.xlu0 %v1007, 64
      %v1090 = vpop.permute.xlu0 %1089
      %1091 = vrot.lane.b32.xlu0 %v1008, 64
      %v1092 = vpop.permute.xlu0 %1091
      %1093 = vrot.lane.b32.xlu0 %v1009, 64
      %v1094 = vpop.permute.xlu0 %1093
      %1095 = vrot.lane.b32.xlu0 %v1010, 64
      %v1096 = vpop.permute.xlu0 %1095
      %1097 = vrot.lane.b32.xlu0 %v1011, 64
      %v1098 = vpop.permute.xlu0 %1097
      %1099 = vrot.lane.b32.xlu0 %v1012, 64
      %v1100 = vpop.permute.xlu0 %1099
      %1101 = vrot.lane.b32.xlu0 %v1013, 64
      %v1102 = vpop.permute.xlu0 %1101
      %1103 = vrot.lane.b32.xlu0 %v1014, 64
      %v1104 = vpop.permute.xlu0 %1103
      %1105 = vrot.lane.b32.xlu0 %v1015, 64
      %v1106 = vpop.permute.xlu0 %1105
      %1107 = vrot.lane.b32.xlu0 %v1016, 64
      %v1108 = vpop.permute.xlu0 %1107
      %1109 = vrot.lane.b32.xlu0 %v1017, 64
      %v1110 = vpop.permute.xlu0 %1109
      %1111 = vrot.lane.b32.xlu0 %v1018, 64
      %v1112 = vpop.permute.xlu0 %1111
      %1113 = vrot.lane.b32.xlu0 %v1019, 64
      %v1114 = vpop.permute.xlu0 %1113
      %1115 = vrot.lane.b32.xlu0 %v1020, 64
      %v1116 = vpop.permute.xlu0 %1115
      %vm1149 = vcmask 654848
      %1150 = vst.msk [vmem:[#allocation3] sm:$0xff] %vm1149, %v1054
      %1151 = vst.msk [vmem:[#allocation3 + $0x10] sm:$0xff] %vm1149, %v1056
      %1152 = vst.msk [vmem:[#allocation3 + $0x20] sm:$0xff] %vm1149, %v1058
      %1153 = vst.msk [vmem:[#allocation3 + $0x30] sm:$0xff] %vm1149, %v1060
      %1154 = vst.msk [vmem:[#allocation3 + $0x40] sm:$0xff] %vm1149, %v1062
      %1155 = vst.msk [vmem:[#allocation3 + $0x50] sm:$0xff] %vm1149, %v1064
      %1156 = vst.msk [vmem:[#allocation3 + $0x60] sm:$0xff] %vm1149, %v1066
      %1157 = vst.msk [vmem:[#allocation3 + $0x70] sm:$0xff] %vm1149, %v1068
      %1158 = vst.msk [vmem:[#allocation3 + $0x80] sm:$0xff] %vm1149, %v1070
      %1159 = vst.msk [vmem:[#allocation3 + $0x90] sm:$0xff] %vm1149, %v1072
      %1160 = vst.msk [vmem:[#allocation3 + $0xa0] sm:$0xff] %vm1149, %v1074
      %1161 = vst.msk [vmem:[#allocation3 + $0xb0] sm:$0xff] %vm1149, %v1076
      %1162 = vst.msk [vmem:[#allocation3 + $0xc0] sm:$0xff] %vm1149, %v1078
      %1163 = vst.msk [vmem:[#allocation3 + $0xd0] sm:$0xff] %vm1149, %v1080
      %1164 = vst.msk [vmem:[#allocation3 + $0xe0] sm:$0xff] %vm1149, %v1082
      %1165 = vst.msk [vmem:[#allocation3 + $0xf0] sm:$0xff] %vm1149, %v1084
      %1166 = vst.msk [vmem:[#allocation3 + $0x100] sm:$0xff] %vm1149, %v1086
      %1167 = vst.msk [vmem:[#allocation3 + $0x110] sm:$0xff] %vm1149, %v1088
      %1168 = vst.msk [vmem:[#allocation3 + $0x120] sm:$0xff] %vm1149, %v1090
      %1169 = vst.msk [vmem:[#allocation3 + $0x130] sm:$0xff] %vm1149, %v1092
      %1170 = vst.msk [vmem:[#allocation3 + $0x140] sm:$0xff] %vm1149, %v1094
      %1171 = vst.msk [vmem:[#allocation3 + $0x150] sm:$0xff] %vm1149, %v1096
      %1172 = vst.msk [vmem:[#allocation3 + $0x160] sm:$0xff] %vm1149, %v1098
      %1173 = vst.msk [vmem:[#allocation3 + $0x170] sm:$0xff] %vm1149, %v1100
      %1174 = vst.msk [vmem:[#allocation3 + $0x180] sm:$0xff] %vm1149, %v1102
      %1175 = vst.msk [vmem:[#allocation3 + $0x190] sm:$0xff] %vm1149, %v1104
      %1176 = vst.msk [vmem:[#allocation3 + $0x1a0] sm:$0xff] %vm1149, %v1106
      %1177 = vst.msk [vmem:[#allocation3 + $0x1b0] sm:$0xff] %vm1149, %v1108
      %1178 = vst.msk [vmem:[#allocation3 + $0x1c0] sm:$0xff] %vm1149, %v1110
      %1179 = vst.msk [vmem:[#allocation3 + $0x1d0] sm:$0xff] %vm1149, %v1112
      %1180 = vst.msk [vmem:[#allocation3 + $0x1e0] sm:$0xff] %vm1149, %v1114
      %1181 = vst.msk [vmem:[#allocation3 + $0x1f0] sm:$0xff] %vm1149, %v1116
      %v1182 = vld [vmem:[%s313 + $0x2] sm:$0xff]
      %v1183 = vld [vmem:[%s313 + $0xa] sm:$0xff]
      %v1184 = vld [vmem:[%s313 + $0x1a] sm:$0xff]
      %v1185 = vld [vmem:[%s313 + $0x22] sm:$0xff]
      %v1186 = vld [vmem:[%s313 + $0x32] sm:$0xff]
      %v1187 = vld [vmem:[%s313 + $0x3a] sm:$0xff]
      %v1188 = vld [vmem:[%s313 + $0x4a] sm:$0xff]
      %v1189 = vld [vmem:[%s313 + $0x52] sm:$0xff]
      %v1190 = vld [vmem:[%s313 + $0x62] sm:$0xff]
      %v1191 = vld [vmem:[%s313 + $0x6a] sm:$0xff]
      %v1192 = vld [vmem:[%s313 + $0x7a] sm:$0xff]
      %v1193 = vld [vmem:[%s313 + $0x82] sm:$0xff]
      %v1194 = vld [vmem:[%s313 + $0x92] sm:$0xff]
      %v1195 = vld [vmem:[%s313 + $0x9a] sm:$0xff]
      %v1196 = vld [vmem:[%s313 + $0xaa] sm:$0xff]
      %v1197 = vld [vmem:[%s313 + $0xb2] sm:$0xff]
      %v1198 = vld [vmem:[%s313 + $0xc2] sm:$0xff]
      %v1199 = vld [vmem:[%s313 + $0xca] sm:$0xff]
      %v1200 = vld [vmem:[%s313 + $0xda] sm:$0xff]
      %v1201 = vld [vmem:[%s313 + $0xe2] sm:$0xff]
      %v1202 = vld [vmem:[%s313 + $0xf2] sm:$0xff]
      %v1203 = vld [vmem:[%s313 + $0xfa] sm:$0xff]
      %v1204 = vld [vmem:[%s313 + $0x10a] sm:$0xff]
      %v1205 = vld [vmem:[%s313 + $0x112] sm:$0xff]
      %v1206 = vld [vmem:[%s313 + $0x122] sm:$0xff]
      %v1207 = vld [vmem:[%s313 + $0x12a] sm:$0xff]
      %v1208 = vld [vmem:[%s313 + $0x13a] sm:$0xff]
      %v1209 = vld [vmem:[%s313 + $0x142] sm:$0xff]
      %v1210 = vld [vmem:[%s313 + $0x152] sm:$0xff]
      %v1211 = vld [vmem:[%s313 + $0x15a] sm:$0xff]
      %v1212 = vld [vmem:[%s313 + $0x16a] sm:$0xff]
      %v1213 = vld [vmem:[%s313 + $0x172] sm:$0xff]
      %1246 = vrot.lane.b32.xlu0 %v1182, 80
      %v1247 = vpop.permute.xlu0 %1246
      %1248 = vrot.lane.b32.xlu0 %v1183, 80
      %v1249 = vpop.permute.xlu0 %1248
      %1250 = vrot.lane.b32.xlu0 %v1184, 80
      %v1251 = vpop.permute.xlu0 %1250
      %1252 = vrot.lane.b32.xlu0 %v1185, 80
      %v1253 = vpop.permute.xlu0 %1252
      %1254 = vrot.lane.b32.xlu0 %v1186, 80
      %v1255 = vpop.permute.xlu0 %1254
      %1256 = vrot.lane.b32.xlu0 %v1187, 80
      %v1257 = vpop.permute.xlu0 %1256
      %1258 = vrot.lane.b32.xlu0 %v1188, 80
      %v1259 = vpop.permute.xlu0 %1258
      %1260 = vrot.lane.b32.xlu0 %v1189, 80
      %v1261 = vpop.permute.xlu0 %1260
      %1262 = vrot.lane.b32.xlu0 %v1190, 80
      %v1263 = vpop.permute.xlu0 %1262
      %1264 = vrot.lane.b32.xlu0 %v1191, 80
      %v1265 = vpop.permute.xlu0 %1264
      %1266 = vrot.lane.b32.xlu0 %v1192, 80
      %v1267 = vpop.permute.xlu0 %1266
      %1268 = vrot.lane.b32.xlu0 %v1193, 80
      %v1269 = vpop.permute.xlu0 %1268
      %1270 = vrot.lane.b32.xlu0 %v1194, 80
      %v1271 = vpop.permute.xlu0 %1270
      %1272 = vrot.lane.b32.xlu0 %v1195, 80
      %v1273 = vpop.permute.xlu0 %1272
      %1274 = vrot.lane.b32.xlu0 %v1196, 80
      %v1275 = vpop.permute.xlu0 %1274
      %1276 = vrot.lane.b32.xlu0 %v1197, 80
      %v1277 = vpop.permute.xlu0 %1276
      %1278 = vrot.lane.b32.xlu0 %v1198, 80
      %v1279 = vpop.permute.xlu0 %1278
      %1280 = vrot.lane.b32.xlu0 %v1199, 80
      %v1281 = vpop.permute.xlu0 %1280
      %1282 = vrot.lane.b32.xlu0 %v1200, 80
      %v1283 = vpop.permute.xlu0 %1282
      %1284 = vrot.lane.b32.xlu0 %v1201, 80
      %v1285 = vpop.permute.xlu0 %1284
      %1286 = vrot.lane.b32.xlu0 %v1202, 80
      %v1287 = vpop.permute.xlu0 %1286
      %1288 = vrot.lane.b32.xlu0 %v1203, 80
      %v1289 = vpop.permute.xlu0 %1288
      %1290 = vrot.lane.b32.xlu0 %v1204, 80
      %v1291 = vpop.permute.xlu0 %1290
      %1292 = vrot.lane.b32.xlu0 %v1205, 80
      %v1293 = vpop.permute.xlu0 %1292
      %1294 = vrot.lane.b32.xlu0 %v1206, 80
      %v1295 = vpop.permute.xlu0 %1294
      %1296 = vrot.lane.b32.xlu0 %v1207, 80
      %v1297 = vpop.permute.xlu0 %1296
      %1298 = vrot.lane.b32.xlu0 %v1208, 80
      %v1299 = vpop.permute.xlu0 %1298
      %1300 = vrot.lane.b32.xlu0 %v1209, 80
      %v1301 = vpop.permute.xlu0 %1300
      %1302 = vrot.lane.b32.xlu0 %v1210, 80
      %v1303 = vpop.permute.xlu0 %1302
      %1304 = vrot.lane.b32.xlu0 %v1211, 80
      %v1305 = vpop.permute.xlu0 %1304
      %1306 = vrot.lane.b32.xlu0 %v1212, 80
      %v1307 = vpop.permute.xlu0 %1306
      %1308 = vrot.lane.b32.xlu0 %v1213, 80
      %v1309 = vpop.permute.xlu0 %1308
      %vm1342 = vcmask 786048
      %1343 = vst.msk [vmem:[#allocation3] sm:$0xff] %vm1342, %v1247
      %1344 = vst.msk [vmem:[#allocation3 + $0x10] sm:$0xff] %vm1342, %v1249
      %1345 = vst.msk [vmem:[#allocation3 + $0x20] sm:$0xff] %vm1342, %v1251
      %1346 = vst.msk [vmem:[#allocation3 + $0x30] sm:$0xff] %vm1342, %v1253
      %1347 = vst.msk [vmem:[#allocation3 + $0x40] sm:$0xff] %vm1342, %v1255
      %1348 = vst.msk [vmem:[#allocation3 + $0x50] sm:$0xff] %vm1342, %v1257
      %1349 = vst.msk [vmem:[#allocation3 + $0x60] sm:$0xff] %vm1342, %v1259
      %1350 = vst.msk [vmem:[#allocation3 + $0x70] sm:$0xff] %vm1342, %v1261
      %1351 = vst.msk [vmem:[#allocation3 + $0x80] sm:$0xff] %vm1342, %v1263
      %1352 = vst.msk [vmem:[#allocation3 + $0x90] sm:$0xff] %vm1342, %v1265
      %1353 = vst.msk [vmem:[#allocation3 + $0xa0] sm:$0xff] %vm1342, %v1267
      %1354 = vst.msk [vmem:[#allocation3 + $0xb0] sm:$0xff] %vm1342, %v1269
      %1355 = vst.msk [vmem:[#allocation3 + $0xc0] sm:$0xff] %vm1342, %v1271
      %1356 = vst.msk [vmem:[#allocation3 + $0xd0] sm:$0xff] %vm1342, %v1273
      %1357 = vst.msk [vmem:[#allocation3 + $0xe0] sm:$0xff] %vm1342, %v1275
      %1358 = vst.msk [vmem:[#allocation3 + $0xf0] sm:$0xff] %vm1342, %v1277
      %1359 = vst.msk [vmem:[#allocation3 + $0x100] sm:$0xff] %vm1342, %v1279
      %1360 = vst.msk [vmem:[#allocation3 + $0x110] sm:$0xff] %vm1342, %v1281
      %1361 = vst.msk [vmem:[#allocation3 + $0x120] sm:$0xff] %vm1342, %v1283
      %1362 = vst.msk [vmem:[#allocation3 + $0x130] sm:$0xff] %vm1342, %v1285
      %1363 = vst.msk [vmem:[#allocation3 + $0x140] sm:$0xff] %vm1342, %v1287
      %1364 = vst.msk [vmem:[#allocation3 + $0x150] sm:$0xff] %vm1342, %v1289
      %1365 = vst.msk [vmem:[#allocation3 + $0x160] sm:$0xff] %vm1342, %v1291
      %1366 = vst.msk [vmem:[#allocation3 + $0x170] sm:$0xff] %vm1342, %v1293
      %1367 = vst.msk [vmem:[#allocation3 + $0x180] sm:$0xff] %vm1342, %v1295
      %1368 = vst.msk [vmem:[#allocation3 + $0x190] sm:$0xff] %vm1342, %v1297
      %1369 = vst.msk [vmem:[#allocation3 + $0x1a0] sm:$0xff] %vm1342, %v1299
      %1370 = vst.msk [vmem:[#allocation3 + $0x1b0] sm:$0xff] %vm1342, %v1301
      %1371 = vst.msk [vmem:[#allocation3 + $0x1c0] sm:$0xff] %vm1342, %v1303
      %1372 = vst.msk [vmem:[#allocation3 + $0x1d0] sm:$0xff] %vm1342, %v1305
      %1373 = vst.msk [vmem:[#allocation3 + $0x1e0] sm:$0xff] %vm1342, %v1307
      %1374 = vst.msk [vmem:[#allocation3 + $0x1f0] sm:$0xff] %vm1342, %v1309
      %s1375 = scalar_lea.vmem [#allocation2], 48
      %v1376 = vld [vmem:[%s1375] sm:$0xff]
      %v1377 = vld [vmem:[%s1375 + $0x8] sm:$0xff]
      %v1378 = vld [vmem:[%s1375 + $0x18] sm:$0xff]
      %v1379 = vld [vmem:[%s1375 + $0x20] sm:$0xff]
      %v1380 = vld [vmem:[%s1375 + $0x30] sm:$0xff]
      %v1381 = vld [vmem:[%s1375 + $0x38] sm:$0xff]
      %v1382 = vld [vmem:[%s1375 + $0x48] sm:$0xff]
      %v1383 = vld [vmem:[%s1375 + $0x50] sm:$0xff]
      %v1384 = vld [vmem:[%s1375 + $0x60] sm:$0xff]
      %v1385 = vld [vmem:[%s1375 + $0x68] sm:$0xff]
      %v1386 = vld [vmem:[%s1375 + $0x78] sm:$0xff]
      %v1387 = vld [vmem:[%s1375 + $0x80] sm:$0xff]
      %v1388 = vld [vmem:[%s1375 + $0x90] sm:$0xff]
      %v1389 = vld [vmem:[%s1375 + $0x98] sm:$0xff]
      %v1390 = vld [vmem:[%s1375 + $0xa8] sm:$0xff]
      %v1391 = vld [vmem:[%s1375 + $0xb0] sm:$0xff]
      %v1392 = vld [vmem:[%s1375 + $0xc0] sm:$0xff]
      %v1393 = vld [vmem:[%s1375 + $0xc8] sm:$0xff]
      %v1394 = vld [vmem:[%s1375 + $0xd8] sm:$0xff]
      %v1395 = vld [vmem:[%s1375 + $0xe0] sm:$0xff]
      %v1396 = vld [vmem:[%s1375 + $0xf0] sm:$0xff]
      %v1397 = vld [vmem:[%s1375 + $0xf8] sm:$0xff]
      %v1398 = vld [vmem:[%s1375 + $0x108] sm:$0xff]
      %v1399 = vld [vmem:[%s1375 + $0x110] sm:$0xff]
      %v1400 = vld [vmem:[%s1375 + $0x120] sm:$0xff]
      %v1401 = vld [vmem:[%s1375 + $0x128] sm:$0xff]
      %v1402 = vld [vmem:[%s1375 + $0x138] sm:$0xff]
      %v1403 = vld [vmem:[%s1375 + $0x140] sm:$0xff]
      %v1404 = vld [vmem:[%s1375 + $0x150] sm:$0xff]
      %v1405 = vld [vmem:[%s1375 + $0x158] sm:$0xff]
      %v1406 = vld [vmem:[%s1375 + $0x168] sm:$0xff]
      %v1407 = vld [vmem:[%s1375 + $0x170] sm:$0xff]
      %1440 = vrot.lane.b32.xlu0 %v1376, 96
      %v1441 = vpop.permute.xlu0 %1440
      %1442 = vrot.lane.b32.xlu0 %v1377, 96
      %v1443 = vpop.permute.xlu0 %1442
      %1444 = vrot.lane.b32.xlu0 %v1378, 96
      %v1445 = vpop.permute.xlu0 %1444
      %1446 = vrot.lane.b32.xlu0 %v1379, 96
      %v1447 = vpop.permute.xlu0 %1446
      %1448 = vrot.lane.b32.xlu0 %v1380, 96
      %v1449 = vpop.permute.xlu0 %1448
      %1450 = vrot.lane.b32.xlu0 %v1381, 96
      %v1451 = vpop.permute.xlu0 %1450
      %1452 = vrot.lane.b32.xlu0 %v1382, 96
      %v1453 = vpop.permute.xlu0 %1452
      %1454 = vrot.lane.b32.xlu0 %v1383, 96
      %v1455 = vpop.permute.xlu0 %1454
      %1456 = vrot.lane.b32.xlu0 %v1384, 96
      %v1457 = vpop.permute.xlu0 %1456
      %1458 = vrot.lane.b32.xlu0 %v1385, 96
      %v1459 = vpop.permute.xlu0 %1458
      %1460 = vrot.lane.b32.xlu0 %v1386, 96
      %v1461 = vpop.permute.xlu0 %1460
      %1462 = vrot.lane.b32.xlu0 %v1387, 96
      %v1463 = vpop.permute.xlu0 %1462
      %1464 = vrot.lane.b32.xlu0 %v1388, 96
      %v1465 = vpop.permute.xlu0 %1464
      %1466 = vrot.lane.b32.xlu0 %v1389, 96
      %v1467 = vpop.permute.xlu0 %1466
      %1468 = vrot.lane.b32.xlu0 %v1390, 96
      %v1469 = vpop.permute.xlu0 %1468
      %1470 = vrot.lane.b32.xlu0 %v1391, 96
      %v1471 = vpop.permute.xlu0 %1470
      %1472 = vrot.lane.b32.xlu0 %v1392, 96
      %v1473 = vpop.permute.xlu0 %1472
      %1474 = vrot.lane.b32.xlu0 %v1393, 96
      %v1475 = vpop.permute.xlu0 %1474
      %1476 = vrot.lane.b32.xlu0 %v1394, 96
      %v1477 = vpop.permute.xlu0 %1476
      %1478 = vrot.lane.b32.xlu0 %v1395, 96
      %v1479 = vpop.permute.xlu0 %1478
      %1480 = vrot.lane.b32.xlu0 %v1396, 96
      %v1481 = vpop.permute.xlu0 %1480
      %1482 = vrot.lane.b32.xlu0 %v1397, 96
      %v1483 = vpop.permute.xlu0 %1482
      %1484 = vrot.lane.b32.xlu0 %v1398, 96
      %v1485 = vpop.permute.xlu0 %1484
      %1486 = vrot.lane.b32.xlu0 %v1399, 96
      %v1487 = vpop.permute.xlu0 %1486
      %1488 = vrot.lane.b32.xlu0 %v1400, 96
      %v1489 = vpop.permute.xlu0 %1488
      %1490 = vrot.lane.b32.xlu0 %v1401, 96
      %v1491 = vpop.permute.xlu0 %1490
      %1492 = vrot.lane.b32.xlu0 %v1402, 96
      %v1493 = vpop.permute.xlu0 %1492
      %1494 = vrot.lane.b32.xlu0 %v1403, 96
      %v1495 = vpop.permute.xlu0 %1494
      %1496 = vrot.lane.b32.xlu0 %v1404, 96
      %v1497 = vpop.permute.xlu0 %1496
      %1498 = vrot.lane.b32.xlu0 %v1405, 96
      %v1499 = vpop.permute.xlu0 %1498
      %1500 = vrot.lane.b32.xlu0 %v1406, 96
      %v1501 = vpop.permute.xlu0 %1500
      %1502 = vrot.lane.b32.xlu0 %v1407, 96
      %v1503 = vpop.permute.xlu0 %1502
      %vm1536 = vcmask 917248
      %1537 = vst.msk [vmem:[#allocation3] sm:$0xff] %vm1536, %v1441
      %1538 = vst.msk [vmem:[#allocation3 + $0x10] sm:$0xff] %vm1536, %v1443
      %1539 = vst.msk [vmem:[#allocation3 + $0x20] sm:$0xff] %vm1536, %v1445
      %1540 = vst.msk [vmem:[#allocation3 + $0x30] sm:$0xff] %vm1536, %v1447
      %1541 = vst.msk [vmem:[#allocation3 + $0x40] sm:$0xff] %vm1536, %v1449
      %1542 = vst.msk [vmem:[#allocation3 + $0x50] sm:$0xff] %vm1536, %v1451
      %1543 = vst.msk [vmem:[#allocation3 + $0x60] sm:$0xff] %vm1536, %v1453
      %1544 = vst.msk [vmem:[#allocation3 + $0x70] sm:$0xff] %vm1536, %v1455
      %1545 = vst.msk [vmem:[#allocation3 + $0x80] sm:$0xff] %vm1536, %v1457
      %1546 = vst.msk [vmem:[#allocation3 + $0x90] sm:$0xff] %vm1536, %v1459
      %1547 = vst.msk [vmem:[#allocation3 + $0xa0] sm:$0xff] %vm1536, %v1461
      %1548 = vst.msk [vmem:[#allocation3 + $0xb0] sm:$0xff] %vm1536, %v1463
      %1549 = vst.msk [vmem:[#allocation3 + $0xc0] sm:$0xff] %vm1536, %v1465
      %1550 = vst.msk [vmem:[#allocation3 + $0xd0] sm:$0xff] %vm1536, %v1467
      %1551 = vst.msk [vmem:[#allocation3 + $0xe0] sm:$0xff] %vm1536, %v1469
      %1552 = vst.msk [vmem:[#allocation3 + $0xf0] sm:$0xff] %vm1536, %v1471
      %1553 = vst.msk [vmem:[#allocation3 + $0x100] sm:$0xff] %vm1536, %v1473
      %1554 = vst.msk [vmem:[#allocation3 + $0x110] sm:$0xff] %vm1536, %v1475
      %1555 = vst.msk [vmem:[#allocation3 + $0x120] sm:$0xff] %vm1536, %v1477
      %1556 = vst.msk [vmem:[#allocation3 + $0x130] sm:$0xff] %vm1536, %v1479
      %1557 = vst.msk [vmem:[#allocation3 + $0x140] sm:$0xff] %vm1536, %v1481
      %1558 = vst.msk [vmem:[#allocation3 + $0x150] sm:$0xff] %vm1536, %v1483
      %1559 = vst.msk [vmem:[#allocation3 + $0x160] sm:$0xff] %vm1536, %v1485
      %1560 = vst.msk [vmem:[#allocation3 + $0x170] sm:$0xff] %vm1536, %v1487
      %1561 = vst.msk [vmem:[#allocation3 + $0x180] sm:$0xff] %vm1536, %v1489
      %1562 = vst.msk [vmem:[#allocation3 + $0x190] sm:$0xff] %vm1536, %v1491
      %1563 = vst.msk [vmem:[#allocation3 + $0x1a0] sm:$0xff] %vm1536, %v1493
      %1564 = vst.msk [vmem:[#allocation3 + $0x1b0] sm:$0xff] %vm1536, %v1495
      %1565 = vst.msk [vmem:[#allocation3 + $0x1c0] sm:$0xff] %vm1536, %v1497
      %1566 = vst.msk [vmem:[#allocation3 + $0x1d0] sm:$0xff] %vm1536, %v1499
      %1567 = vst.msk [vmem:[#allocation3 + $0x1e0] sm:$0xff] %vm1536, %v1501
      %1568 = vst.msk [vmem:[#allocation3 + $0x1f0] sm:$0xff] %vm1536, %v1503
      %v1569 = vld [vmem:[%s1375 + $0x1] sm:$0xff]
      %v1570 = vld [vmem:[%s1375 + $0x9] sm:$0xff]
      %v1571 = vld [vmem:[%s1375 + $0x19] sm:$0xff]
      %v1572 = vld [vmem:[%s1375 + $0x21] sm:$0xff]
      %v1573 = vld [vmem:[%s1375 + $0x31] sm:$0xff]
      %v1574 = vld [vmem:[%s1375 + $0x39] sm:$0xff]
      %v1575 = vld [vmem:[%s1375 + $0x49] sm:$0xff]
      %v1576 = vld [vmem:[%s1375 + $0x51] sm:$0xff]
      %v1577 = vld [vmem:[%s1375 + $0x61] sm:$0xff]
      %v1578 = vld [vmem:[%s1375 + $0x69] sm:$0xff]
      %v1579 = vld [vmem:[%s1375 + $0x79] sm:$0xff]
      %v1580 = vld [vmem:[%s1375 + $0x81] sm:$0xff]
      %v1581 = vld [vmem:[%s1375 + $0x91] sm:$0xff]
      %v1582 = vld [vmem:[%s1375 + $0x99] sm:$0xff]
      %v1583 = vld [vmem:[%s1375 + $0xa9] sm:$0xff]
      %v1584 = vld [vmem:[%s1375 + $0xb1] sm:$0xff]
      %v1585 = vld [vmem:[%s1375 + $0xc1] sm:$0xff]
      %v1586 = vld [vmem:[%s1375 + $0xc9] sm:$0xff]
      %v1587 = vld [vmem:[%s1375 + $0xd9] sm:$0xff]
      %v1588 = vld [vmem:[%s1375 + $0xe1] sm:$0xff]
      %v1589 = vld [vmem:[%s1375 + $0xf1] sm:$0xff]
      %v1590 = vld [vmem:[%s1375 + $0xf9] sm:$0xff]
      %v1591 = vld [vmem:[%s1375 + $0x109] sm:$0xff]
      %v1592 = vld [vmem:[%s1375 + $0x111] sm:$0xff]
      %v1593 = vld [vmem:[%s1375 + $0x121] sm:$0xff]
      %v1594 = vld [vmem:[%s1375 + $0x129] sm:$0xff]
      %v1595 = vld [vmem:[%s1375 + $0x139] sm:$0xff]
      %v1596 = vld [vmem:[%s1375 + $0x141] sm:$0xff]
      %v1597 = vld [vmem:[%s1375 + $0x151] sm:$0xff]
      %v1598 = vld [vmem:[%s1375 + $0x159] sm:$0xff]
      %v1599 = vld [vmem:[%s1375 + $0x169] sm:$0xff]
      %v1600 = vld [vmem:[%s1375 + $0x171] sm:$0xff]
      %1633 = vrot.lane.b32.xlu0 %v1569, 112
      %v1634 = vpop.permute.xlu0 %1633
      %1635 = vrot.lane.b32.xlu0 %v1570, 112
      %v1636 = vpop.permute.xlu0 %1635
      %1637 = vrot.lane.b32.xlu0 %v1571, 112
      %v1638 = vpop.permute.xlu0 %1637
      %1639 = vrot.lane.b32.xlu0 %v1572, 112
      %v1640 = vpop.permute.xlu0 %1639
      %1641 = vrot.lane.b32.xlu0 %v1573, 112
      %v1642 = vpop.permute.xlu0 %1641
      %1643 = vrot.lane.b32.xlu0 %v1574, 112
      %v1644 = vpop.permute.xlu0 %1643
      %1645 = vrot.lane.b32.xlu0 %v1575, 112
      %v1646 = vpop.permute.xlu0 %1645
      %1647 = vrot.lane.b32.xlu0 %v1576, 112
      %v1648 = vpop.permute.xlu0 %1647
      %1649 = vrot.lane.b32.xlu0 %v1577, 112
      %v1650 = vpop.permute.xlu0 %1649
      %1651 = vrot.lane.b32.xlu0 %v1578, 112
      %v1652 = vpop.permute.xlu0 %1651
      %1653 = vrot.lane.b32.xlu0 %v1579, 112
      %v1654 = vpop.permute.xlu0 %1653
      %1655 = vrot.lane.b32.xlu0 %v1580, 112
      %v1656 = vpop.permute.xlu0 %1655
      %1657 = vrot.lane.b32.xlu0 %v1581, 112
      %v1658 = vpop.permute.xlu0 %1657
      %1659 = vrot.lane.b32.xlu0 %v1582, 112
      %v1660 = vpop.permute.xlu0 %1659
      %1661 = vrot.lane.b32.xlu0 %v1583, 112
      %v1662 = vpop.permute.xlu0 %1661
      %1663 = vrot.lane.b32.xlu0 %v1584, 112
      %v1664 = vpop.permute.xlu0 %1663
      %1665 = vrot.lane.b32.xlu0 %v1585, 112
      %v1666 = vpop.permute.xlu0 %1665
      %1667 = vrot.lane.b32.xlu0 %v1586, 112
      %v1668 = vpop.permute.xlu0 %1667
      %1669 = vrot.lane.b32.xlu0 %v1587, 112
      %v1670 = vpop.permute.xlu0 %1669
      %1671 = vrot.lane.b32.xlu0 %v1588, 112
      %v1672 = vpop.permute.xlu0 %1671
      %1673 = vrot.lane.b32.xlu0 %v1589, 112
      %v1674 = vpop.permute.xlu0 %1673
      %1675 = vrot.lane.b32.xlu0 %v1590, 112
      %v1676 = vpop.permute.xlu0 %1675
      %1677 = vrot.lane.b32.xlu0 %v1591, 112
      %v1678 = vpop.permute.xlu0 %1677
      %1679 = vrot.lane.b32.xlu0 %v1592, 112
      %v1680 = vpop.permute.xlu0 %1679
      %1681 = vrot.lane.b32.xlu0 %v1593, 112
      %v1682 = vpop.permute.xlu0 %1681
      %1683 = vrot.lane.b32.xlu0 %v1594, 112
      %v1684 = vpop.permute.xlu0 %1683
      %1685 = vrot.lane.b32.xlu0 %v1595, 112
      %v1686 = vpop.permute.xlu0 %1685
      %1687 = vrot.lane.b32.xlu0 %v1596, 112
      %v1688 = vpop.permute.xlu0 %1687
      %1689 = vrot.lane.b32.xlu0 %v1597, 112
      %v1690 = vpop.permute.xlu0 %1689
      %1691 = vrot.lane.b32.xlu0 %v1598, 112
      %v1692 = vpop.permute.xlu0 %1691
      %1693 = vrot.lane.b32.xlu0 %v1599, 112
      %v1694 = vpop.permute.xlu0 %1693
      %1695 = vrot.lane.b32.xlu0 %v1600, 112
      %v1696 = vpop.permute.xlu0 %1695
      %vm1729 = vcmask 1048448
      %1730 = vst.msk [vmem:[#allocation3] sm:$0xff] %vm1729, %v1634
      %1731 = vst.msk [vmem:[#allocation3 + $0x10] sm:$0xff] %vm1729, %v1636
      %1732 = vst.msk [vmem:[#allocation3 + $0x20] sm:$0xff] %vm1729, %v1638
      %1733 = vst.msk [vmem:[#allocation3 + $0x30] sm:$0xff] %vm1729, %v1640
      %1734 = vst.msk [vmem:[#allocation3 + $0x40] sm:$0xff] %vm1729, %v1642
      %1735 = vst.msk [vmem:[#allocation3 + $0x50] sm:$0xff] %vm1729, %v1644
      %1736 = vst.msk [vmem:[#allocation3 + $0x60] sm:$0xff] %vm1729, %v1646
      %1737 = vst.msk [vmem:[#allocation3 + $0x70] sm:$0xff] %vm1729, %v1648
      %1738 = vst.msk [vmem:[#allocation3 + $0x80] sm:$0xff] %vm1729, %v1650
      %1739 = vst.msk [vmem:[#allocation3 + $0x90] sm:$0xff] %vm1729, %v1652
      %1740 = vst.msk [vmem:[#allocation3 + $0xa0] sm:$0xff] %vm1729, %v1654
      %1741 = vst.msk [vmem:[#allocation3 + $0xb0] sm:$0xff] %vm1729, %v1656
      %1742 = vst.msk [vmem:[#allocation3 + $0xc0] sm:$0xff] %vm1729, %v1658
      %1743 = vst.msk [vmem:[#allocation3 + $0xd0] sm:$0xff] %vm1729, %v1660
      %1744 = vst.msk [vmem:[#allocation3 + $0xe0] sm:$0xff] %vm1729, %v1662
      %1745 = vst.msk [vmem:[#allocation3 + $0xf0] sm:$0xff] %vm1729, %v1664
      %1746 = vst.msk [vmem:[#allocation3 + $0x100] sm:$0xff] %vm1729, %v1666
      %1747 = vst.msk [vmem:[#allocation3 + $0x110] sm:$0xff] %vm1729, %v1668
      %1748 = vst.msk [vmem:[#allocation3 + $0x120] sm:$0xff] %vm1729, %v1670
      %1749 = vst.msk [vmem:[#allocation3 + $0x130] sm:$0xff] %vm1729, %v1672
      %1750 = vst.msk [vmem:[#allocation3 + $0x140] sm:$0xff] %vm1729, %v1674
      %1751 = vst.msk [vmem:[#allocation3 + $0x150] sm:$0xff] %vm1729, %v1676
      %1752 = vst.msk [vmem:[#allocation3 + $0x160] sm:$0xff] %vm1729, %v1678
      %1753 = vst.msk [vmem:[#allocation3 + $0x170] sm:$0xff] %vm1729, %v1680
      %1754 = vst.msk [vmem:[#allocation3 + $0x180] sm:$0xff] %vm1729, %v1682
      %1755 = vst.msk [vmem:[#allocation3 + $0x190] sm:$0xff] %vm1729, %v1684
      %1756 = vst.msk [vmem:[#allocation3 + $0x1a0] sm:$0xff] %vm1729, %v1686
      %1757 = vst.msk [vmem:[#allocation3 + $0x1b0] sm:$0xff] %vm1729, %v1688
      %1758 = vst.msk [vmem:[#allocation3 + $0x1c0] sm:$0xff] %vm1729, %v1690
      %1759 = vst.msk [vmem:[#allocation3 + $0x1d0] sm:$0xff] %vm1729, %v1692
      %1760 = vst.msk [vmem:[#allocation3 + $0x1e0] sm:$0xff] %vm1729, %v1694
      %1761 = vst.msk [vmem:[#allocation3 + $0x1f0] sm:$0xff] %vm1729, %v1696
      %v1762 = vld [vmem:[%s1375 + $0x2] sm:$0xff]
      %v1763 = vld [vmem:[%s1375 + $0xa] sm:$0xff]
      %v1764 = vld [vmem:[%s1375 + $0x1a] sm:$0xff]
      %v1765 = vld [vmem:[%s1375 + $0x22] sm:$0xff]
      %v1766 = vld [vmem:[%s1375 + $0x32] sm:$0xff]
      %v1767 = vld [vmem:[%s1375 + $0x3a] sm:$0xff]
      %v1768 = vld [vmem:[%s1375 + $0x4a] sm:$0xff]
      %v1769 = vld [vmem:[%s1375 + $0x52] sm:$0xff]
      %v1770 = vld [vmem:[%s1375 + $0x62] sm:$0xff]
      %v1771 = vld [vmem:[%s1375 + $0x6a] sm:$0xff]
      %v1772 = vld [vmem:[%s1375 + $0x7a] sm:$0xff]
      %v1773 = vld [vmem:[%s1375 + $0x82] sm:$0xff]
      %v1774 = vld [vmem:[%s1375 + $0x92] sm:$0xff]
      %v1775 = vld [vmem:[%s1375 + $0x9a] sm:$0xff]
      %v1776 = vld [vmem:[%s1375 + $0xaa] sm:$0xff]
      %v1777 = vld [vmem:[%s1375 + $0xb2] sm:$0xff]
      %v1778 = vld [vmem:[%s1375 + $0xc2] sm:$0xff]
      %v1779 = vld [vmem:[%s1375 + $0xca] sm:$0xff]
      %v1780 = vld [vmem:[%s1375 + $0xda] sm:$0xff]
      %v1781 = vld [vmem:[%s1375 + $0xe2] sm:$0xff]
      %v1782 = vld [vmem:[%s1375 + $0xf2] sm:$0xff]
      %v1783 = vld [vmem:[%s1375 + $0xfa] sm:$0xff]
      %v1784 = vld [vmem:[%s1375 + $0x10a] sm:$0xff]
      %v1785 = vld [vmem:[%s1375 + $0x112] sm:$0xff]
      %v1786 = vld [vmem:[%s1375 + $0x122] sm:$0xff]
      %v1787 = vld [vmem:[%s1375 + $0x12a] sm:$0xff]
      %v1788 = vld [vmem:[%s1375 + $0x13a] sm:$0xff]
      %v1789 = vld [vmem:[%s1375 + $0x142] sm:$0xff]
      %v1790 = vld [vmem:[%s1375 + $0x152] sm:$0xff]
      %v1791 = vld [vmem:[%s1375 + $0x15a] sm:$0xff]
      %v1792 = vld [vmem:[%s1375 + $0x16a] sm:$0xff]
      %v1793 = vld [vmem:[%s1375 + $0x172] sm:$0xff]
      %1794 = vst.msk [vmem:[#allocation3 + $0x8] sm:$0xff] %vm225, %v1762
      %1795 = vst.msk [vmem:[#allocation3 + $0x18] sm:$0xff] %vm225, %v1763
      %1796 = vst.msk [vmem:[#allocation3 + $0x28] sm:$0xff] %vm225, %v1764
      %1797 = vst.msk [vmem:[#allocation3 + $0x38] sm:$0xff] %vm225, %v1765
      %1798 = vst.msk [vmem:[#allocation3 + $0x48] sm:$0xff] %vm225, %v1766
      %1799 = vst.msk [vmem:[#allocation3 + $0x58] sm:$0xff] %vm225, %v1767
      %1800 = vst.msk [vmem:[#allocation3 + $0x68] sm:$0xff] %vm225, %v1768
      %1801 = vst.msk [vmem:[#allocation3 + $0x78] sm:$0xff] %vm225, %v1769
      %1802 = vst.msk [vmem:[#allocation3 + $0x88] sm:$0xff] %vm225, %v1770
      %1803 = vst.msk [vmem:[#allocation3 + $0x98] sm:$0xff] %vm225, %v1771
      %1804 = vst.msk [vmem:[#allocation3 + $0xa8] sm:$0xff] %vm225, %v1772
      %1805 = vst.msk [vmem:[#allocation3 + $0xb8] sm:$0xff] %vm225, %v1773
      %1806 = vst.msk [vmem:[#allocation3 + $0xc8] sm:$0xff] %vm225, %v1774
      %1807 = vst.msk [vmem:[#allocation3 + $0xd8] sm:$0xff] %vm225, %v1775
      %1808 = vst.msk [vmem:[#allocation3 + $0xe8] sm:$0xff] %vm225, %v1776
      %1809 = vst.msk [vmem:[#allocation3 + $0xf8] sm:$0xff] %vm225, %v1777
      %1810 = vst.msk [vmem:[#allocation3 + $0x108] sm:$0xff] %vm225, %v1778
      %1811 = vst.msk [vmem:[#allocation3 + $0x118] sm:$0xff] %vm225, %v1779
      %1812 = vst.msk [vmem:[#allocation3 + $0x128] sm:$0xff] %vm225, %v1780
      %1813 = vst.msk [vmem:[#allocation3 + $0x138] sm:$0xff] %vm225, %v1781
      %1814 = vst.msk [vmem:[#allocation3 + $0x148] sm:$0xff] %vm225, %v1782
      %1815 = vst.msk [vmem:[#allocation3 + $0x158] sm:$0xff] %vm225, %v1783
      %1816 = vst.msk [vmem:[#allocation3 + $0x168] sm:$0xff] %vm225, %v1784
      %1817 = vst.msk [vmem:[#allocation3 + $0x178] sm:$0xff] %vm225, %v1785
      %1818 = vst.msk [vmem:[#allocation3 + $0x188] sm:$0xff] %vm225, %v1786
      %1819 = vst.msk [vmem:[#allocation3 + $0x198] sm:$0xff] %vm225, %v1787
      %1820 = vst.msk [vmem:[#allocation3 + $0x1a8] sm:$0xff] %vm225, %v1788
      %1821 = vst.msk [vmem:[#allocation3 + $0x1b8] sm:$0xff] %vm225, %v1789
      %1822 = vst.msk [vmem:[#allocation3 + $0x1c8] sm:$0xff] %vm225, %v1790
      %1823 = vst.msk [vmem:[#allocation3 + $0x1d8] sm:$0xff] %vm225, %v1791
      %1824 = vst.msk [vmem:[#allocation3 + $0x1e8] sm:$0xff] %vm225, %v1792
      %1825 = vst.msk [vmem:[#allocation3 + $0x1f8] sm:$0xff] %vm225, %v1793
      %v1826 = vld [vmem:[#allocation3] sm:$0xff]
      %v1827 = vld [vmem:[#allocation3 + $0x8] sm:$0xff]
      %v1828 = vld [vmem:[#allocation3 + $0x10] sm:$0xff]
      %v1829 = vld [vmem:[#allocation3 + $0x18] sm:$0xff]
      %v1830 = vld [vmem:[#allocation3 + $0x20] sm:$0xff]
      %v1831 = vld [vmem:[#allocation3 + $0x28] sm:$0xff]
      %v1832 = vld [vmem:[#allocation3 + $0x30] sm:$0xff]
      %v1833 = vld [vmem:[#allocation3 + $0x38] sm:$0xff]
      %v1834 = vld [vmem:[#allocation3 + $0x40] sm:$0xff]
      %v1835 = vld [vmem:[#allocation3 + $0x48] sm:$0xff]
      %v1836 = vld [vmem:[#allocation3 + $0x50] sm:$0xff]
      %v1837 = vld [vmem:[#allocation3 + $0x58] sm:$0xff]
      %v1838 = vld [vmem:[#allocation3 + $0x60] sm:$0xff]
      %v1839 = vld [vmem:[#allocation3 + $0x68] sm:$0xff]
      %v1840 = vld [vmem:[#allocation3 + $0x70] sm:$0xff]
      %v1841 = vld [vmem:[#allocation3 + $0x78] sm:$0xff]
      %v1842 = vld [vmem:[#allocation3 + $0x80] sm:$0xff]
      %v1843 = vld [vmem:[#allocation3 + $0x88] sm:$0xff]
      %v1844 = vld [vmem:[#allocation3 + $0x90] sm:$0xff]
      %v1845 = vld [vmem:[#allocation3 + $0x98] sm:$0xff]
      %v1846 = vld [vmem:[#allocation3 + $0xa0] sm:$0xff]
      %v1847 = vld [vmem:[#allocation3 + $0xa8] sm:$0xff]
      %v1848 = vld [vmem:[#allocation3 + $0xb0] sm:$0xff]
      %v1849 = vld [vmem:[#allocation3 + $0xb8] sm:$0xff]
      %v1850 = vld [vmem:[#allocation3 + $0xc0] sm:$0xff]
      %v1851 = vld [vmem:[#allocation3 + $0xc8] sm:$0xff]
      %v1852 = vld [vmem:[#allocation3 + $0xd0] sm:$0xff]
      %v1853 = vld [vmem:[#allocation3 + $0xd8] sm:$0xff]
      %v1854 = vld [vmem:[#allocation3 + $0xe0] sm:$0xff]
      %v1855 = vld [vmem:[#allocation3 + $0xe8] sm:$0xff]
      %v1856 = vld [vmem:[#allocation3 + $0xf0] sm:$0xff]
      %v1857 = vld [vmem:[#allocation3 + $0xf8] sm:$0xff]
      %v1858 = vld [vmem:[#allocation3 + $0x100] sm:$0xff]
      %v1859 = vld [vmem:[#allocation3 + $0x108] sm:$0xff]
      %v1860 = vld [vmem:[#allocation3 + $0x110] sm:$0xff]
      %v1861 = vld [vmem:[#allocation3 + $0x118] sm:$0xff]
      %v1862 = vld [vmem:[#allocation3 + $0x120] sm:$0xff]
      %v1863 = vld [vmem:[#allocation3 + $0x128] sm:$0xff]
      %v1864 = vld [vmem:[#allocation3 + $0x130] sm:$0xff]
      %v1865 = vld [vmem:[#allocation3 + $0x138] sm:$0xff]
      %v1866 = vld [vmem:[#allocation3 + $0x140] sm:$0xff]
      %v1867 = vld [vmem:[#allocation3 + $0x148] sm:$0xff]
      %v1868 = vld [vmem:[#allocation3 + $0x150] sm:$0xff]
      %v1869 = vld [vmem:[#allocation3 + $0x158] sm:$0xff]
      %v1870 = vld [vmem:[#allocation3 + $0x160] sm:$0xff]
      %v1871 = vld [vmem:[#allocation3 + $0x168] sm:$0xff]
      %v1872 = vld [vmem:[#allocation3 + $0x170] sm:$0xff]
      %v1873 = vld [vmem:[#allocation3 + $0x178] sm:$0xff]
      %v1874 = vld [vmem:[#allocation3 + $0x180] sm:$0xff]
      %v1875 = vld [vmem:[#allocation3 + $0x188] sm:$0xff]
      %v1876 = vld [vmem:[#allocation3 + $0x190] sm:$0xff]
      %v1877 = vld [vmem:[#allocation3 + $0x198] sm:$0xff]
      %v1878 = vld [vmem:[#allocation3 + $0x1a0] sm:$0xff]
      %v1879 = vld [vmem:[#allocation3 + $0x1a8] sm:$0xff]
      %v1880 = vld [vmem:[#allocation3 + $0x1b0] sm:$0xff]
      %v1881 = vld [vmem:[#allocation3 + $0x1b8] sm:$0xff]
      %v1882 = vld [vmem:[#allocation3 + $0x1c0] sm:$0xff]
      %v1883 = vld [vmem:[#allocation3 + $0x1c8] sm:$0xff]
      %v1884 = vld [vmem:[#allocation3 + $0x1d0] sm:$0xff]
      %v1885 = vld [vmem:[#allocation3 + $0x1d8] sm:$0xff]
      %v1886 = vld [vmem:[#allocation3 + $0x1e0] sm:$0xff]
      %v1887 = vld [vmem:[#allocation3 + $0x1e8] sm:$0xff]
      %v1888 = vld [vmem:[#allocation3 + $0x1f0] sm:$0xff]
      %v1889 = vld [vmem:[#allocation3 + $0x1f8] sm:$0xff]
      %v1890 = vld [vmem:[%s1] sm:$0xff]
      %v1891 = vld [vmem:[%s1 + $0x8] sm:$0xff]
      %v1892 = vld [vmem:[%s1 + $0x10] sm:$0xff]
      %v1893 = vld [vmem:[%s1 + $0x18] sm:$0xff]
      %v1894 = vld [vmem:[%s1 + $0x20] sm:$0xff]
      %v1895 = vld [vmem:[%s1 + $0x28] sm:$0xff]
      %v1896 = vld [vmem:[%s1 + $0x30] sm:$0xff]
      %v1897 = vld [vmem:[%s1 + $0x38] sm:$0xff]
      %v1898 = vld [vmem:[%s1 + $0x40] sm:$0xff]
      %v1899 = vld [vmem:[%s1 + $0x48] sm:$0xff]
      %v1900 = vld [vmem:[%s1 + $0x50] sm:$0xff]
      %v1901 = vld [vmem:[%s1 + $0x58] sm:$0xff]
      %v1902 = vld [vmem:[%s1 + $0x60] sm:$0xff]
      %v1903 = vld [vmem:[%s1 + $0x68] sm:$0xff]
      %v1904 = vld [vmem:[%s1 + $0x70] sm:$0xff]
      %v1905 = vld [vmem:[%s1 + $0x78] sm:$0xff]
      %v1906 = vld [vmem:[%s1 + $0x80] sm:$0xff]
      %v1907 = vld [vmem:[%s1 + $0x88] sm:$0xff]
      %v1908 = vld [vmem:[%s2] sm:$0x1]
      %v1910 = vlaneseq
      %v1911 = vshrl.u32 %v1910, 7
      %v1912 = vsub.s32 0, %v1911
      %v1913 = vrot.slane %v1908, %v1912
      %v1916 = vsel %vm225, %v1827, 0
      %v1919 = vsel %vm225, %v1829, 0
      %v1922 = vsel %vm225, %v1831, 0
      %v1925 = vsel %vm225, %v1833, 0
      %v1928 = vsel %vm225, %v1835, 0
      %v1931 = vsel %vm225, %v1837, 0
      %v1934 = vsel %vm225, %v1839, 0
      %v1937 = vsel %vm225, %v1841, 0
      %v1940 = vsel %vm225, %v1843, 0
      %v1943 = vsel %vm225, %v1845, 0
      %v1946 = vsel %vm225, %v1847, 0
      %v1949 = vsel %vm225, %v1849, 0
      %v1952 = vsel %vm225, %v1851, 0
      %v1955 = vsel %vm225, %v1853, 0
      %v1958 = vsel %vm225, %v1855, 0
      %v1961 = vsel %vm225, %v1857, 0
      %v1964 = vsel %vm225, %v1859, 0
      %v1967 = vsel %vm225, %v1861, 0
      %v1970 = vsel %vm225, %v1863, 0
      %v1973 = vsel %vm225, %v1865, 0
      %v1976 = vsel %vm225, %v1867, 0
      %v1979 = vsel %vm225, %v1869, 0
      %v1982 = vsel %vm225, %v1871, 0
      %v1985 = vsel %vm225, %v1873, 0
      %v1988 = vsel %vm225, %v1875, 0
      %v1991 = vsel %vm225, %v1877, 0
      %v1994 = vsel %vm225, %v1879, 0
      %v1997 = vsel %vm225, %v1881, 0
      %v2000 = vsel %vm225, %v1883, 0
      %v2003 = vsel %vm225, %v1885, 0
      %v2006 = vsel %vm225, %v1887, 0
      %v2009 = vsel %vm225, %v1889, 0
      %2011 = vmatprep.subr.mxu0 0.0
      %2012 = vmatpush1.msra.mxu0 %v1890
      %2013 = vmatprep.subr.mxu0 0.0
      %2014 = vmatpush1.msra.mxu0 %v1891
      %2015 = vmatprep.subr.mxu0 0.0
      %2016 = vmatpush1.msra.mxu0 %v1892
      %2017 = vmatprep.subr.mxu0 0.0
      %2018 = vmatpush1.msra.mxu0 %v1893
      %2019 = vmatprep.subr.mxu0 0.0
      %2020 = vmatpush1.msra.mxu0 %v1894
      %2021 = vmatprep.subr.mxu0 0.0
      %2022 = vmatpush1.msra.mxu0 %v1895
      %2023 = vmatprep.subr.mxu0 0.0
      %2024 = vmatpush1.msra.mxu0 %v1896
      %2025 = vmatprep.subr.mxu0 0.0
      %2026 = vmatpush1.msra.mxu0 %v1897
      %2027 = vmatprep.subr.mxu0 0.0
      %2028 = vmatpush1.msra.mxu0 %v1898
      %2029 = vmatprep.subr.mxu0 0.0
      %2030 = vmatpush1.msra.mxu0 %v1899
      %2031 = vmatprep.subr.mxu0 0.0
      %2032 = vmatpush1.msra.mxu0 %v1900
      %2033 = vmatprep.subr.mxu0 0.0
      %2034 = vmatpush1.msra.mxu0 %v1901
      %2035 = vmatprep.subr.mxu0 0.0
      %2036 = vmatpush1.msra.mxu0 %v1902
      %2037 = vmatprep.subr.mxu0 0.0
      %2038 = vmatpush1.msra.mxu0 %v1903
      %2039 = vmatprep.subr.mxu0 0.0
      %2040 = vmatpush1.msra.mxu0 %v1904
      %2041 = vmatprep.subr.mxu0 0.0
      %2042 = vmatpush1.msra.mxu0 %v1905
      %2043 = vmatprep.subr.mxu0 0.0
      %2044 = vmatpush1.msra.mxu0 %v1906
      %2045 = vmatprep.subr.mxu0 0.0
      %2046 = vmatpush1.msra.mxu0 %v1907
      %2047 = vmatprep.subr.mxu0 0.0
      %2048 = vmatpush1.msra.mxu0 0.0
      %2049 = vmatprep.subr.mxu0 0.0
      %2050 = vmatpush1.msra.mxu0 0.0
      %2051 = vmatprep.subr.mxu0 0.0
      %2052 = vmatpush1.msra.mxu0 0.0
      %2053 = vmatprep.subr.mxu0 0.0
      %2054 = vmatpush1.msra.mxu0 0.0
      %2055 = vmatprep.subr.mxu0 0.0
      %2056 = vmatpush1.msra.mxu0 0.0
      %2057 = vmatprep.subr.mxu0 0.0
      %2058 = vmatpush1.msra.mxu0 0.0
      %2059 = vmatprep.subr.mxu0 0.0
      %2060 = vmatpush1.msra.mxu0 0.0
      %2061 = vmatprep.subr.mxu0 0.0
      %2062 = vmatpush1.msra.mxu0 0.0
      %2063 = vmatprep.subr.mxu0 0.0
      %2064 = vmatpush1.msra.mxu0 0.0
      %2065 = vmatprep.subr.mxu0 0.0
      %2066 = vmatpush1.msra.mxu0 0.0
      %2067 = vmatprep.subr.mxu0 0.0
      %2068 = vmatpush1.msra.mxu0 0.0
      %2069 = vmatprep.subr.mxu0 0.0
      %2070 = vmatpush1.msra.mxu0 0.0
      %2071 = vmatprep.subr.mxu0 0.0
      %2072 = vmatpush1.msra.mxu0 0.0
      %2073 = vmatprep.subr.mxu0 0.0
      %2074 = vmatpush1.msra.mxu0 0.0
      %2075 = vmatprep.mubr.f32.mxu0 %v1916
      %2076 = vmatmul.mubr.f32.gmra.mrb[0].mxu0 %v1826
      %v2077 = vpop.f32.mrb[0].mxu0
      %v2078 = vadd.f32 %v1913, %v2077
      %v2079 = vpop.f32.mrb[0].mxu0
      %2080 = vmatprep.mubr.f32.mxu0 %v1919
      %2081 = vmatmul.mubr.f32.gmra.mrb[0].mxu0 %v1828
      %v2082 = vpop.f32.mrb[0].mxu0
      %v2083 = vadd.f32 %v1913, %v2082
      %v2084 = vpop.f32.mrb[0].mxu0
      %2085 = vmatprep.mubr.f32.mxu0 %v1922
      %2086 = vmatmul.mubr.f32.gmra.mrb[0].mxu0 %v1830
      %v2087 = vpop.f32.mrb[0].mxu0
      %v2088 = vadd.f32 %v1913, %v2087
      %v2089 = vpop.f32.mrb[0].mxu0
      %2090 = vmatprep.mubr.f32.mxu0 %v1925
      %2091 = vmatmul.mubr.f32.gmra.mrb[0].mxu0 %v1832
      %v2092 = vpop.f32.mrb[0].mxu0
      %v2093 = vadd.f32 %v1913, %v2092
      %v2094 = vpop.f32.mrb[0].mxu0
      %2095 = vmatprep.mubr.f32.mxu0 %v1928
      %2096 = vmatmul.mubr.f32.gmra.mrb[0].mxu0 %v1834
      %v2097 = vpop.f32.mrb[0].mxu0
      %v2098 = vadd.f32 %v1913, %v2097
      %v2099 = vpop.f32.mrb[0].mxu0
      %2100 = vmatprep.mubr.f32.mxu0 %v1931
      %2101 = vmatmul.mubr.f32.gmra.mrb[0].mxu0 %v1836
      %v2102 = vpop.f32.mrb[0].mxu0
      %v2103 = vadd.f32 %v1913, %v2102
      %v2104 = vpop.f32.mrb[0].mxu0
      %2105 = vmatprep.mubr.f32.mxu0 %v1934
      %2106 = vmatmul.mubr.f32.gmra.mrb[0].mxu0 %v1838
      %v2107 = vpop.f32.mrb[0].mxu0
      %v2108 = vadd.f32 %v1913, %v2107
      %v2109 = vpop.f32.mrb[0].mxu0
      %2110 = vmatprep.mubr.f32.mxu0 %v1937
      %2111 = vmatmul.mubr.f32.gmra.mrb[0].mxu0 %v1840
      %v2112 = vpop.f32.mrb[0].mxu0
      %v2113 = vadd.f32 %v1913, %v2112
      %v2114 = vpop.f32.mrb[0].mxu0
      %2115 = vmatprep.mubr.f32.mxu0 %v1940
      %2116 = vmatmul.mubr.f32.gmra.mrb[0].mxu0 %v1842
      %v2117 = vpop.f32.mrb[0].mxu0
      %v2118 = vadd.f32 %v1913, %v2117
      %v2119 = vpop.f32.mrb[0].mxu0
      %2120 = vmatprep.mubr.f32.mxu0 %v1943
      %2121 = vmatmul.mubr.f32.gmra.mrb[0].mxu0 %v1844
      %v2122 = vpop.f32.mrb[0].mxu0
      %v2123 = vadd.f32 %v1913, %v2122
      %v2124 = vpop.f32.mrb[0].mxu0
      %2125 = vmatprep.mubr.f32.mxu0 %v1946
      %2126 = vmatmul.mubr.f32.gmra.mrb[0].mxu0 %v1846
      %v2127 = vpop.f32.mrb[0].mxu0
      %v2128 = vadd.f32 %v1913, %v2127
      %v2129 = vpop.f32.mrb[0].mxu0
      %2130 = vmatprep.mubr.f32.mxu0 %v1949
      %2131 = vmatmul.mubr.f32.gmra.mrb[0].mxu0 %v1848
      %v2132 = vpop.f32.mrb[0].mxu0
      %v2133 = vadd.f32 %v1913, %v2132
      %v2134 = vpop.f32.mrb[0].mxu0
      %2135 = vmatprep.mubr.f32.mxu0 %v1952
      %2136 = vmatmul.mubr.f32.gmra.mrb[0].mxu0 %v1850
      %v2137 = vpop.f32.mrb[0].mxu0
      %v2138 = vadd.f32 %v1913, %v2137
      %v2139 = vpop.f32.mrb[0].mxu0
      %2140 = vmatprep.mubr.f32.mxu0 %v1955
      %2141 = vmatmul.mubr.f32.gmra.mrb[0].mxu0 %v1852
      %v2142 = vpop.f32.mrb[0].mxu0
      %v2143 = vadd.f32 %v1913, %v2142
      %v2144 = vpop.f32.mrb[0].mxu0
      %2145 = vmatprep.mubr.f32.mxu0 %v1958
      %2146 = vmatmul.mubr.f32.gmra.mrb[0].mxu0 %v1854
      %v2147 = vpop.f32.mrb[0].mxu0
      %v2148 = vadd.f32 %v1913, %v2147
      %v2149 = vpop.f32.mrb[0].mxu0
      %2150 = vmatprep.mubr.f32.mxu0 %v1961
      %2151 = vmatmul.mubr.f32.gmra.mrb[0].mxu0 %v1856
      %v2152 = vpop.f32.mrb[0].mxu0
      %v2153 = vadd.f32 %v1913, %v2152
      %v2154 = vpop.f32.mrb[0].mxu0
      %2155 = vmatprep.mubr.f32.mxu0 %v1964
      %2156 = vmatmul.mubr.f32.gmra.mrb[0].mxu0 %v1858
      %v2157 = vpop.f32.mrb[0].mxu0
      %v2158 = vadd.f32 %v1913, %v2157
      %v2159 = vpop.f32.mrb[0].mxu0
      %2160 = vmatprep.mubr.f32.mxu0 %v1967
      %2161 = vmatmul.mubr.f32.gmra.mrb[0].mxu0 %v1860
      %v2162 = vpop.f32.mrb[0].mxu0
      %v2163 = vadd.f32 %v1913, %v2162
      %v2164 = vpop.f32.mrb[0].mxu0
      %2165 = vmatprep.mubr.f32.mxu0 %v1970
      %2166 = vmatmul.mubr.f32.gmra.mrb[0].mxu0 %v1862
      %v2167 = vpop.f32.mrb[0].mxu0
      %v2168 = vadd.f32 %v1913, %v2167
      %v2169 = vpop.f32.mrb[0].mxu0
      %2170 = vmatprep.mubr.f32.mxu0 %v1973
      %2171 = vmatmul.mubr.f32.gmra.mrb[0].mxu0 %v1864
      %v2172 = vpop.f32.mrb[0].mxu0
      %v2173 = vadd.f32 %v1913, %v2172
      %v2174 = vpop.f32.mrb[0].mxu0
      %2175 = vmatprep.mubr.f32.mxu0 %v1976
      %2176 = vmatmul.mubr.f32.gmra.mrb[0].mxu0 %v1866
      %v2177 = vpop.f32.mrb[0].mxu0
      %v2178 = vadd.f32 %v1913, %v2177
      %v2179 = vpop.f32.mrb[0].mxu0
      %2180 = vmatprep.mubr.f32.mxu0 %v1979
      %2181 = vmatmul.mubr.f32.gmra.mrb[0].mxu0 %v1868
      %v2182 = vpop.f32.mrb[0].mxu0
      %v2183 = vadd.f32 %v1913, %v2182
      %v2184 = vpop.f32.mrb[0].mxu0
      %2185 = vmatprep.mubr.f32.mxu0 %v1982
      %2186 = vmatmul.mubr.f32.gmra.mrb[0].mxu0 %v1870
      %v2187 = vpop.f32.mrb[0].mxu0
      %v2188 = vadd.f32 %v1913, %v2187
      %v2189 = vpop.f32.mrb[0].mxu0
      %2190 = vmatprep.mubr.f32.mxu0 %v1985
      %2191 = vmatmul.mubr.f32.gmra.mrb[0].mxu0 %v1872
      %v2192 = vpop.f32.mrb[0].mxu0
      %v2193 = vadd.f32 %v1913, %v2192
      %v2194 = vpop.f32.mrb[0].mxu0
      %2195 = vmatprep.mubr.f32.mxu0 %v1988
      %2196 = vmatmul.mubr.f32.gmra.mrb[0].mxu0 %v1874
      %v2197 = vpop.f32.mrb[0].mxu0
      %v2198 = vadd.f32 %v1913, %v2197
      %v2199 = vpop.f32.mrb[0].mxu0
      %2200 = vmatprep.mubr.f32.mxu0 %v1991
      %2201 = vmatmul.mubr.f32.gmra.mrb[0].mxu0 %v1876
      %v2202 = vpop.f32.mrb[0].mxu0
      %v2203 = vadd.f32 %v1913, %v2202
      %v2204 = vpop.f32.mrb[0].mxu0
      %2205 = vmatprep.mubr.f32.mxu0 %v1994
      %2206 = vmatmul.mubr.f32.gmra.mrb[0].mxu0 %v1878
      %v2207 = vpop.f32.mrb[0].mxu0
      %v2208 = vadd.f32 %v1913, %v2207
      %v2209 = vpop.f32.mrb[0].mxu0
      %2210 = vmatprep.mubr.f32.mxu0 %v1997
      %2211 = vmatmul.mubr.f32.gmra.mrb[0].mxu0 %v1880
      %v2212 = vpop.f32.mrb[0].mxu0
      %v2213 = vadd.f32 %v1913, %v2212
      %v2214 = vpop.f32.mrb[0].mxu0
      %2215 = vmatprep.mubr.f32.mxu0 %v2000
      %2216 = vmatmul.mubr.f32.gmra.mrb[0].mxu0 %v1882
      %v2217 = vpop.f32.mrb[0].mxu0
      %v2218 = vadd.f32 %v1913, %v2217
      %v2219 = vpop.f32.mrb[0].mxu0
      %2220 = vmatprep.mubr.f32.mxu0 %v2003
      %2221 = vmatmul.mubr.f32.gmra.mrb[0].mxu0 %v1884
      %v2222 = vpop.f32.mrb[0].mxu0
      %v2223 = vadd.f32 %v1913, %v2222
      %v2224 = vpop.f32.mrb[0].mxu0
      %2225 = vmatprep.mubr.f32.mxu0 %v2006
      %2226 = vmatmul.mubr.f32.gmra.mrb[0].mxu0 %v1886
      %v2227 = vpop.f32.mrb[0].mxu0
      %v2228 = vadd.f32 %v1913, %v2227
      %v2229 = vpop.f32.mrb[0].mxu0
      %2230 = vmatprep.mubr.f32.mxu0 %v2009
      %2231 = vmatmul.mubr.f32.gmra.mrb[0].mxu0 %v1888
      %v2232 = vpop.f32.mrb[0].mxu0
      %v2233 = vadd.f32 %v1913, %v2232
      %v2234 = vpop.f32.mrb[0].mxu0
      %2235 = vdwg.mxu0
      %v2236 = vmax.f32 %v2078, 0.0
      %v2237 = vmax.f32 %v2083, 0.0
      %v2238 = vmax.f32 %v2088, 0.0
      %v2239 = vmax.f32 %v2093, 0.0
      %v2240 = vmax.f32 %v2098, 0.0
      %v2241 = vmax.f32 %v2103, 0.0
      %v2242 = vmax.f32 %v2108, 0.0
      %v2243 = vmax.f32 %v2113, 0.0
      %v2244 = vmax.f32 %v2118, 0.0
      %v2245 = vmax.f32 %v2123, 0.0
      %v2246 = vmax.f32 %v2128, 0.0
      %v2247 = vmax.f32 %v2133, 0.0
      %v2248 = vmax.f32 %v2138, 0.0
      %v2249 = vmax.f32 %v2143, 0.0
      %v2250 = vmax.f32 %v2148, 0.0
      %v2251 = vmax.f32 %v2153, 0.0
      %v2252 = vmax.f32 %v2158, 0.0
      %v2253 = vmax.f32 %v2163, 0.0
      %v2254 = vmax.f32 %v2168, 0.0
      %v2255 = vmax.f32 %v2173, 0.0
      %v2256 = vmax.f32 %v2178, 0.0
      %v2257 = vmax.f32 %v2183, 0.0
      %v2258 = vmax.f32 %v2188, 0.0
      %v2259 = vmax.f32 %v2193, 0.0
      %v2260 = vmax.f32 %v2198, 0.0
      %v2261 = vmax.f32 %v2203, 0.0
      %v2262 = vmax.f32 %v2208, 0.0
      %v2263 = vmax.f32 %v2213, 0.0
      %v2264 = vmax.f32 %v2218, 0.0
      %v2265 = vmax.f32 %v2223, 0.0
      %v2266 = vmax.f32 %v2228, 0.0
      %v2267 = vmax.f32 %v2233, 0.0
      %2268 = vst.msk [vmem:[%s313 + $0x1] sm:$0xff] %vm225, %v2236
      %2269 = vst.msk [vmem:[%s313 + $0x9] sm:$0xff] %vm225, %v2237
      %2270 = vst.msk [vmem:[%s313 + $0x19] sm:$0xff] %vm225, %v2238
      %2271 = vst.msk [vmem:[%s313 + $0x21] sm:$0xff] %vm225, %v2239
      %2272 = vst.msk [vmem:[%s313 + $0x31] sm:$0xff] %vm225, %v2240
      %2273 = vst.msk [vmem:[%s313 + $0x39] sm:$0xff] %vm225, %v2241
      %2274 = vst.msk [vmem:[%s313 + $0x49] sm:$0xff] %vm225, %v2242
      %2275 = vst.msk [vmem:[%s313 + $0x51] sm:$0xff] %vm225, %v2243
      %2276 = vst.msk [vmem:[%s313 + $0x61] sm:$0xff] %vm225, %v2244
      %2277 = vst.msk [vmem:[%s313 + $0x69] sm:$0xff] %vm225, %v2245
      %2278 = vst.msk [vmem:[%s313 + $0x79] sm:$0xff] %vm225, %v2246
      %2279 = vst.msk [vmem:[%s313 + $0x81] sm:$0xff] %vm225, %v2247
      %2280 = vst.msk [vmem:[%s313 + $0x91] sm:$0xff] %vm225, %v2248
      %2281 = vst.msk [vmem:[%s313 + $0x99] sm:$0xff] %vm225, %v2249
      %2282 = vst.msk [vmem:[%s313 + $0xa9] sm:$0xff] %vm225, %v2250
      %2283 = vst.msk [vmem:[%s313 + $0xb1] sm:$0xff] %vm225, %v2251
      %2284 = vst.msk [vmem:[%s313 + $0xc1] sm:$0xff] %vm225, %v2252
      %2285 = vst.msk [vmem:[%s313 + $0xc9] sm:$0xff] %vm225, %v2253
      %2286 = vst.msk [vmem:[%s313 + $0xd9] sm:$0xff] %vm225, %v2254
      %2287 = vst.msk [vmem:[%s313 + $0xe1] sm:$0xff] %vm225, %v2255
      %2288 = vst.msk [vmem:[%s313 + $0xf1] sm:$0xff] %vm225, %v2256
      %2289 = vst.msk [vmem:[%s313 + $0xf9] sm:$0xff] %vm225, %v2257
      %2290 = vst.msk [vmem:[%s313 + $0x109] sm:$0xff] %vm225, %v2258
      %2291 = vst.msk [vmem:[%s313 + $0x111] sm:$0xff] %vm225, %v2259
      %2292 = vst.msk [vmem:[%s313 + $0x121] sm:$0xff] %vm225, %v2260
      %2293 = vst.msk [vmem:[%s313 + $0x129] sm:$0xff] %vm225, %v2261
      %2294 = vst.msk [vmem:[%s313 + $0x139] sm:$0xff] %vm225, %v2262
      %2295 = vst.msk [vmem:[%s313 + $0x141] sm:$0xff] %vm225, %v2263
      %2296 = vst.msk [vmem:[%s313 + $0x151] sm:$0xff] %vm225, %v2264
      %2297 = vst.msk [vmem:[%s313 + $0x159] sm:$0xff] %vm225, %v2265
      %2298 = vst.msk [vmem:[%s313 + $0x169] sm:$0xff] %vm225, %v2266
      %2299 = vst.msk [vmem:[%s313 + $0x171] sm:$0xff] %vm225, %v2267
      %v2300 = vld [vmem:[#allocation2] sm:$0xff]
      %v2301 = vld [vmem:[#allocation2 + $0x8] sm:$0xff]
      %v2302 = vld [vmem:[#allocation2 + $0x18] sm:$0xff]
      %v2303 = vld [vmem:[#allocation2 + $0x20] sm:$0xff]
      %v2304 = vld [vmem:[#allocation2 + $0x30] sm:$0xff]
      %v2305 = vld [vmem:[#allocation2 + $0x38] sm:$0xff]
      %v2306 = vld [vmem:[#allocation2 + $0x48] sm:$0xff]
      %v2307 = vld [vmem:[#allocation2 + $0x50] sm:$0xff]
      %v2308 = vld [vmem:[#allocation2 + $0x60] sm:$0xff]
      %v2309 = vld [vmem:[#allocation2 + $0x68] sm:$0xff]
      %v2310 = vld [vmem:[#allocation2 + $0x78] sm:$0xff]
      %v2311 = vld [vmem:[#allocation2 + $0x80] sm:$0xff]
      %v2312 = vld [vmem:[#allocation2 + $0x90] sm:$0xff]
      %v2313 = vld [vmem:[#allocation2 + $0x98] sm:$0xff]
      %v2314 = vld [vmem:[#allocation2 + $0xa8] sm:$0xff]
      %v2315 = vld [vmem:[#allocation2 + $0xb0] sm:$0xff]
      %v2316 = vld [vmem:[#allocation2 + $0xc0] sm:$0xff]
      %v2317 = vld [vmem:[#allocation2 + $0xc8] sm:$0xff]
      %v2318 = vld [vmem:[#allocation2 + $0xd8] sm:$0xff]
      %v2319 = vld [vmem:[#allocation2 + $0xe0] sm:$0xff]
      %v2320 = vld [vmem:[#allocation2 + $0xf0] sm:$0xff]
      %v2321 = vld [vmem:[#allocation2 + $0xf8] sm:$0xff]
      %v2322 = vld [vmem:[#allocation2 + $0x108] sm:$0xff]
      %v2323 = vld [vmem:[#allocation2 + $0x110] sm:$0xff]
      %v2324 = vld [vmem:[#allocation2 + $0x120] sm:$0xff]
      %v2325 = vld [vmem:[#allocation2 + $0x128] sm:$0xff]
      %v2326 = vld [vmem:[#allocation2 + $0x138] sm:$0xff]
      %v2327 = vld [vmem:[#allocation2 + $0x140] sm:$0xff]
      %v2328 = vld [vmem:[#allocation2 + $0x150] sm:$0xff]
      %v2329 = vld [vmem:[#allocation2 + $0x158] sm:$0xff]
      %v2330 = vld [vmem:[#allocation2 + $0x168] sm:$0xff]
      %v2331 = vld [vmem:[#allocation2 + $0x170] sm:$0xff]
      %2332 = vst.msk [vmem:[#allocation3] sm:$0xff] %vm225, %v2300
      %2333 = vst.msk [vmem:[#allocation3 + $0x10] sm:$0xff] %vm225, %v2301
      %2334 = vst.msk [vmem:[#allocation3 + $0x20] sm:$0xff] %vm225, %v2302
      %2335 = vst.msk [vmem:[#allocation3 + $0x30] sm:$0xff] %vm225, %v2303
      %2336 = vst.msk [vmem:[#allocation3 + $0x40] sm:$0xff] %vm225, %v2304
      %2337 = vst.msk [vmem:[#allocation3 + $0x50] sm:$0xff] %vm225, %v2305
      %2338 = vst.msk [vmem:[#allocation3 + $0x60] sm:$0xff] %vm225, %v2306
      %2339 = vst.msk [vmem:[#allocation3 + $0x70] sm:$0xff] %vm225, %v2307
      %2340 = vst.msk [vmem:[#allocation3 + $0x80] sm:$0xff] %vm225, %v2308
      %2341 = vst.msk [vmem:[#allocation3 + $0x90] sm:$0xff] %vm225, %v2309
      %2342 = vst.msk [vmem:[#allocation3 + $0xa0] sm:$0xff] %vm225, %v2310
      %2343 = vst.msk [vmem:[#allocation3 + $0xb0] sm:$0xff] %vm225, %v2311
      %2344 = vst.msk [vmem:[#allocation3 + $0xc0] sm:$0xff] %vm225, %v2312
      %2345 = vst.msk [vmem:[#allocation3 + $0xd0] sm:$0xff] %vm225, %v2313
      %2346 = vst.msk [vmem:[#allocation3 + $0xe0] sm:$0xff] %vm225, %v2314
      %2347 = vst.msk [vmem:[#allocation3 + $0xf0] sm:$0xff] %vm225, %v2315
      %2348 = vst.msk [vmem:[#allocation3 + $0x100] sm:$0xff] %vm225, %v2316
      %2349 = vst.msk [vmem:[#allocation3 + $0x110] sm:$0xff] %vm225, %v2317
      %2350 = vst.msk [vmem:[#allocation3 + $0x120] sm:$0xff] %vm225, %v2318
      %2351 = vst.msk [vmem:[#allocation3 + $0x130] sm:$0xff] %vm225, %v2319
      %2352 = vst.msk [vmem:[#allocation3 + $0x140] sm:$0xff] %vm225, %v2320
      %2353 = vst.msk [vmem:[#allocation3 + $0x150] sm:$0xff] %vm225, %v2321
      %2354 = vst.msk [vmem:[#allocation3 + $0x160] sm:$0xff] %vm225, %v2322
      %2355 = vst.msk [vmem:[#allocation3 + $0x170] sm:$0xff] %vm225, %v2323
      %2356 = vst.msk [vmem:[#allocation3 + $0x180] sm:$0xff] %vm225, %v2324
      %2357 = vst.msk [vmem:[#allocation3 + $0x190] sm:$0xff] %vm225, %v2325
      %2358 = vst.msk [vmem:[#allocation3 + $0x1a0] sm:$0xff] %vm225, %v2326
      %2359 = vst.msk [vmem:[#allocation3 + $0x1b0] sm:$0xff] %vm225, %v2327
      %2360 = vst.msk [vmem:[#allocation3 + $0x1c0] sm:$0xff] %vm225, %v2328
      %2361 = vst.msk [vmem:[#allocation3 + $0x1d0] sm:$0xff] %vm225, %v2329
      %2362 = vst.msk [vmem:[#allocation3 + $0x1e0] sm:$0xff] %vm225, %v2330
      %2363 = vst.msk [vmem:[#allocation3 + $0x1f0] sm:$0xff] %vm225, %v2331
      %v2364 = vld [vmem:[#allocation2 + $0x1] sm:$0xff]
      %v2365 = vld [vmem:[#allocation2 + $0x9] sm:$0xff]
      %v2366 = vld [vmem:[#allocation2 + $0x19] sm:$0xff]
      %v2367 = vld [vmem:[#allocation2 + $0x21] sm:$0xff]
      %v2368 = vld [vmem:[#allocation2 + $0x31] sm:$0xff]
      %v2369 = vld [vmem:[#allocation2 + $0x39] sm:$0xff]
      %v2370 = vld [vmem:[#allocation2 + $0x49] sm:$0xff]
      %v2371 = vld [vmem:[#allocation2 + $0x51] sm:$0xff]
      %v2372 = vld [vmem:[#allocation2 + $0x61] sm:$0xff]
      %v2373 = vld [vmem:[#allocation2 + $0x69] sm:$0xff]
      %v2374 = vld [vmem:[#allocation2 + $0x79] sm:$0xff]
      %v2375 = vld [vmem:[#allocation2 + $0x81] sm:$0xff]
      %v2376 = vld [vmem:[#allocation2 + $0x91] sm:$0xff]
      %v2377 = vld [vmem:[#allocation2 + $0x99] sm:$0xff]
      %v2378 = vld [vmem:[#allocation2 + $0xa9] sm:$0xff]
      %v2379 = vld [vmem:[#allocation2 + $0xb1] sm:$0xff]
      %v2380 = vld [vmem:[#allocation2 + $0xc1] sm:$0xff]
      %v2381 = vld [vmem:[#allocation2 + $0xc9] sm:$0xff]
      %v2382 = vld [vmem:[#allocation2 + $0xd9] sm:$0xff]
      %v2383 = vld [vmem:[#allocation2 + $0xe1] sm:$0xff]
      %v2384 = vld [vmem:[#allocation2 + $0xf1] sm:$0xff]
      %v2385 = vld [vmem:[#allocation2 + $0xf9] sm:$0xff]
      %v2386 = vld [vmem:[#allocation2 + $0x109] sm:$0xff]
      %v2387 = vld [vmem:[#allocation2 + $0x111] sm:$0xff]
      %v2388 = vld [vmem:[#allocation2 + $0x121] sm:$0xff]
      %v2389 = vld [vmem:[#allocation2 + $0x129] sm:$0xff]
      %v2390 = vld [vmem:[#allocation2 + $0x139] sm:$0xff]
      %v2391 = vld [vmem:[#allocation2 + $0x141] sm:$0xff]
      %v2392 = vld [vmem:[#allocation2 + $0x151] sm:$0xff]
      %v2393 = vld [vmem:[#allocation2 + $0x159] sm:$0xff]
      %v2394 = vld [vmem:[#allocation2 + $0x169] sm:$0xff]
      %v2395 = vld [vmem:[#allocation2 + $0x171] sm:$0xff]
      %2428 = vrot.lane.b32.xlu0 %v2364, 16
      %v2429 = vpop.permute.xlu0 %2428
      %2430 = vrot.lane.b32.xlu0 %v2365, 16
      %v2431 = vpop.permute.xlu0 %2430
      %2432 = vrot.lane.b32.xlu0 %v2366, 16
      %v2433 = vpop.permute.xlu0 %2432
      %2434 = vrot.lane.b32.xlu0 %v2367, 16
      %v2435 = vpop.permute.xlu0 %2434
      %2436 = vrot.lane.b32.xlu0 %v2368, 16
      %v2437 = vpop.permute.xlu0 %2436
      %2438 = vrot.lane.b32.xlu0 %v2369, 16
      %v2439 = vpop.permute.xlu0 %2438
      %2440 = vrot.lane.b32.xlu0 %v2370, 16
      %v2441 = vpop.permute.xlu0 %2440
      %2442 = vrot.lane.b32.xlu0 %v2371, 16
      %v2443 = vpop.permute.xlu0 %2442
      %2444 = vrot.lane.b32.xlu0 %v2372, 16
      %v2445 = vpop.permute.xlu0 %2444
      %2446 = vrot.lane.b32.xlu0 %v2373, 16
      %v2447 = vpop.permute.xlu0 %2446
      %2448 = vrot.lane.b32.xlu0 %v2374, 16
      %v2449 = vpop.permute.xlu0 %2448
      %2450 = vrot.lane.b32.xlu0 %v2375, 16
      %v2451 = vpop.permute.xlu0 %2450
      %2452 = vrot.lane.b32.xlu0 %v2376, 16
      %v2453 = vpop.permute.xlu0 %2452
      %2454 = vrot.lane.b32.xlu0 %v2377, 16
      %v2455 = vpop.permute.xlu0 %2454
      %2456 = vrot.lane.b32.xlu0 %v2378, 16
      %v2457 = vpop.permute.xlu0 %2456
      %2458 = vrot.lane.b32.xlu0 %v2379, 16
      %v2459 = vpop.permute.xlu0 %2458
      %2460 = vrot.lane.b32.xlu0 %v2380, 16
      %v2461 = vpop.permute.xlu0 %2460
      %2462 = vrot.lane.b32.xlu0 %v2381, 16
      %v2463 = vpop.permute.xlu0 %2462
      %2464 = vrot.lane.b32.xlu0 %v2382, 16
      %v2465 = vpop.permute.xlu0 %2464
      %2466 = vrot.lane.b32.xlu0 %v2383, 16
      %v2467 = vpop.permute.xlu0 %2466
      %2468 = vrot.lane.b32.xlu0 %v2384, 16
      %v2469 = vpop.permute.xlu0 %2468
      %2470 = vrot.lane.b32.xlu0 %v2385, 16
      %v2471 = vpop.permute.xlu0 %2470
      %2472 = vrot.lane.b32.xlu0 %v2386, 16
      %v2473 = vpop.permute.xlu0 %2472
      %2474 = vrot.lane.b32.xlu0 %v2387, 16
      %v2475 = vpop.permute.xlu0 %2474
      %2476 = vrot.lane.b32.xlu0 %v2388, 16
      %v2477 = vpop.permute.xlu0 %2476
      %2478 = vrot.lane.b32.xlu0 %v2389, 16
      %v2479 = vpop.permute.xlu0 %2478
      %2480 = vrot.lane.b32.xlu0 %v2390, 16
      %v2481 = vpop.permute.xlu0 %2480
      %2482 = vrot.lane.b32.xlu0 %v2391, 16
      %v2483 = vpop.permute.xlu0 %2482
      %2484 = vrot.lane.b32.xlu0 %v2392, 16
      %v2485 = vpop.permute.xlu0 %2484
      %2486 = vrot.lane.b32.xlu0 %v2393, 16
      %v2487 = vpop.permute.xlu0 %2486
      %2488 = vrot.lane.b32.xlu0 %v2394, 16
      %v2489 = vpop.permute.xlu0 %2488
      %2490 = vrot.lane.b32.xlu0 %v2395, 16
      %v2491 = vpop.permute.xlu0 %2490
      %2524 = vst.msk [vmem:[#allocation3] sm:$0xff] %vm570, %v2429
      %2525 = vst.msk [vmem:[#allocation3 + $0x10] sm:$0xff] %vm570, %v2431
      %2526 = vst.msk [vmem:[#allocation3 + $0x20] sm:$0xff] %vm570, %v2433
      %2527 = vst.msk [vmem:[#allocation3 + $0x30] sm:$0xff] %vm570, %v2435
      %2528 = vst.msk [vmem:[#allocation3 + $0x40] sm:$0xff] %vm570, %v2437
      %2529 = vst.msk [vmem:[#allocation3 + $0x50] sm:$0xff] %vm570, %v2439
      %2530 = vst.msk [vmem:[#allocation3 + $0x60] sm:$0xff] %vm570, %v2441
      %2531 = vst.msk [vmem:[#allocation3 + $0x70] sm:$0xff] %vm570, %v2443
      %2532 = vst.msk [vmem:[#allocation3 + $0x80] sm:$0xff] %vm570, %v2445
      %2533 = vst.msk [vmem:[#allocation3 + $0x90] sm:$0xff] %vm570, %v2447
      %2534 = vst.msk [vmem:[#allocation3 + $0xa0] sm:$0xff] %vm570, %v2449
      %2535 = vst.msk [vmem:[#allocation3 + $0xb0] sm:$0xff] %vm570, %v2451
      %2536 = vst.msk [vmem:[#allocation3 + $0xc0] sm:$0xff] %vm570, %v2453
      %2537 = vst.msk [vmem:[#allocation3 + $0xd0] sm:$0xff] %vm570, %v2455
      %2538 = vst.msk [vmem:[#allocation3 + $0xe0] sm:$0xff] %vm570, %v2457
      %2539 = vst.msk [vmem:[#allocation3 + $0xf0] sm:$0xff] %vm570, %v2459
      %2540 = vst.msk [vmem:[#allocation3 + $0x100] sm:$0xff] %vm570, %v2461
      %2541 = vst.msk [vmem:[#allocation3 + $0x110] sm:$0xff] %vm570, %v2463
      %2542 = vst.msk [vmem:[#allocation3 + $0x120] sm:$0xff] %vm570, %v2465
      %2543 = vst.msk [vmem:[#allocation3 + $0x130] sm:$0xff] %vm570, %v2467
      %2544 = vst.msk [vmem:[#allocation3 + $0x140] sm:$0xff] %vm570, %v2469
      %2545 = vst.msk [vmem:[#allocation3 + $0x150] sm:$0xff] %vm570, %v2471
      %2546 = vst.msk [vmem:[#allocation3 + $0x160] sm:$0xff] %vm570, %v2473
      %2547 = vst.msk [vmem:[#allocation3 + $0x170] sm:$0xff] %vm570, %v2475
      %2548 = vst.msk [vmem:[#allocation3 + $0x180] sm:$0xff] %vm570, %v2477
      %2549 = vst.msk [vmem:[#allocation3 + $0x190] sm:$0xff] %vm570, %v2479
      %2550 = vst.msk [vmem:[#allocation3 + $0x1a0] sm:$0xff] %vm570, %v2481
      %2551 = vst.msk [vmem:[#allocation3 + $0x1b0] sm:$0xff] %vm570, %v2483
      %2552 = vst.msk [vmem:[#allocation3 + $0x1c0] sm:$0xff] %vm570, %v2485
      %2553 = vst.msk [vmem:[#allocation3 + $0x1d0] sm:$0xff] %vm570, %v2487
      %2554 = vst.msk [vmem:[#allocation3 + $0x1e0] sm:$0xff] %vm570, %v2489
      %2555 = vst.msk [vmem:[#allocation3 + $0x1f0] sm:$0xff] %vm570, %v2491
      %v2556 = vld [vmem:[#allocation2 + $0x2] sm:$0xff]
      %v2557 = vld [vmem:[#allocation2 + $0xa] sm:$0xff]
      %v2558 = vld [vmem:[#allocation2 + $0x1a] sm:$0xff]
      %v2559 = vld [vmem:[#allocation2 + $0x22] sm:$0xff]
      %v2560 = vld [vmem:[#allocation2 + $0x32] sm:$0xff]
      %v2561 = vld [vmem:[#allocation2 + $0x3a] sm:$0xff]
      %v2562 = vld [vmem:[#allocation2 + $0x4a] sm:$0xff]
      %v2563 = vld [vmem:[#allocation2 + $0x52] sm:$0xff]
      %v2564 = vld [vmem:[#allocation2 + $0x62] sm:$0xff]
      %v2565 = vld [vmem:[#allocation2 + $0x6a] sm:$0xff]
      %v2566 = vld [vmem:[#allocation2 + $0x7a] sm:$0xff]
      %v2567 = vld [vmem:[#allocation2 + $0x82] sm:$0xff]
      %v2568 = vld [vmem:[#allocation2 + $0x92] sm:$0xff]
      %v2569 = vld [vmem:[#allocation2 + $0x9a] sm:$0xff]
      %v2570 = vld [vmem:[#allocation2 + $0xaa] sm:$0xff]
      %v2571 = vld [vmem:[#allocation2 + $0xb2] sm:$0xff]
      %v2572 = vld [vmem:[#allocation2 + $0xc2] sm:$0xff]
      %v2573 = vld [vmem:[#allocation2 + $0xca] sm:$0xff]
      %v2574 = vld [vmem:[#allocation2 + $0xda] sm:$0xff]
      %v2575 = vld [vmem:[#allocation2 + $0xe2] sm:$0xff]
      %v2576 = vld [vmem:[#allocation2 + $0xf2] sm:$0xff]
      %v2577 = vld [vmem:[#allocation2 + $0xfa] sm:$0xff]
      %v2578 = vld [vmem:[#allocation2 + $0x10a] sm:$0xff]
      %v2579 = vld [vmem:[#allocation2 + $0x112] sm:$0xff]
      %v2580 = vld [vmem:[#allocation2 + $0x122] sm:$0xff]
      %v2581 = vld [vmem:[#allocation2 + $0x12a] sm:$0xff]
      %v2582 = vld [vmem:[#allocation2 + $0x13a] sm:$0xff]
      %v2583 = vld [vmem:[#allocation2 + $0x142] sm:$0xff]
      %v2584 = vld [vmem:[#allocation2 + $0x152] sm:$0xff]
      %v2585 = vld [vmem:[#allocation2 + $0x15a] sm:$0xff]
      %v2586 = vld [vmem:[#allocation2 + $0x16a] sm:$0xff]
      %v2587 = vld [vmem:[#allocation2 + $0x172] sm:$0xff]
      %2620 = vrot.lane.b32.xlu0 %v2556, 32
      %v2621 = vpop.permute.xlu0 %2620
      %2622 = vrot.lane.b32.xlu0 %v2557, 32
      %v2623 = vpop.permute.xlu0 %2622
      %2624 = vrot.lane.b32.xlu0 %v2558, 32
      %v2625 = vpop.permute.xlu0 %2624
      %2626 = vrot.lane.b32.xlu0 %v2559, 32
      %v2627 = vpop.permute.xlu0 %2626
      %2628 = vrot.lane.b32.xlu0 %v2560, 32
      %v2629 = vpop.permute.xlu0 %2628
      %2630 = vrot.lane.b32.xlu0 %v2561, 32
      %v2631 = vpop.permute.xlu0 %2630
      %2632 = vrot.lane.b32.xlu0 %v2562, 32
      %v2633 = vpop.permute.xlu0 %2632
      %2634 = vrot.lane.b32.xlu0 %v2563, 32
      %v2635 = vpop.permute.xlu0 %2634
      %2636 = vrot.lane.b32.xlu0 %v2564, 32
      %v2637 = vpop.permute.xlu0 %2636
      %2638 = vrot.lane.b32.xlu0 %v2565, 32
      %v2639 = vpop.permute.xlu0 %2638
      %2640 = vrot.lane.b32.xlu0 %v2566, 32
      %v2641 = vpop.permute.xlu0 %2640
      %2642 = vrot.lane.b32.xlu0 %v2567, 32
      %v2643 = vpop.permute.xlu0 %2642
      %2644 = vrot.lane.b32.xlu0 %v2568, 32
      %v2645 = vpop.permute.xlu0 %2644
      %2646 = vrot.lane.b32.xlu0 %v2569, 32
      %v2647 = vpop.permute.xlu0 %2646
      %2648 = vrot.lane.b32.xlu0 %v2570, 32
      %v2649 = vpop.permute.xlu0 %2648
      %2650 = vrot.lane.b32.xlu0 %v2571, 32
      %v2651 = vpop.permute.xlu0 %2650
      %2652 = vrot.lane.b32.xlu0 %v2572, 32
      %v2653 = vpop.permute.xlu0 %2652
      %2654 = vrot.lane.b32.xlu0 %v2573, 32
      %v2655 = vpop.permute.xlu0 %2654
      %2656 = vrot.lane.b32.xlu0 %v2574, 32
      %v2657 = vpop.permute.xlu0 %2656
      %2658 = vrot.lane.b32.xlu0 %v2575, 32
      %v2659 = vpop.permute.xlu0 %2658
      %2660 = vrot.lane.b32.xlu0 %v2576, 32
      %v2661 = vpop.permute.xlu0 %2660
      %2662 = vrot.lane.b32.xlu0 %v2577, 32
      %v2663 = vpop.permute.xlu0 %2662
      %2664 = vrot.lane.b32.xlu0 %v2578, 32
      %v2665 = vpop.permute.xlu0 %2664
      %2666 = vrot.lane.b32.xlu0 %v2579, 32
      %v2667 = vpop.permute.xlu0 %2666
      %2668 = vrot.lane.b32.xlu0 %v2580, 32
      %v2669 = vpop.permute.xlu0 %2668
      %2670 = vrot.lane.b32.xlu0 %v2581, 32
      %v2671 = vpop.permute.xlu0 %2670
      %2672 = vrot.lane.b32.xlu0 %v2582, 32
      %v2673 = vpop.permute.xlu0 %2672
      %2674 = vrot.lane.b32.xlu0 %v2583, 32
      %v2675 = vpop.permute.xlu0 %2674
      %2676 = vrot.lane.b32.xlu0 %v2584, 32
      %v2677 = vpop.permute.xlu0 %2676
      %2678 = vrot.lane.b32.xlu0 %v2585, 32
      %v2679 = vpop.permute.xlu0 %2678
      %2680 = vrot.lane.b32.xlu0 %v2586, 32
      %v2681 = vpop.permute.xlu0 %2680
      %2682 = vrot.lane.b32.xlu0 %v2587, 32
      %v2683 = vpop.permute.xlu0 %2682
      %2716 = vst.msk [vmem:[#allocation3] sm:$0xff] %vm763, %v2621
      %2717 = vst.msk [vmem:[#allocation3 + $0x10] sm:$0xff] %vm763, %v2623
      %2718 = vst.msk [vmem:[#allocation3 + $0x20] sm:$0xff] %vm763, %v2625
      %2719 = vst.msk [vmem:[#allocation3 + $0x30] sm:$0xff] %vm763, %v2627
      %2720 = vst.msk [vmem:[#allocation3 + $0x40] sm:$0xff] %vm763, %v2629
      %2721 = vst.msk [vmem:[#allocation3 + $0x50] sm:$0xff] %vm763, %v2631
      %2722 = vst.msk [vmem:[#allocation3 + $0x60] sm:$0xff] %vm763, %v2633
      %2723 = vst.msk [vmem:[#allocation3 + $0x70] sm:$0xff] %vm763, %v2635
      %2724 = vst.msk [vmem:[#allocation3 + $0x80] sm:$0xff] %vm763, %v2637
      %2725 = vst.msk [vmem:[#allocation3 + $0x90] sm:$0xff] %vm763, %v2639
      %2726 = vst.msk [vmem:[#allocation3 + $0xa0] sm:$0xff] %vm763, %v2641
      %2727 = vst.msk [vmem:[#allocation3 + $0xb0] sm:$0xff] %vm763, %v2643
      %2728 = vst.msk [vmem:[#allocation3 + $0xc0] sm:$0xff] %vm763, %v2645
      %2729 = vst.msk [vmem:[#allocation3 + $0xd0] sm:$0xff] %vm763, %v2647
      %2730 = vst.msk [vmem:[#allocation3 + $0xe0] sm:$0xff] %vm763, %v2649
      %2731 = vst.msk [vmem:[#allocation3 + $0xf0] sm:$0xff] %vm763, %v2651
      %2732 = vst.msk [vmem:[#allocation3 + $0x100] sm:$0xff] %vm763, %v2653
      %2733 = vst.msk [vmem:[#allocation3 + $0x110] sm:$0xff] %vm763, %v2655
      %2734 = vst.msk [vmem:[#allocation3 + $0x120] sm:$0xff] %vm763, %v2657
      %2735 = vst.msk [vmem:[#allocation3 + $0x130] sm:$0xff] %vm763, %v2659
      %2736 = vst.msk [vmem:[#allocation3 + $0x140] sm:$0xff] %vm763, %v2661
      %2737 = vst.msk [vmem:[#allocation3 + $0x150] sm:$0xff] %vm763, %v2663
      %2738 = vst.msk [vmem:[#allocation3 + $0x160] sm:$0xff] %vm763, %v2665
      %2739 = vst.msk [vmem:[#allocation3 + $0x170] sm:$0xff] %vm763, %v2667
      %2740 = vst.msk [vmem:[#allocation3 + $0x180] sm:$0xff] %vm763, %v2669
      %2741 = vst.msk [vmem:[#allocation3 + $0x190] sm:$0xff] %vm763, %v2671
      %2742 = vst.msk [vmem:[#allocation3 + $0x1a0] sm:$0xff] %vm763, %v2673
      %2743 = vst.msk [vmem:[#allocation3 + $0x1b0] sm:$0xff] %vm763, %v2675
      %2744 = vst.msk [vmem:[#allocation3 + $0x1c0] sm:$0xff] %vm763, %v2677
      %2745 = vst.msk [vmem:[#allocation3 + $0x1d0] sm:$0xff] %vm763, %v2679
      %2746 = vst.msk [vmem:[#allocation3 + $0x1e0] sm:$0xff] %vm763, %v2681
      %2747 = vst.msk [vmem:[#allocation3 + $0x1f0] sm:$0xff] %vm763, %v2683
      %v2748 = vld [vmem:[%s313] sm:$0xff]
      %v2749 = vld [vmem:[%s313 + $0x8] sm:$0xff]
      %v2750 = vld [vmem:[%s313 + $0x18] sm:$0xff]
      %v2751 = vld [vmem:[%s313 + $0x20] sm:$0xff]
      %v2752 = vld [vmem:[%s313 + $0x30] sm:$0xff]
      %v2753 = vld [vmem:[%s313 + $0x38] sm:$0xff]
      %v2754 = vld [vmem:[%s313 + $0x48] sm:$0xff]
      %v2755 = vld [vmem:[%s313 + $0x50] sm:$0xff]
      %v2756 = vld [vmem:[%s313 + $0x60] sm:$0xff]
      %v2757 = vld [vmem:[%s313 + $0x68] sm:$0xff]
      %v2758 = vld [vmem:[%s313 + $0x78] sm:$0xff]
      %v2759 = vld [vmem:[%s313 + $0x80] sm:$0xff]
      %v2760 = vld [vmem:[%s313 + $0x90] sm:$0xff]
      %v2761 = vld [vmem:[%s313 + $0x98] sm:$0xff]
      %v2762 = vld [vmem:[%s313 + $0xa8] sm:$0xff]
      %v2763 = vld [vmem:[%s313 + $0xb0] sm:$0xff]
      %v2764 = vld [vmem:[%s313 + $0xc0] sm:$0xff]
      %v2765 = vld [vmem:[%s313 + $0xc8] sm:$0xff]
      %v2766 = vld [vmem:[%s313 + $0xd8] sm:$0xff]
      %v2767 = vld [vmem:[%s313 + $0xe0] sm:$0xff]
      %v2768 = vld [vmem:[%s313 + $0xf0] sm:$0xff]
      %v2769 = vld [vmem:[%s313 + $0xf8] sm:$0xff]
      %v2770 = vld [vmem:[%s313 + $0x108] sm:$0xff]
      %v2771 = vld [vmem:[%s313 + $0x110] sm:$0xff]
      %v2772 = vld [vmem:[%s313 + $0x120] sm:$0xff]
      %v2773 = vld [vmem:[%s313 + $0x128] sm:$0xff]
      %v2774 = vld [vmem:[%s313 + $0x138] sm:$0xff]
      %v2775 = vld [vmem:[%s313 + $0x140] sm:$0xff]
      %v2776 = vld [vmem:[%s313 + $0x150] sm:$0xff]
      %v2777 = vld [vmem:[%s313 + $0x158] sm:$0xff]
      %v2778 = vld [vmem:[%s313 + $0x168] sm:$0xff]
      %v2779 = vld [vmem:[%s313 + $0x170] sm:$0xff]
      %2812 = vrot.lane.b32.xlu0 %v2748, 48
      %v2813 = vpop.permute.xlu0 %2812
      %2814 = vrot.lane.b32.xlu0 %v2749, 48
      %v2815 = vpop.permute.xlu0 %2814
      %2816 = vrot.lane.b32.xlu0 %v2750, 48
      %v2817 = vpop.permute.xlu0 %2816
      %2818 = vrot.lane.b32.xlu0 %v2751, 48
      %v2819 = vpop.permute.xlu0 %2818
      %2820 = vrot.lane.b32.xlu0 %v2752, 48
      %v2821 = vpop.permute.xlu0 %2820
      %2822 = vrot.lane.b32.xlu0 %v2753, 48
      %v2823 = vpop.permute.xlu0 %2822
      %2824 = vrot.lane.b32.xlu0 %v2754, 48
      %v2825 = vpop.permute.xlu0 %2824
      %2826 = vrot.lane.b32.xlu0 %v2755, 48
      %v2827 = vpop.permute.xlu0 %2826
      %2828 = vrot.lane.b32.xlu0 %v2756, 48
      %v2829 = vpop.permute.xlu0 %2828
      %2830 = vrot.lane.b32.xlu0 %v2757, 48
      %v2831 = vpop.permute.xlu0 %2830
      %2832 = vrot.lane.b32.xlu0 %v2758, 48
      %v2833 = vpop.permute.xlu0 %2832
      %2834 = vrot.lane.b32.xlu0 %v2759, 48
      %v2835 = vpop.permute.xlu0 %2834
      %2836 = vrot.lane.b32.xlu0 %v2760, 48
      %v2837 = vpop.permute.xlu0 %2836
      %2838 = vrot.lane.b32.xlu0 %v2761, 48
      %v2839 = vpop.permute.xlu0 %2838
      %2840 = vrot.lane.b32.xlu0 %v2762, 48
      %v2841 = vpop.permute.xlu0 %2840
      %2842 = vrot.lane.b32.xlu0 %v2763, 48
      %v2843 = vpop.permute.xlu0 %2842
      %2844 = vrot.lane.b32.xlu0 %v2764, 48
      %v2845 = vpop.permute.xlu0 %2844
      %2846 = vrot.lane.b32.xlu0 %v2765, 48
      %v2847 = vpop.permute.xlu0 %2846
      %2848 = vrot.lane.b32.xlu0 %v2766, 48
      %v2849 = vpop.permute.xlu0 %2848
      %2850 = vrot.lane.b32.xlu0 %v2767, 48
      %v2851 = vpop.permute.xlu0 %2850
      %2852 = vrot.lane.b32.xlu0 %v2768, 48
      %v2853 = vpop.permute.xlu0 %2852
      %2854 = vrot.lane.b32.xlu0 %v2769, 48
      %v2855 = vpop.permute.xlu0 %2854
      %2856 = vrot.lane.b32.xlu0 %v2770, 48
      %v2857 = vpop.permute.xlu0 %2856
      %2858 = vrot.lane.b32.xlu0 %v2771, 48
      %v2859 = vpop.permute.xlu0 %2858
      %2860 = vrot.lane.b32.xlu0 %v2772, 48
      %v2861 = vpop.permute.xlu0 %2860
      %2862 = vrot.lane.b32.xlu0 %v2773, 48
      %v2863 = vpop.permute.xlu0 %2862
      %2864 = vrot.lane.b32.xlu0 %v2774, 48
      %v2865 = vpop.permute.xlu0 %2864
      %2866 = vrot.lane.b32.xlu0 %v2775, 48
      %v2867 = vpop.permute.xlu0 %2866
      %2868 = vrot.lane.b32.xlu0 %v2776, 48
      %v2869 = vpop.permute.xlu0 %2868
      %2870 = vrot.lane.b32.xlu0 %v2777, 48
      %v2871 = vpop.permute.xlu0 %2870
      %2872 = vrot.lane.b32.xlu0 %v2778, 48
      %v2873 = vpop.permute.xlu0 %2872
      %2874 = vrot.lane.b32.xlu0 %v2779, 48
      %v2875 = vpop.permute.xlu0 %2874
      %2908 = vst.msk [vmem:[#allocation3] sm:$0xff] %vm956, %v2813
      %2909 = vst.msk [vmem:[#allocation3 + $0x10] sm:$0xff] %vm956, %v2815
      %2910 = vst.msk [vmem:[#allocation3 + $0x20] sm:$0xff] %vm956, %v2817
      %2911 = vst.msk [vmem:[#allocation3 + $0x30] sm:$0xff] %vm956, %v2819
      %2912 = vst.msk [vmem:[#allocation3 + $0x40] sm:$0xff] %vm956, %v2821
      %2913 = vst.msk [vmem:[#allocation3 + $0x50] sm:$0xff] %vm956, %v2823
      %2914 = vst.msk [vmem:[#allocation3 + $0x60] sm:$0xff] %vm956, %v2825
      %2915 = vst.msk [vmem:[#allocation3 + $0x70] sm:$0xff] %vm956, %v2827
      %2916 = vst.msk [vmem:[#allocation3 + $0x80] sm:$0xff] %vm956, %v2829
      %2917 = vst.msk [vmem:[#allocation3 + $0x90] sm:$0xff] %vm956, %v2831
      %2918 = vst.msk [vmem:[#allocation3 + $0xa0] sm:$0xff] %vm956, %v2833
      %2919 = vst.msk [vmem:[#allocation3 + $0xb0] sm:$0xff] %vm956, %v2835
      %2920 = vst.msk [vmem:[#allocation3 + $0xc0] sm:$0xff] %vm956, %v2837
      %2921 = vst.msk [vmem:[#allocation3 + $0xd0] sm:$0xff] %vm956, %v2839
      %2922 = vst.msk [vmem:[#allocation3 + $0xe0] sm:$0xff] %vm956, %v2841
      %2923 = vst.msk [vmem:[#allocation3 + $0xf0] sm:$0xff] %vm956, %v2843
      %2924 = vst.msk [vmem:[#allocation3 + $0x100] sm:$0xff] %vm956, %v2845
      %2925 = vst.msk [vmem:[#allocation3 + $0x110] sm:$0xff] %vm956, %v2847
      %2926 = vst.msk [vmem:[#allocation3 + $0x120] sm:$0xff] %vm956, %v2849
      %2927 = vst.msk [vmem:[#allocation3 + $0x130] sm:$0xff] %vm956, %v2851
      %2928 = vst.msk [vmem:[#allocation3 + $0x140] sm:$0xff] %vm956, %v2853
      %2929 = vst.msk [vmem:[#allocation3 + $0x150] sm:$0xff] %vm956, %v2855
      %2930 = vst.msk [vmem:[#allocation3 + $0x160] sm:$0xff] %vm956, %v2857
      %2931 = vst.msk [vmem:[#allocation3 + $0x170] sm:$0xff] %vm956, %v2859
      %2932 = vst.msk [vmem:[#allocation3 + $0x180] sm:$0xff] %vm956, %v2861
      %2933 = vst.msk [vmem:[#allocation3 + $0x190] sm:$0xff] %vm956, %v2863
      %2934 = vst.msk [vmem:[#allocation3 + $0x1a0] sm:$0xff] %vm956, %v2865
      %2935 = vst.msk [vmem:[#allocation3 + $0x1b0] sm:$0xff] %vm956, %v2867
      %2936 = vst.msk [vmem:[#allocation3 + $0x1c0] sm:$0xff] %vm956, %v2869
      %2937 = vst.msk [vmem:[#allocation3 + $0x1d0] sm:$0xff] %vm956, %v2871
      %2938 = vst.msk [vmem:[#allocation3 + $0x1e0] sm:$0xff] %vm956, %v2873
      %2939 = vst.msk [vmem:[#allocation3 + $0x1f0] sm:$0xff] %vm956, %v2875
      %v2940 = vld [vmem:[%s313 + $0x1] sm:$0xff]
      %v2941 = vld [vmem:[%s313 + $0x9] sm:$0xff]
      %v2942 = vld [vmem:[%s313 + $0x19] sm:$0xff]
      %v2943 = vld [vmem:[%s313 + $0x21] sm:$0xff]
      %v2944 = vld [vmem:[%s313 + $0x31] sm:$0xff]
      %v2945 = vld [vmem:[%s313 + $0x39] sm:$0xff]
      %v2946 = vld [vmem:[%s313 + $0x49] sm:$0xff]
      %v2947 = vld [vmem:[%s313 + $0x51] sm:$0xff]
      %v2948 = vld [vmem:[%s313 + $0x61] sm:$0xff]
      %v2949 = vld [vmem:[%s313 + $0x69] sm:$0xff]
      %v2950 = vld [vmem:[%s313 + $0x79] sm:$0xff]
      %v2951 = vld [vmem:[%s313 + $0x81] sm:$0xff]
      %v2952 = vld [vmem:[%s313 + $0x91] sm:$0xff]
      %v2953 = vld [vmem:[%s313 + $0x99] sm:$0xff]
      %v2954 = vld [vmem:[%s313 + $0xa9] sm:$0xff]
      %v2955 = vld [vmem:[%s313 + $0xb1] sm:$0xff]
      %v2956 = vld [vmem:[%s313 + $0xc1] sm:$0xff]
      %v2957 = vld [vmem:[%s313 + $0xc9] sm:$0xff]
      %v2958 = vld [vmem:[%s313 + $0xd9] sm:$0xff]
      %v2959 = vld [vmem:[%s313 + $0xe1] sm:$0xff]
      %v2960 = vld [vmem:[%s313 + $0xf1] sm:$0xff]
      %v2961 = vld [vmem:[%s313 + $0xf9] sm:$0xff]
      %v2962 = vld [vmem:[%s313 + $0x109] sm:$0xff]
      %v2963 = vld [vmem:[%s313 + $0x111] sm:$0xff]
      %v2964 = vld [vmem:[%s313 + $0x121] sm:$0xff]
      %v2965 = vld [vmem:[%s313 + $0x129] sm:$0xff]
      %v2966 = vld [vmem:[%s313 + $0x139] sm:$0xff]
      %v2967 = vld [vmem:[%s313 + $0x141] sm:$0xff]
      %v2968 = vld [vmem:[%s313 + $0x151] sm:$0xff]
      %v2969 = vld [vmem:[%s313 + $0x159] sm:$0xff]
      %v2970 = vld [vmem:[%s313 + $0x169] sm:$0xff]
      %v2971 = vld [vmem:[%s313 + $0x171] sm:$0xff]
      %3004 = vrot.lane.b32.xlu0 %v2940, 64
      %v3005 = vpop.permute.xlu0 %3004
      %3006 = vrot.lane.b32.xlu0 %v2941, 64
      %v3007 = vpop.permute.xlu0 %3006
      %3008 = vrot.lane.b32.xlu0 %v2942, 64
      %v3009 = vpop.permute.xlu0 %3008
      %3010 = vrot.lane.b32.xlu0 %v2943, 64
      %v3011 = vpop.permute.xlu0 %3010
      %3012 = vrot.lane.b32.xlu0 %v2944, 64
      %v3013 = vpop.permute.xlu0 %3012
      %3014 = vrot.lane.b32.xlu0 %v2945, 64
      %v3015 = vpop.permute.xlu0 %3014
      %3016 = vrot.lane.b32.xlu0 %v2946, 64
      %v3017 = vpop.permute.xlu0 %3016
      %3018 = vrot.lane.b32.xlu0 %v2947, 64
      %v3019 = vpop.permute.xlu0 %3018
      %3020 = vrot.lane.b32.xlu0 %v2948, 64
      %v3021 = vpop.permute.xlu0 %3020
      %3022 = vrot.lane.b32.xlu0 %v2949, 64
      %v3023 = vpop.permute.xlu0 %3022
      %3024 = vrot.lane.b32.xlu0 %v2950, 64
      %v3025 = vpop.permute.xlu0 %3024
      %3026 = vrot.lane.b32.xlu0 %v2951, 64
      %v3027 = vpop.permute.xlu0 %3026
      %3028 = vrot.lane.b32.xlu0 %v2952, 64
      %v3029 = vpop.permute.xlu0 %3028
      %3030 = vrot.lane.b32.xlu0 %v2953, 64
      %v3031 = vpop.permute.xlu0 %3030
      %3032 = vrot.lane.b32.xlu0 %v2954, 64
      %v3033 = vpop.permute.xlu0 %3032
      %3034 = vrot.lane.b32.xlu0 %v2955, 64
      %v3035 = vpop.permute.xlu0 %3034
      %3036 = vrot.lane.b32.xlu0 %v2956, 64
      %v3037 = vpop.permute.xlu0 %3036
      %3038 = vrot.lane.b32.xlu0 %v2957, 64
      %v3039 = vpop.permute.xlu0 %3038
      %3040 = vrot.lane.b32.xlu0 %v2958, 64
      %v3041 = vpop.permute.xlu0 %3040
      %3042 = vrot.lane.b32.xlu0 %v2959, 64
      %v3043 = vpop.permute.xlu0 %3042
      %3044 = vrot.lane.b32.xlu0 %v2960, 64
      %v3045 = vpop.permute.xlu0 %3044
      %3046 = vrot.lane.b32.xlu0 %v2961, 64
      %v3047 = vpop.permute.xlu0 %3046
      %3048 = vrot.lane.b32.xlu0 %v2962, 64
      %v3049 = vpop.permute.xlu0 %3048
      %3050 = vrot.lane.b32.xlu0 %v2963, 64
      %v3051 = vpop.permute.xlu0 %3050
      %3052 = vrot.lane.b32.xlu0 %v2964, 64
      %v3053 = vpop.permute.xlu0 %3052
      %3054 = vrot.lane.b32.xlu0 %v2965, 64
      %v3055 = vpop.permute.xlu0 %3054
      %3056 = vrot.lane.b32.xlu0 %v2966, 64
      %v3057 = vpop.permute.xlu0 %3056
      %3058 = vrot.lane.b32.xlu0 %v2967, 64
      %v3059 = vpop.permute.xlu0 %3058
      %3060 = vrot.lane.b32.xlu0 %v2968, 64
      %v3061 = vpop.permute.xlu0 %3060
      %3062 = vrot.lane.b32.xlu0 %v2969, 64
      %v3063 = vpop.permute.xlu0 %3062
      %3064 = vrot.lane.b32.xlu0 %v2970, 64
      %v3065 = vpop.permute.xlu0 %3064
      %3066 = vrot.lane.b32.xlu0 %v2971, 64
      %v3067 = vpop.permute.xlu0 %3066
      %3100 = vst.msk [vmem:[#allocation3] sm:$0xff] %vm1149, %v3005
      %3101 = vst.msk [vmem:[#allocation3 + $0x10] sm:$0xff] %vm1149, %v3007
      %3102 = vst.msk [vmem:[#allocation3 + $0x20] sm:$0xff] %vm1149, %v3009
      %3103 = vst.msk [vmem:[#allocation3 + $0x30] sm:$0xff] %vm1149, %v3011
      %3104 = vst.msk [vmem:[#allocation3 + $0x40] sm:$0xff] %vm1149, %v3013
      %3105 = vst.msk [vmem:[#allocation3 + $0x50] sm:$0xff] %vm1149, %v3015
      %3106 = vst.msk [vmem:[#allocation3 + $0x60] sm:$0xff] %vm1149, %v3017
      %3107 = vst.msk [vmem:[#allocation3 + $0x70] sm:$0xff] %vm1149, %v3019
      %3108 = vst.msk [vmem:[#allocation3 + $0x80] sm:$0xff] %vm1149, %v3021
      %3109 = vst.msk [vmem:[#allocation3 + $0x90] sm:$0xff] %vm1149, %v3023
      %3110 = vst.msk [vmem:[#allocation3 + $0xa0] sm:$0xff] %vm1149, %v3025
      %3111 = vst.msk [vmem:[#allocation3 + $0xb0] sm:$0xff] %vm1149, %v3027
      %3112 = vst.msk [vmem:[#allocation3 + $0xc0] sm:$0xff] %vm1149, %v3029
      %3113 = vst.msk [vmem:[#allocation3 + $0xd0] sm:$0xff] %vm1149, %v3031
      %3114 = vst.msk [vmem:[#allocation3 + $0xe0] sm:$0xff] %vm1149, %v3033
      %3115 = vst.msk [vmem:[#allocation3 + $0xf0] sm:$0xff] %vm1149, %v3035
      %3116 = vst.msk [vmem:[#allocation3 + $0x100] sm:$0xff] %vm1149, %v3037
      %3117 = vst.msk [vmem:[#allocation3 + $0x110] sm:$0xff] %vm1149, %v3039
      %3118 = vst.msk [vmem:[#allocation3 + $0x120] sm:$0xff] %vm1149, %v3041
      %3119 = vst.msk [vmem:[#allocation3 + $0x130] sm:$0xff] %vm1149, %v3043
      %3120 = vst.msk [vmem:[#allocation3 + $0x140] sm:$0xff] %vm1149, %v3045
      %3121 = vst.msk [vmem:[#allocation3 + $0x150] sm:$0xff] %vm1149, %v3047
      %3122 = vst.msk [vmem:[#allocation3 + $0x160] sm:$0xff] %vm1149, %v3049
      %3123 = vst.msk [vmem:[#allocation3 + $0x170] sm:$0xff] %vm1149, %v3051
      %3124 = vst.msk [vmem:[#allocation3 + $0x180] sm:$0xff] %vm1149, %v3053
      %3125 = vst.msk [vmem:[#allocation3 + $0x190] sm:$0xff] %vm1149, %v3055
      %3126 = vst.msk [vmem:[#allocation3 + $0x1a0] sm:$0xff] %vm1149, %v3057
      %3127 = vst.msk [vmem:[#allocation3 + $0x1b0] sm:$0xff] %vm1149, %v3059
      %3128 = vst.msk [vmem:[#allocation3 + $0x1c0] sm:$0xff] %vm1149, %v3061
      %3129 = vst.msk [vmem:[#allocation3 + $0x1d0] sm:$0xff] %vm1149, %v3063
      %3130 = vst.msk [vmem:[#allocation3 + $0x1e0] sm:$0xff] %vm1149, %v3065
      %3131 = vst.msk [vmem:[#allocation3 + $0x1f0] sm:$0xff] %vm1149, %v3067
      %v3132 = vld [vmem:[%s313 + $0x2] sm:$0xff]
      %v3133 = vld [vmem:[%s313 + $0xa] sm:$0xff]
      %v3134 = vld [vmem:[%s313 + $0x1a] sm:$0xff]
      %v3135 = vld [vmem:[%s313 + $0x22] sm:$0xff]
      %v3136 = vld [vmem:[%s313 + $0x32] sm:$0xff]
      %v3137 = vld [vmem:[%s313 + $0x3a] sm:$0xff]
      %v3138 = vld [vmem:[%s313 + $0x4a] sm:$0xff]
      %v3139 = vld [vmem:[%s313 + $0x52] sm:$0xff]
      %v3140 = vld [vmem:[%s313 + $0x62] sm:$0xff]
      %v3141 = vld [vmem:[%s313 + $0x6a] sm:$0xff]
      %v3142 = vld [vmem:[%s313 + $0x7a] sm:$0xff]
      %v3143 = vld [vmem:[%s313 + $0x82] sm:$0xff]
      %v3144 = vld [vmem:[%s313 + $0x92] sm:$0xff]
      %v3145 = vld [vmem:[%s313 + $0x9a] sm:$0xff]
      %v3146 = vld [vmem:[%s313 + $0xaa] sm:$0xff]
      %v3147 = vld [vmem:[%s313 + $0xb2] sm:$0xff]
      %v3148 = vld [vmem:[%s313 + $0xc2] sm:$0xff]
      %v3149 = vld [vmem:[%s313 + $0xca] sm:$0xff]
      %v3150 = vld [vmem:[%s313 + $0xda] sm:$0xff]
      %v3151 = vld [vmem:[%s313 + $0xe2] sm:$0xff]
      %v3152 = vld [vmem:[%s313 + $0xf2] sm:$0xff]
      %v3153 = vld [vmem:[%s313 + $0xfa] sm:$0xff]
      %v3154 = vld [vmem:[%s313 + $0x10a] sm:$0xff]
      %v3155 = vld [vmem:[%s313 + $0x112] sm:$0xff]
      %v3156 = vld [vmem:[%s313 + $0x122] sm:$0xff]
      %v3157 = vld [vmem:[%s313 + $0x12a] sm:$0xff]
      %v3158 = vld [vmem:[%s313 + $0x13a] sm:$0xff]
      %v3159 = vld [vmem:[%s313 + $0x142] sm:$0xff]
      %v3160 = vld [vmem:[%s313 + $0x152] sm:$0xff]
      %v3161 = vld [vmem:[%s313 + $0x15a] sm:$0xff]
      %v3162 = vld [vmem:[%s313 + $0x16a] sm:$0xff]
      %v3163 = vld [vmem:[%s313 + $0x172] sm:$0xff]
      %3196 = vrot.lane.b32.xlu0 %v3132, 80
      %v3197 = vpop.permute.xlu0 %3196
      %3198 = vrot.lane.b32.xlu0 %v3133, 80
      %v3199 = vpop.permute.xlu0 %3198
      %3200 = vrot.lane.b32.xlu0 %v3134, 80
      %v3201 = vpop.permute.xlu0 %3200
      %3202 = vrot.lane.b32.xlu0 %v3135, 80
      %v3203 = vpop.permute.xlu0 %3202
      %3204 = vrot.lane.b32.xlu0 %v3136, 80
      %v3205 = vpop.permute.xlu0 %3204
      %3206 = vrot.lane.b32.xlu0 %v3137, 80
      %v3207 = vpop.permute.xlu0 %3206
      %3208 = vrot.lane.b32.xlu0 %v3138, 80
      %v3209 = vpop.permute.xlu0 %3208
      %3210 = vrot.lane.b32.xlu0 %v3139, 80
      %v3211 = vpop.permute.xlu0 %3210
      %3212 = vrot.lane.b32.xlu0 %v3140, 80
      %v3213 = vpop.permute.xlu0 %3212
      %3214 = vrot.lane.b32.xlu0 %v3141, 80
      %v3215 = vpop.permute.xlu0 %3214
      %3216 = vrot.lane.b32.xlu0 %v3142, 80
      %v3217 = vpop.permute.xlu0 %3216
      %3218 = vrot.lane.b32.xlu0 %v3143, 80
      %v3219 = vpop.permute.xlu0 %3218
      %3220 = vrot.lane.b32.xlu0 %v3144, 80
      %v3221 = vpop.permute.xlu0 %3220
      %3222 = vrot.lane.b32.xlu0 %v3145, 80
      %v3223 = vpop.permute.xlu0 %3222
      %3224 = vrot.lane.b32.xlu0 %v3146, 80
      %v3225 = vpop.permute.xlu0 %3224
      %3226 = vrot.lane.b32.xlu0 %v3147, 80
      %v3227 = vpop.permute.xlu0 %3226
      %3228 = vrot.lane.b32.xlu0 %v3148, 80
      %v3229 = vpop.permute.xlu0 %3228
      %3230 = vrot.lane.b32.xlu0 %v3149, 80
      %v3231 = vpop.permute.xlu0 %3230
      %3232 = vrot.lane.b32.xlu0 %v3150, 80
      %v3233 = vpop.permute.xlu0 %3232
      %3234 = vrot.lane.b32.xlu0 %v3151, 80
      %v3235 = vpop.permute.xlu0 %3234
      %3236 = vrot.lane.b32.xlu0 %v3152, 80
      %v3237 = vpop.permute.xlu0 %3236
      %3238 = vrot.lane.b32.xlu0 %v3153, 80
      %v3239 = vpop.permute.xlu0 %3238
      %3240 = vrot.lane.b32.xlu0 %v3154, 80
      %v3241 = vpop.permute.xlu0 %3240
      %3242 = vrot.lane.b32.xlu0 %v3155, 80
      %v3243 = vpop.permute.xlu0 %3242
      %3244 = vrot.lane.b32.xlu0 %v3156, 80
      %v3245 = vpop.permute.xlu0 %3244
      %3246 = vrot.lane.b32.xlu0 %v3157, 80
      %v3247 = vpop.permute.xlu0 %3246
      %3248 = vrot.lane.b32.xlu0 %v3158, 80
      %v3249 = vpop.permute.xlu0 %3248
      %3250 = vrot.lane.b32.xlu0 %v3159, 80
      %v3251 = vpop.permute.xlu0 %3250
      %3252 = vrot.lane.b32.xlu0 %v3160, 80
      %v3253 = vpop.permute.xlu0 %3252
      %3254 = vrot.lane.b32.xlu0 %v3161, 80
      %v3255 = vpop.permute.xlu0 %3254
      %3256 = vrot.lane.b32.xlu0 %v3162, 80
      %v3257 = vpop.permute.xlu0 %3256
      %3258 = vrot.lane.b32.xlu0 %v3163, 80
      %v3259 = vpop.permute.xlu0 %3258
      %3292 = vst.msk [vmem:[#allocation3] sm:$0xff] %vm1342, %v3197
      %3293 = vst.msk [vmem:[#allocation3 + $0x10] sm:$0xff] %vm1342, %v3199
      %3294 = vst.msk [vmem:[#allocation3 + $0x20] sm:$0xff] %vm1342, %v3201
      %3295 = vst.msk [vmem:[#allocation3 + $0x30] sm:$0xff] %vm1342, %v3203
      %3296 = vst.msk [vmem:[#allocation3 + $0x40] sm:$0xff] %vm1342, %v3205
      %3297 = vst.msk [vmem:[#allocation3 + $0x50] sm:$0xff] %vm1342, %v3207
      %3298 = vst.msk [vmem:[#allocation3 + $0x60] sm:$0xff] %vm1342, %v3209
      %3299 = vst.msk [vmem:[#allocation3 + $0x70] sm:$0xff] %vm1342, %v3211
      %3300 = vst.msk [vmem:[#allocation3 + $0x80] sm:$0xff] %vm1342, %v3213
      %3301 = vst.msk [vmem:[#allocation3 + $0x90] sm:$0xff] %vm1342, %v3215
      %3302 = vst.msk [vmem:[#allocation3 + $0xa0] sm:$0xff] %vm1342, %v3217
      %3303 = vst.msk [vmem:[#allocation3 + $0xb0] sm:$0xff] %vm1342, %v3219
      %3304 = vst.msk [vmem:[#allocation3 + $0xc0] sm:$0xff] %vm1342, %v3221
      %3305 = vst.msk [vmem:[#allocation3 + $0xd0] sm:$0xff] %vm1342, %v3223
      %3306 = vst.msk [vmem:[#allocation3 + $0xe0] sm:$0xff] %vm1342, %v3225
      %3307 = vst.msk [vmem:[#allocation3 + $0xf0] sm:$0xff] %vm1342, %v3227
      %3308 = vst.msk [vmem:[#allocation3 + $0x100] sm:$0xff] %vm1342, %v3229
      %3309 = vst.msk [vmem:[#allocation3 + $0x110] sm:$0xff] %vm1342, %v3231
      %3310 = vst.msk [vmem:[#allocation3 + $0x120] sm:$0xff] %vm1342, %v3233
      %3311 = vst.msk [vmem:[#allocation3 + $0x130] sm:$0xff] %vm1342, %v3235
      %3312 = vst.msk [vmem:[#allocation3 + $0x140] sm:$0xff] %vm1342, %v3237
      %3313 = vst.msk [vmem:[#allocation3 + $0x150] sm:$0xff] %vm1342, %v3239
      %3314 = vst.msk [vmem:[#allocation3 + $0x160] sm:$0xff] %vm1342, %v3241
      %3315 = vst.msk [vmem:[#allocation3 + $0x170] sm:$0xff] %vm1342, %v3243
      %3316 = vst.msk [vmem:[#allocation3 + $0x180] sm:$0xff] %vm1342, %v3245
      %3317 = vst.msk [vmem:[#allocation3 + $0x190] sm:$0xff] %vm1342, %v3247
      %3318 = vst.msk [vmem:[#allocation3 + $0x1a0] sm:$0xff] %vm1342, %v3249
      %3319 = vst.msk [vmem:[#allocation3 + $0x1b0] sm:$0xff] %vm1342, %v3251
      %3320 = vst.msk [vmem:[#allocation3 + $0x1c0] sm:$0xff] %vm1342, %v3253
      %3321 = vst.msk [vmem:[#allocation3 + $0x1d0] sm:$0xff] %vm1342, %v3255
      %3322 = vst.msk [vmem:[#allocation3 + $0x1e0] sm:$0xff] %vm1342, %v3257
      %3323 = vst.msk [vmem:[#allocation3 + $0x1f0] sm:$0xff] %vm1342, %v3259
      %v3324 = vld [vmem:[%s1375] sm:$0xff]
      %v3325 = vld [vmem:[%s1375 + $0x8] sm:$0xff]
      %v3326 = vld [vmem:[%s1375 + $0x18] sm:$0xff]
      %v3327 = vld [vmem:[%s1375 + $0x20] sm:$0xff]
      %v3328 = vld [vmem:[%s1375 + $0x30] sm:$0xff]
      %v3329 = vld [vmem:[%s1375 + $0x38] sm:$0xff]
      %v3330 = vld [vmem:[%s1375 + $0x48] sm:$0xff]
      %v3331 = vld [vmem:[%s1375 + $0x50] sm:$0xff]
      %v3332 = vld [vmem:[%s1375 + $0x60] sm:$0xff]
      %v3333 = vld [vmem:[%s1375 + $0x68] sm:$0xff]
      %v3334 = vld [vmem:[%s1375 + $0x78] sm:$0xff]
      %v3335 = vld [vmem:[%s1375 + $0x80] sm:$0xff]
      %v3336 = vld [vmem:[%s1375 + $0x90] sm:$0xff]
      %v3337 = vld [vmem:[%s1375 + $0x98] sm:$0xff]
      %v3338 = vld [vmem:[%s1375 + $0xa8] sm:$0xff]
      %v3339 = vld [vmem:[%s1375 + $0xb0] sm:$0xff]
      %v3340 = vld [vmem:[%s1375 + $0xc0] sm:$0xff]
      %v3341 = vld [vmem:[%s1375 + $0xc8] sm:$0xff]
      %v3342 = vld [vmem:[%s1375 + $0xd8] sm:$0xff]
      %v3343 = vld [vmem:[%s1375 + $0xe0] sm:$0xff]
      %v3344 = vld [vmem:[%s1375 + $0xf0] sm:$0xff]
      %v3345 = vld [vmem:[%s1375 + $0xf8] sm:$0xff]
      %v3346 = vld [vmem:[%s1375 + $0x108] sm:$0xff]
      %v3347 = vld [vmem:[%s1375 + $0x110] sm:$0xff]
      %v3348 = vld [vmem:[%s1375 + $0x120] sm:$0xff]
      %v3349 = vld [vmem:[%s1375 + $0x128] sm:$0xff]
      %v3350 = vld [vmem:[%s1375 + $0x138] sm:$0xff]
      %v3351 = vld [vmem:[%s1375 + $0x140] sm:$0xff]
      %v3352 = vld [vmem:[%s1375 + $0x150] sm:$0xff]
      %v3353 = vld [vmem:[%s1375 + $0x158] sm:$0xff]
      %v3354 = vld [vmem:[%s1375 + $0x168] sm:$0xff]
      %v3355 = vld [vmem:[%s1375 + $0x170] sm:$0xff]
      %3388 = vrot.lane.b32.xlu0 %v3324, 96
      %v3389 = vpop.permute.xlu0 %3388
      %3390 = vrot.lane.b32.xlu0 %v3325, 96
      %v3391 = vpop.permute.xlu0 %3390
      %3392 = vrot.lane.b32.xlu0 %v3326, 96
      %v3393 = vpop.permute.xlu0 %3392
      %3394 = vrot.lane.b32.xlu0 %v3327, 96
      %v3395 = vpop.permute.xlu0 %3394
      %3396 = vrot.lane.b32.xlu0 %v3328, 96
      %v3397 = vpop.permute.xlu0 %3396
      %3398 = vrot.lane.b32.xlu0 %v3329, 96
      %v3399 = vpop.permute.xlu0 %3398
      %3400 = vrot.lane.b32.xlu0 %v3330, 96
      %v3401 = vpop.permute.xlu0 %3400
      %3402 = vrot.lane.b32.xlu0 %v3331, 96
      %v3403 = vpop.permute.xlu0 %3402
      %3404 = vrot.lane.b32.xlu0 %v3332, 96
      %v3405 = vpop.permute.xlu0 %3404
      %3406 = vrot.lane.b32.xlu0 %v3333, 96
      %v3407 = vpop.permute.xlu0 %3406
      %3408 = vrot.lane.b32.xlu0 %v3334, 96
      %v3409 = vpop.permute.xlu0 %3408
      %3410 = vrot.lane.b32.xlu0 %v3335, 96
      %v3411 = vpop.permute.xlu0 %3410
      %3412 = vrot.lane.b32.xlu0 %v3336, 96
      %v3413 = vpop.permute.xlu0 %3412
      %3414 = vrot.lane.b32.xlu0 %v3337, 96
      %v3415 = vpop.permute.xlu0 %3414
      %3416 = vrot.lane.b32.xlu0 %v3338, 96
      %v3417 = vpop.permute.xlu0 %3416
      %3418 = vrot.lane.b32.xlu0 %v3339, 96
      %v3419 = vpop.permute.xlu0 %3418
      %3420 = vrot.lane.b32.xlu0 %v3340, 96
      %v3421 = vpop.permute.xlu0 %3420
      %3422 = vrot.lane.b32.xlu0 %v3341, 96
      %v3423 = vpop.permute.xlu0 %3422
      %3424 = vrot.lane.b32.xlu0 %v3342, 96
      %v3425 = vpop.permute.xlu0 %3424
      %3426 = vrot.lane.b32.xlu0 %v3343, 96
      %v3427 = vpop.permute.xlu0 %3426
      %3428 = vrot.lane.b32.xlu0 %v3344, 96
      %v3429 = vpop.permute.xlu0 %3428
      %3430 = vrot.lane.b32.xlu0 %v3345, 96
      %v3431 = vpop.permute.xlu0 %3430
      %3432 = vrot.lane.b32.xlu0 %v3346, 96
      %v3433 = vpop.permute.xlu0 %3432
      %3434 = vrot.lane.b32.xlu0 %v3347, 96
      %v3435 = vpop.permute.xlu0 %3434
      %3436 = vrot.lane.b32.xlu0 %v3348, 96
      %v3437 = vpop.permute.xlu0 %3436
      %3438 = vrot.lane.b32.xlu0 %v3349, 96
      %v3439 = vpop.permute.xlu0 %3438
      %3440 = vrot.lane.b32.xlu0 %v3350, 96
      %v3441 = vpop.permute.xlu0 %3440
      %3442 = vrot.lane.b32.xlu0 %v3351, 96
      %v3443 = vpop.permute.xlu0 %3442
      %3444 = vrot.lane.b32.xlu0 %v3352, 96
      %v3445 = vpop.permute.xlu0 %3444
      %3446 = vrot.lane.b32.xlu0 %v3353, 96
      %v3447 = vpop.permute.xlu0 %3446
      %3448 = vrot.lane.b32.xlu0 %v3354, 96
      %v3449 = vpop.permute.xlu0 %3448
      %3450 = vrot.lane.b32.xlu0 %v3355, 96
      %v3451 = vpop.permute.xlu0 %3450
      %3484 = vst.msk [vmem:[#allocation3] sm:$0xff] %vm1536, %v3389
      %3485 = vst.msk [vmem:[#allocation3 + $0x10] sm:$0xff] %vm1536, %v3391
      %3486 = vst.msk [vmem:[#allocation3 + $0x20] sm:$0xff] %vm1536, %v3393
      %3487 = vst.msk [vmem:[#allocation3 + $0x30] sm:$0xff] %vm1536, %v3395
      %3488 = vst.msk [vmem:[#allocation3 + $0x40] sm:$0xff] %vm1536, %v3397
      %3489 = vst.msk [vmem:[#allocation3 + $0x50] sm:$0xff] %vm1536, %v3399
      %3490 = vst.msk [vmem:[#allocation3 + $0x60] sm:$0xff] %vm1536, %v3401
      %3491 = vst.msk [vmem:[#allocation3 + $0x70] sm:$0xff] %vm1536, %v3403
      %3492 = vst.msk [vmem:[#allocation3 + $0x80] sm:$0xff] %vm1536, %v3405
      %3493 = vst.msk [vmem:[#allocation3 + $0x90] sm:$0xff] %vm1536, %v3407
      %3494 = vst.msk [vmem:[#allocation3 + $0xa0] sm:$0xff] %vm1536, %v3409
      %3495 = vst.msk [vmem:[#allocation3 + $0xb0] sm:$0xff] %vm1536, %v3411
      %3496 = vst.msk [vmem:[#allocation3 + $0xc0] sm:$0xff] %vm1536, %v3413
      %3497 = vst.msk [vmem:[#allocation3 + $0xd0] sm:$0xff] %vm1536, %v3415
      %3498 = vst.msk [vmem:[#allocation3 + $0xe0] sm:$0xff] %vm1536, %v3417
      %3499 = vst.msk [vmem:[#allocation3 + $0xf0] sm:$0xff] %vm1536, %v3419
      %3500 = vst.msk [vmem:[#allocation3 + $0x100] sm:$0xff] %vm1536, %v3421
      %3501 = vst.msk [vmem:[#allocation3 + $0x110] sm:$0xff] %vm1536, %v3423
      %3502 = vst.msk [vmem:[#allocation3 + $0x120] sm:$0xff] %vm1536, %v3425
      %3503 = vst.msk [vmem:[#allocation3 + $0x130] sm:$0xff] %vm1536, %v3427
      %3504 = vst.msk [vmem:[#allocation3 + $0x140] sm:$0xff] %vm1536, %v3429
      %3505 = vst.msk [vmem:[#allocation3 + $0x150] sm:$0xff] %vm1536, %v3431
      %3506 = vst.msk [vmem:[#allocation3 + $0x160] sm:$0xff] %vm1536, %v3433
      %3507 = vst.msk [vmem:[#allocation3 + $0x170] sm:$0xff] %vm1536, %v3435
      %3508 = vst.msk [vmem:[#allocation3 + $0x180] sm:$0xff] %vm1536, %v3437
      %3509 = vst.msk [vmem:[#allocation3 + $0x190] sm:$0xff] %vm1536, %v3439
      %3510 = vst.msk [vmem:[#allocation3 + $0x1a0] sm:$0xff] %vm1536, %v3441
      %3511 = vst.msk [vmem:[#allocation3 + $0x1b0] sm:$0xff] %vm1536, %v3443
      %3512 = vst.msk [vmem:[#allocation3 + $0x1c0] sm:$0xff] %vm1536, %v3445
      %3513 = vst.msk [vmem:[#allocation3 + $0x1d0] sm:$0xff] %vm1536, %v3447
      %3514 = vst.msk [vmem:[#allocation3 + $0x1e0] sm:$0xff] %vm1536, %v3449
      %3515 = vst.msk [vmem:[#allocation3 + $0x1f0] sm:$0xff] %vm1536, %v3451
      %v3516 = vld [vmem:[%s1375 + $0x1] sm:$0xff]
      %v3517 = vld [vmem:[%s1375 + $0x9] sm:$0xff]
      %v3518 = vld [vmem:[%s1375 + $0x19] sm:$0xff]
      %v3519 = vld [vmem:[%s1375 + $0x21] sm:$0xff]
      %v3520 = vld [vmem:[%s1375 + $0x31] sm:$0xff]
      %v3521 = vld [vmem:[%s1375 + $0x39] sm:$0xff]
      %v3522 = vld [vmem:[%s1375 + $0x49] sm:$0xff]
      %v3523 = vld [vmem:[%s1375 + $0x51] sm:$0xff]
      %v3524 = vld [vmem:[%s1375 + $0x61] sm:$0xff]
      %v3525 = vld [vmem:[%s1375 + $0x69] sm:$0xff]
      %v3526 = vld [vmem:[%s1375 + $0x79] sm:$0xff]
      %v3527 = vld [vmem:[%s1375 + $0x81] sm:$0xff]
      %v3528 = vld [vmem:[%s1375 + $0x91] sm:$0xff]
      %v3529 = vld [vmem:[%s1375 + $0x99] sm:$0xff]
      %v3530 = vld [vmem:[%s1375 + $0xa9] sm:$0xff]
      %v3531 = vld [vmem:[%s1375 + $0xb1] sm:$0xff]
      %v3532 = vld [vmem:[%s1375 + $0xc1] sm:$0xff]
      %v3533 = vld [vmem:[%s1375 + $0xc9] sm:$0xff]
      %v3534 = vld [vmem:[%s1375 + $0xd9] sm:$0xff]
      %v3535 = vld [vmem:[%s1375 + $0xe1] sm:$0xff]
      %v3536 = vld [vmem:[%s1375 + $0xf1] sm:$0xff]
      %v3537 = vld [vmem:[%s1375 + $0xf9] sm:$0xff]
      %v3538 = vld [vmem:[%s1375 + $0x109] sm:$0xff]
      %v3539 = vld [vmem:[%s1375 + $0x111] sm:$0xff]
      %v3540 = vld [vmem:[%s1375 + $0x121] sm:$0xff]
      %v3541 = vld [vmem:[%s1375 + $0x129] sm:$0xff]
      %v3542 = vld [vmem:[%s1375 + $0x139] sm:$0xff]
      %v3543 = vld [vmem:[%s1375 + $0x141] sm:$0xff]
      %v3544 = vld [vmem:[%s1375 + $0x151] sm:$0xff]
      %v3545 = vld [vmem:[%s1375 + $0x159] sm:$0xff]
      %v3546 = vld [vmem:[%s1375 + $0x169] sm:$0xff]
      %v3547 = vld [vmem:[%s1375 + $0x171] sm:$0xff]
      %3580 = vrot.lane.b32.xlu0 %v3516, 112
      %v3581 = vpop.permute.xlu0 %3580
      %3582 = vrot.lane.b32.xlu0 %v3517, 112
      %v3583 = vpop.permute.xlu0 %3582
      %3584 = vrot.lane.b32.xlu0 %v3518, 112
      %v3585 = vpop.permute.xlu0 %3584
      %3586 = vrot.lane.b32.xlu0 %v3519, 112
      %v3587 = vpop.permute.xlu0 %3586
      %3588 = vrot.lane.b32.xlu0 %v3520, 112
      %v3589 = vpop.permute.xlu0 %3588
      %3590 = vrot.lane.b32.xlu0 %v3521, 112
      %v3591 = vpop.permute.xlu0 %3590
      %3592 = vrot.lane.b32.xlu0 %v3522, 112
      %v3593 = vpop.permute.xlu0 %3592
      %3594 = vrot.lane.b32.xlu0 %v3523, 112
      %v3595 = vpop.permute.xlu0 %3594
      %3596 = vrot.lane.b32.xlu0 %v3524, 112
      %v3597 = vpop.permute.xlu0 %3596
      %3598 = vrot.lane.b32.xlu0 %v3525, 112
      %v3599 = vpop.permute.xlu0 %3598
      %3600 = vrot.lane.b32.xlu0 %v3526, 112
      %v3601 = vpop.permute.xlu0 %3600
      %3602 = vrot.lane.b32.xlu0 %v3527, 112
      %v3603 = vpop.permute.xlu0 %3602
      %3604 = vrot.lane.b32.xlu0 %v3528, 112
      %v3605 = vpop.permute.xlu0 %3604
      %3606 = vrot.lane.b32.xlu0 %v3529, 112
      %v3607 = vpop.permute.xlu0 %3606
      %3608 = vrot.lane.b32.xlu0 %v3530, 112
      %v3609 = vpop.permute.xlu0 %3608
      %3610 = vrot.lane.b32.xlu0 %v3531, 112
      %v3611 = vpop.permute.xlu0 %3610
      %3612 = vrot.lane.b32.xlu0 %v3532, 112
      %v3613 = vpop.permute.xlu0 %3612
      %3614 = vrot.lane.b32.xlu0 %v3533, 112
      %v3615 = vpop.permute.xlu0 %3614
      %3616 = vrot.lane.b32.xlu0 %v3534, 112
      %v3617 = vpop.permute.xlu0 %3616
      %3618 = vrot.lane.b32.xlu0 %v3535, 112
      %v3619 = vpop.permute.xlu0 %3618
      %3620 = vrot.lane.b32.xlu0 %v3536, 112
      %v3621 = vpop.permute.xlu0 %3620
      %3622 = vrot.lane.b32.xlu0 %v3537, 112
      %v3623 = vpop.permute.xlu0 %3622
      %3624 = vrot.lane.b32.xlu0 %v3538, 112
      %v3625 = vpop.permute.xlu0 %3624
      %3626 = vrot.lane.b32.xlu0 %v3539, 112
      %v3627 = vpop.permute.xlu0 %3626
      %3628 = vrot.lane.b32.xlu0 %v3540, 112
      %v3629 = vpop.permute.xlu0 %3628
      %3630 = vrot.lane.b32.xlu0 %v3541, 112
      %v3631 = vpop.permute.xlu0 %3630
      %3632 = vrot.lane.b32.xlu0 %v3542, 112
      %v3633 = vpop.permute.xlu0 %3632
      %3634 = vrot.lane.b32.xlu0 %v3543, 112
      %v3635 = vpop.permute.xlu0 %3634
      %3636 = vrot.lane.b32.xlu0 %v3544, 112
      %v3637 = vpop.permute.xlu0 %3636
      %3638 = vrot.lane.b32.xlu0 %v3545, 112
      %v3639 = vpop.permute.xlu0 %3638
      %3640 = vrot.lane.b32.xlu0 %v3546, 112
      %v3641 = vpop.permute.xlu0 %3640
      %3642 = vrot.lane.b32.xlu0 %v3547, 112
      %v3643 = vpop.permute.xlu0 %3642
      %3676 = vst.msk [vmem:[#allocation3] sm:$0xff] %vm1729, %v3581
      %3677 = vst.msk [vmem:[#allocation3 + $0x10] sm:$0xff] %vm1729, %v3583
      %3678 = vst.msk [vmem:[#allocation3 + $0x20] sm:$0xff] %vm1729, %v3585
      %3679 = vst.msk [vmem:[#allocation3 + $0x30] sm:$0xff] %vm1729, %v3587
      %3680 = vst.msk [vmem:[#allocation3 + $0x40] sm:$0xff] %vm1729, %v3589
      %3681 = vst.msk [vmem:[#allocation3 + $0x50] sm:$0xff] %vm1729, %v3591
      %3682 = vst.msk [vmem:[#allocation3 + $0x60] sm:$0xff] %vm1729, %v3593
      %3683 = vst.msk [vmem:[#allocation3 + $0x70] sm:$0xff] %vm1729, %v3595
      %3684 = vst.msk [vmem:[#allocation3 + $0x80] sm:$0xff] %vm1729, %v3597
      %3685 = vst.msk [vmem:[#allocation3 + $0x90] sm:$0xff] %vm1729, %v3599
      %3686 = vst.msk [vmem:[#allocation3 + $0xa0] sm:$0xff] %vm1729, %v3601
      %3687 = vst.msk [vmem:[#allocation3 + $0xb0] sm:$0xff] %vm1729, %v3603
      %3688 = vst.msk [vmem:[#allocation3 + $0xc0] sm:$0xff] %vm1729, %v3605
      %3689 = vst.msk [vmem:[#allocation3 + $0xd0] sm:$0xff] %vm1729, %v3607
      %3690 = vst.msk [vmem:[#allocation3 + $0xe0] sm:$0xff] %vm1729, %v3609
      %3691 = vst.msk [vmem:[#allocation3 + $0xf0] sm:$0xff] %vm1729, %v3611
      %3692 = vst.msk [vmem:[#allocation3 + $0x100] sm:$0xff] %vm1729, %v3613
      %3693 = vst.msk [vmem:[#allocation3 + $0x110] sm:$0xff] %vm1729, %v3615
      %3694 = vst.msk [vmem:[#allocation3 + $0x120] sm:$0xff] %vm1729, %v3617
      %3695 = vst.msk [vmem:[#allocation3 + $0x130] sm:$0xff] %vm1729, %v3619
      %3696 = vst.msk [vmem:[#allocation3 + $0x140] sm:$0xff] %vm1729, %v3621
      %3697 = vst.msk [vmem:[#allocation3 + $0x150] sm:$0xff] %vm1729, %v3623
      %3698 = vst.msk [vmem:[#allocation3 + $0x160] sm:$0xff] %vm1729, %v3625
      %3699 = vst.msk [vmem:[#allocation3 + $0x170] sm:$0xff] %vm1729, %v3627
      %3700 = vst.msk [vmem:[#allocation3 + $0x180] sm:$0xff] %vm1729, %v3629
      %3701 = vst.msk [vmem:[#allocation3 + $0x190] sm:$0xff] %vm1729, %v3631
      %3702 = vst.msk [vmem:[#allocation3 + $0x1a0] sm:$0xff] %vm1729, %v3633
      %3703 = vst.msk [vmem:[#allocation3 + $0x1b0] sm:$0xff] %vm1729, %v3635
      %3704 = vst.msk [vmem:[#allocation3 + $0x1c0] sm:$0xff] %vm1729, %v3637
      %3705 = vst.msk [vmem:[#allocation3 + $0x1d0] sm:$0xff] %vm1729, %v3639
      %3706 = vst.msk [vmem:[#allocation3 + $0x1e0] sm:$0xff] %vm1729, %v3641
      %3707 = vst.msk [vmem:[#allocation3 + $0x1f0] sm:$0xff] %vm1729, %v3643
      %v3708 = vld [vmem:[%s1375 + $0x2] sm:$0xff]
      %v3709 = vld [vmem:[%s1375 + $0xa] sm:$0xff]
      %v3710 = vld [vmem:[%s1375 + $0x1a] sm:$0xff]
      %v3711 = vld [vmem:[%s1375 + $0x22] sm:$0xff]
      %v3712 = vld [vmem:[%s1375 + $0x32] sm:$0xff]
      %v3713 = vld [vmem:[%s1375 + $0x3a] sm:$0xff]
      %v3714 = vld [vmem:[%s1375 + $0x4a] sm:$0xff]
      %v3715 = vld [vmem:[%s1375 + $0x52] sm:$0xff]
      %v3716 = vld [vmem:[%s1375 + $0x62] sm:$0xff]
      %v3717 = vld [vmem:[%s1375 + $0x6a] sm:$0xff]
      %v3718 = vld [vmem:[%s1375 + $0x7a] sm:$0xff]
      %v3719 = vld [vmem:[%s1375 + $0x82] sm:$0xff]
      %v3720 = vld [vmem:[%s1375 + $0x92] sm:$0xff]
      %v3721 = vld [vmem:[%s1375 + $0x9a] sm:$0xff]
      %v3722 = vld [vmem:[%s1375 + $0xaa] sm:$0xff]
      %v3723 = vld [vmem:[%s1375 + $0xb2] sm:$0xff]
      %v3724 = vld [vmem:[%s1375 + $0xc2] sm:$0xff]
      %v3725 = vld [vmem:[%s1375 + $0xca] sm:$0xff]
      %v3726 = vld [vmem:[%s1375 + $0xda] sm:$0xff]
      %v3727 = vld [vmem:[%s1375 + $0xe2] sm:$0xff]
      %v3728 = vld [vmem:[%s1375 + $0xf2] sm:$0xff]
      %v3729 = vld [vmem:[%s1375 + $0xfa] sm:$0xff]
      %v3730 = vld [vmem:[%s1375 + $0x10a] sm:$0xff]
      %v3731 = vld [vmem:[%s1375 + $0x112] sm:$0xff]
      %v3732 = vld [vmem:[%s1375 + $0x122] sm:$0xff]
      %v3733 = vld [vmem:[%s1375 + $0x12a] sm:$0xff]
      %v3734 = vld [vmem:[%s1375 + $0x13a] sm:$0xff]
      %v3735 = vld [vmem:[%s1375 + $0x142] sm:$0xff]
      %v3736 = vld [vmem:[%s1375 + $0x152] sm:$0xff]
      %v3737 = vld [vmem:[%s1375 + $0x15a] sm:$0xff]
      %v3738 = vld [vmem:[%s1375 + $0x16a] sm:$0xff]
      %v3739 = vld [vmem:[%s1375 + $0x172] sm:$0xff]
      %3740 = vst.msk [vmem:[#allocation3 + $0x8] sm:$0xff] %vm225, %v3708
      %3741 = vst.msk [vmem:[#allocation3 + $0x18] sm:$0xff] %vm225, %v3709
      %3742 = vst.msk [vmem:[#allocation3 + $0x28] sm:$0xff] %vm225, %v3710
      %3743 = vst.msk [vmem:[#allocation3 + $0x38] sm:$0xff] %vm225, %v3711
      %3744 = vst.msk [vmem:[#allocation3 + $0x48] sm:$0xff] %vm225, %v3712
      %3745 = vst.msk [vmem:[#allocation3 + $0x58] sm:$0xff] %vm225, %v3713
      %3746 = vst.msk [vmem:[#allocation3 + $0x68] sm:$0xff] %vm225, %v3714
      %3747 = vst.msk [vmem:[#allocation3 + $0x78] sm:$0xff] %vm225, %v3715
      %3748 = vst.msk [vmem:[#allocation3 + $0x88] sm:$0xff] %vm225, %v3716
      %3749 = vst.msk [vmem:[#allocation3 + $0x98] sm:$0xff] %vm225, %v3717
      %3750 = vst.msk [vmem:[#allocation3 + $0xa8] sm:$0xff] %vm225, %v3718
      %3751 = vst.msk [vmem:[#allocation3 + $0xb8] sm:$0xff] %vm225, %v3719
      %3752 = vst.msk [vmem:[#allocation3 + $0xc8] sm:$0xff] %vm225, %v3720
      %3753 = vst.msk [vmem:[#allocation3 + $0xd8] sm:$0xff] %vm225, %v3721
      %3754 = vst.msk [vmem:[#allocation3 + $0xe8] sm:$0xff] %vm225, %v3722
      %3755 = vst.msk [vmem:[#allocation3 + $0xf8] sm:$0xff] %vm225, %v3723
      %3756 = vst.msk [vmem:[#allocation3 + $0x108] sm:$0xff] %vm225, %v3724
      %3757 = vst.msk [vmem:[#allocation3 + $0x118] sm:$0xff] %vm225, %v3725
      %3758 = vst.msk [vmem:[#allocation3 + $0x128] sm:$0xff] %vm225, %v3726
      %3759 = vst.msk [vmem:[#allocation3 + $0x138] sm:$0xff] %vm225, %v3727
      %3760 = vst.msk [vmem:[#allocation3 + $0x148] sm:$0xff] %vm225, %v3728
      %3761 = vst.msk [vmem:[#allocation3 + $0x158] sm:$0xff] %vm225, %v3729
      %3762 = vst.msk [vmem:[#allocation3 + $0x168] sm:$0xff] %vm225, %v3730
      %3763 = vst.msk [vmem:[#allocation3 + $0x178] sm:$0xff] %vm225, %v3731
      %3764 = vst.msk [vmem:[#allocation3 + $0x188] sm:$0xff] %vm225, %v3732
      %3765 = vst.msk [vmem:[#allocation3 + $0x198] sm:$0xff] %vm225, %v3733
      %3766 = vst.msk [vmem:[#allocation3 + $0x1a8] sm:$0xff] %vm225, %v3734
      %3767 = vst.msk [vmem:[#allocation3 + $0x1b8] sm:$0xff] %vm225, %v3735
      %3768 = vst.msk [vmem:[#allocation3 + $0x1c8] sm:$0xff] %vm225, %v3736
      %3769 = vst.msk [vmem:[#allocation3 + $0x1d8] sm:$0xff] %vm225, %v3737
      %3770 = vst.msk [vmem:[#allocation3 + $0x1e8] sm:$0xff] %vm225, %v3738
      %3771 = vst.msk [vmem:[#allocation3 + $0x1f8] sm:$0xff] %vm225, %v3739
      %v3772 = vld [vmem:[#allocation3] sm:$0xff]
      %v3773 = vld [vmem:[#allocation3 + $0x8] sm:$0xff]
      %v3774 = vld [vmem:[#allocation3 + $0x10] sm:$0xff]
      %v3775 = vld [vmem:[#allocation3 + $0x18] sm:$0xff]
      %v3776 = vld [vmem:[#allocation3 + $0x20] sm:$0xff]
      %v3777 = vld [vmem:[#allocation3 + $0x28] sm:$0xff]
      %v3778 = vld [vmem:[#allocation3 + $0x30] sm:$0xff]
      %v3779 = vld [vmem:[#allocation3 + $0x38] sm:$0xff]
      %v3780 = vld [vmem:[#allocation3 + $0x40] sm:$0xff]
      %v3781 = vld [vmem:[#allocation3 + $0x48] sm:$0xff]
      %v3782 = vld [vmem:[#allocation3 + $0x50] sm:$0xff]
      %v3783 = vld [vmem:[#allocation3 + $0x58] sm:$0xff]
      %v3784 = vld [vmem:[#allocation3 + $0x60] sm:$0xff]
      %v3785 = vld [vmem:[#allocation3 + $0x68] sm:$0xff]
      %v3786 = vld [vmem:[#allocation3 + $0x70] sm:$0xff]
      %v3787 = vld [vmem:[#allocation3 + $0x78] sm:$0xff]
      %v3788 = vld [vmem:[#allocation3 + $0x80] sm:$0xff]
      %v3789 = vld [vmem:[#allocation3 + $0x88] sm:$0xff]
      %v3790 = vld [vmem:[#allocation3 + $0x90] sm:$0xff]
      %v3791 = vld [vmem:[#allocation3 + $0x98] sm:$0xff]
      %v3792 = vld [vmem:[#allocation3 + $0xa0] sm:$0xff]
      %v3793 = vld [vmem:[#allocation3 + $0xa8] sm:$0xff]
      %v3794 = vld [vmem:[#allocation3 + $0xb0] sm:$0xff]
      %v3795 = vld [vmem:[#allocation3 + $0xb8] sm:$0xff]
      %v3796 = vld [vmem:[#allocation3 + $0xc0] sm:$0xff]
      %v3797 = vld [vmem:[#allocation3 + $0xc8] sm:$0xff]
      %v3798 = vld [vmem:[#allocation3 + $0xd0] sm:$0xff]
      %v3799 = vld [vmem:[#allocation3 + $0xd8] sm:$0xff]
      %v3800 = vld [vmem:[#allocation3 + $0xe0] sm:$0xff]
      %v3801 = vld [vmem:[#allocation3 + $0xe8] sm:$0xff]
      %v3802 = vld [vmem:[#allocation3 + $0xf0] sm:$0xff]
      %v3803 = vld [vmem:[#allocation3 + $0xf8] sm:$0xff]
      %v3804 = vld [vmem:[#allocation3 + $0x100] sm:$0xff]
      %v3805 = vld [vmem:[#allocation3 + $0x108] sm:$0xff]
      %v3806 = vld [vmem:[#allocation3 + $0x110] sm:$0xff]
      %v3807 = vld [vmem:[#allocation3 + $0x118] sm:$0xff]
      %v3808 = vld [vmem:[#allocation3 + $0x120] sm:$0xff]
      %v3809 = vld [vmem:[#allocation3 + $0x128] sm:$0xff]
      %v3810 = vld [vmem:[#allocation3 + $0x130] sm:$0xff]
      %v3811 = vld [vmem:[#allocation3 + $0x138] sm:$0xff]
      %v3812 = vld [vmem:[#allocation3 + $0x140] sm:$0xff]
      %v3813 = vld [vmem:[#allocation3 + $0x148] sm:$0xff]
      %v3814 = vld [vmem:[#allocation3 + $0x150] sm:$0xff]
      %v3815 = vld [vmem:[#allocation3 + $0x158] sm:$0xff]
      %v3816 = vld [vmem:[#allocation3 + $0x160] sm:$0xff]
      %v3817 = vld [vmem:[#allocation3 + $0x168] sm:$0xff]
      %v3818 = vld [vmem:[#allocation3 + $0x170] sm:$0xff]
      %v3819 = vld [vmem:[#allocation3 + $0x178] sm:$0xff]
      %v3820 = vld [vmem:[#allocation3 + $0x180] sm:$0xff]
      %v3821 = vld [vmem:[#allocation3 + $0x188] sm:$0xff]
      %v3822 = vld [vmem:[#allocation3 + $0x190] sm:$0xff]
      %v3823 = vld [vmem:[#allocation3 + $0x198] sm:$0xff]
      %v3824 = vld [vmem:[#allocation3 + $0x1a0] sm:$0xff]
      %v3825 = vld [vmem:[#allocation3 + $0x1a8] sm:$0xff]
      %v3826 = vld [vmem:[#allocation3 + $0x1b0] sm:$0xff]
      %v3827 = vld [vmem:[#allocation3 + $0x1b8] sm:$0xff]
      %v3828 = vld [vmem:[#allocation3 + $0x1c0] sm:$0xff]
      %v3829 = vld [vmem:[#allocation3 + $0x1c8] sm:$0xff]
      %v3830 = vld [vmem:[#allocation3 + $0x1d0] sm:$0xff]
      %v3831 = vld [vmem:[#allocation3 + $0x1d8] sm:$0xff]
      %v3832 = vld [vmem:[#allocation3 + $0x1e0] sm:$0xff]
      %v3833 = vld [vmem:[#allocation3 + $0x1e8] sm:$0xff]
      %v3834 = vld [vmem:[#allocation3 + $0x1f0] sm:$0xff]
      %v3835 = vld [vmem:[#allocation3 + $0x1f8] sm:$0xff]
      %v3836 = vld [vmem:[%s3] sm:$0xff]
      %v3837 = vld [vmem:[%s3 + $0x8] sm:$0xff]
      %v3838 = vld [vmem:[%s3 + $0x10] sm:$0xff]
      %v3839 = vld [vmem:[%s3 + $0x18] sm:$0xff]
      %v3840 = vld [vmem:[%s3 + $0x20] sm:$0xff]
      %v3841 = vld [vmem:[%s3 + $0x28] sm:$0xff]
      %v3842 = vld [vmem:[%s3 + $0x30] sm:$0xff]
      %v3843 = vld [vmem:[%s3 + $0x38] sm:$0xff]
      %v3844 = vld [vmem:[%s3 + $0x40] sm:$0xff]
      %v3845 = vld [vmem:[%s3 + $0x48] sm:$0xff]
      %v3846 = vld [vmem:[%s3 + $0x50] sm:$0xff]
      %v3847 = vld [vmem:[%s3 + $0x58] sm:$0xff]
      %v3848 = vld [vmem:[%s3 + $0x60] sm:$0xff]
      %v3849 = vld [vmem:[%s3 + $0x68] sm:$0xff]
      %v3850 = vld [vmem:[%s3 + $0x70] sm:$0xff]
      %v3851 = vld [vmem:[%s3 + $0x78] sm:$0xff]
      %v3852 = vld [vmem:[%s3 + $0x80] sm:$0xff]
      %v3853 = vld [vmem:[%s3 + $0x88] sm:$0xff]
      %v3854 = vld [vmem:[%s4] sm:$0x1]
      %v3856 = vlaneseq
      %v3857 = vshrl.u32 %v3856, 7
      %v3858 = vsub.s32 0, %v3857
      %v3859 = vrot.slane %v3854, %v3858
      %v3862 = vsel %vm225, %v3773, 0
      %v3865 = vsel %vm225, %v3775, 0
      %v3868 = vsel %vm225, %v3777, 0
      %v3871 = vsel %vm225, %v3779, 0
      %v3874 = vsel %vm225, %v3781, 0
      %v3877 = vsel %vm225, %v3783, 0
      %v3880 = vsel %vm225, %v3785, 0
      %v3883 = vsel %vm225, %v3787, 0
      %v3886 = vsel %vm225, %v3789, 0
      %v3889 = vsel %vm225, %v3791, 0
      %v3892 = vsel %vm225, %v3793, 0
      %v3895 = vsel %vm225, %v3795, 0
      %v3898 = vsel %vm225, %v3797, 0
      %v3901 = vsel %vm225, %v3799, 0
      %v3904 = vsel %vm225, %v3801, 0
      %v3907 = vsel %vm225, %v3803, 0
      %v3910 = vsel %vm225, %v3805, 0
      %v3913 = vsel %vm225, %v3807, 0
      %v3916 = vsel %vm225, %v3809, 0
      %v3919 = vsel %vm225, %v3811, 0
      %v3922 = vsel %vm225, %v3813, 0
      %v3925 = vsel %vm225, %v3815, 0
      %v3928 = vsel %vm225, %v3817, 0
      %v3931 = vsel %vm225, %v3819, 0
      %v3934 = vsel %vm225, %v3821, 0
      %v3937 = vsel %vm225, %v3823, 0
      %v3940 = vsel %vm225, %v3825, 0
      %v3943 = vsel %vm225, %v3827, 0
      %v3946 = vsel %vm225, %v3829, 0
      %v3949 = vsel %vm225, %v3831, 0
      %v3952 = vsel %vm225, %v3833, 0
      %v3955 = vsel %vm225, %v3835, 0
      %3957 = vmatprep.subr.mxu0 0.0
      %3958 = vmatpush1.msra.mxu0 %v3836
      %3959 = vmatprep.subr.mxu0 0.0
      %3960 = vmatpush1.msra.mxu0 %v3837
      %3961 = vmatprep.subr.mxu0 0.0
      %3962 = vmatpush1.msra.mxu0 %v3838
      %3963 = vmatprep.subr.mxu0 0.0
      %3964 = vmatpush1.msra.mxu0 %v3839
      %3965 = vmatprep.subr.mxu0 0.0
      %3966 = vmatpush1.msra.mxu0 %v3840
      %3967 = vmatprep.subr.mxu0 0.0
      %3968 = vmatpush1.msra.mxu0 %v3841
      %3969 = vmatprep.subr.mxu0 0.0
      %3970 = vmatpush1.msra.mxu0 %v3842
      %3971 = vmatprep.subr.mxu0 0.0
      %3972 = vmatpush1.msra.mxu0 %v3843
      %3973 = vmatprep.subr.mxu0 0.0
      %3974 = vmatpush1.msra.mxu0 %v3844
      %3975 = vmatprep.subr.mxu0 0.0
      %3976 = vmatpush1.msra.mxu0 %v3845
      %3977 = vmatprep.subr.mxu0 0.0
      %3978 = vmatpush1.msra.mxu0 %v3846
      %3979 = vmatprep.subr.mxu0 0.0
      %3980 = vmatpush1.msra.mxu0 %v3847
      %3981 = vmatprep.subr.mxu0 0.0
      %3982 = vmatpush1.msra.mxu0 %v3848
      %3983 = vmatprep.subr.mxu0 0.0
      %3984 = vmatpush1.msra.mxu0 %v3849
      %3985 = vmatprep.subr.mxu0 0.0
      %3986 = vmatpush1.msra.mxu0 %v3850
      %3987 = vmatprep.subr.mxu0 0.0
      %3988 = vmatpush1.msra.mxu0 %v3851
      %3989 = vmatprep.subr.mxu0 0.0
      %3990 = vmatpush1.msra.mxu0 %v3852
      %3991 = vmatprep.subr.mxu0 0.0
      %3992 = vmatpush1.msra.mxu0 %v3853
      %3993 = vmatprep.subr.mxu0 0.0
      %3994 = vmatpush1.msra.mxu0 0.0
      %3995 = vmatprep.subr.mxu0 0.0
      %3996 = vmatpush1.msra.mxu0 0.0
      %3997 = vmatprep.subr.mxu0 0.0
      %3998 = vmatpush1.msra.mxu0 0.0
      %3999 = vmatprep.subr.mxu0 0.0
      %4000 = vmatpush1.msra.mxu0 0.0
      %4001 = vmatprep.subr.mxu0 0.0
      %4002 = vmatpush1.msra.mxu0 0.0
      %4003 = vmatprep.subr.mxu0 0.0
      %4004 = vmatpush1.msra.mxu0 0.0
      %4005 = vmatprep.subr.mxu0 0.0
      %4006 = vmatpush1.msra.mxu0 0.0
      %4007 = vmatprep.subr.mxu0 0.0
      %4008 = vmatpush1.msra.mxu0 0.0
      %4009 = vmatprep.subr.mxu0 0.0
      %4010 = vmatpush1.msra.mxu0 0.0
      %4011 = vmatprep.subr.mxu0 0.0
      %4012 = vmatpush1.msra.mxu0 0.0
      %4013 = vmatprep.subr.mxu0 0.0
      %4014 = vmatpush1.msra.mxu0 0.0
      %4015 = vmatprep.subr.mxu0 0.0
      %4016 = vmatpush1.msra.mxu0 0.0
      %4017 = vmatprep.subr.mxu0 0.0
      %4018 = vmatpush1.msra.mxu0 0.0
      %4019 = vmatprep.subr.mxu0 0.0
      %4020 = vmatpush1.msra.mxu0 0.0
      %4021 = vmatprep.mubr.f32.mxu0 %v3862
      %4022 = vmatmul.mubr.f32.gmra.mrb[0].mxu0 %v3772
      %v4023 = vpop.f32.mrb[0].mxu0
      %v4024 = vadd.f32 %v3859, %v4023
      %v4025 = vpop.f32.mrb[0].mxu0
      %4026 = vmatprep.mubr.f32.mxu0 %v3865
      %4027 = vmatmul.mubr.f32.gmra.mrb[0].mxu0 %v3774
      %v4028 = vpop.f32.mrb[0].mxu0
      %v4029 = vadd.f32 %v3859, %v4028
      %v4030 = vpop.f32.mrb[0].mxu0
      %4031 = vmatprep.mubr.f32.mxu0 %v3868
      %4032 = vmatmul.mubr.f32.gmra.mrb[0].mxu0 %v3776
      %v4033 = vpop.f32.mrb[0].mxu0
      %v4034 = vadd.f32 %v3859, %v4033
      %v4035 = vpop.f32.mrb[0].mxu0
      %4036 = vmatprep.mubr.f32.mxu0 %v3871
      %4037 = vmatmul.mubr.f32.gmra.mrb[0].mxu0 %v3778
      %v4038 = vpop.f32.mrb[0].mxu0
      %v4039 = vadd.f32 %v3859, %v4038
      %v4040 = vpop.f32.mrb[0].mxu0
      %4041 = vmatprep.mubr.f32.mxu0 %v3874
      %4042 = vmatmul.mubr.f32.gmra.mrb[0].mxu0 %v3780
      %v4043 = vpop.f32.mrb[0].mxu0
      %v4044 = vadd.f32 %v3859, %v4043
      %v4045 = vpop.f32.mrb[0].mxu0
      %4046 = vmatprep.mubr.f32.mxu0 %v3877
      %4047 = vmatmul.mubr.f32.gmra.mrb[0].mxu0 %v3782
      %v4048 = vpop.f32.mrb[0].mxu0
      %v4049 = vadd.f32 %v3859, %v4048
      %v4050 = vpop.f32.mrb[0].mxu0
      %4051 = vmatprep.mubr.f32.mxu0 %v3880
      %4052 = vmatmul.mubr.f32.gmra.mrb[0].mxu0 %v3784
      %v4053 = vpop.f32.mrb[0].mxu0
      %v4054 = vadd.f32 %v3859, %v4053
      %v4055 = vpop.f32.mrb[0].mxu0
      %4056 = vmatprep.mubr.f32.mxu0 %v3883
      %4057 = vmatmul.mubr.f32.gmra.mrb[0].mxu0 %v3786
      %v4058 = vpop.f32.mrb[0].mxu0
      %v4059 = vadd.f32 %v3859, %v4058
      %v4060 = vpop.f32.mrb[0].mxu0
      %4061 = vmatprep.mubr.f32.mxu0 %v3886
      %4062 = vmatmul.mubr.f32.gmra.mrb[0].mxu0 %v3788
      %v4063 = vpop.f32.mrb[0].mxu0
      %v4064 = vadd.f32 %v3859, %v4063
      %v4065 = vpop.f32.mrb[0].mxu0
      %4066 = vmatprep.mubr.f32.mxu0 %v3889
      %4067 = vmatmul.mubr.f32.gmra.mrb[0].mxu0 %v3790
      %v4068 = vpop.f32.mrb[0].mxu0
      %v4069 = vadd.f32 %v3859, %v4068
      %v4070 = vpop.f32.mrb[0].mxu0
      %4071 = vmatprep.mubr.f32.mxu0 %v3892
      %4072 = vmatmul.mubr.f32.gmra.mrb[0].mxu0 %v3792
      %v4073 = vpop.f32.mrb[0].mxu0
      %v4074 = vadd.f32 %v3859, %v4073
      %v4075 = vpop.f32.mrb[0].mxu0
      %4076 = vmatprep.mubr.f32.mxu0 %v3895
      %4077 = vmatmul.mubr.f32.gmra.mrb[0].mxu0 %v3794
      %v4078 = vpop.f32.mrb[0].mxu0
      %v4079 = vadd.f32 %v3859, %v4078
      %v4080 = vpop.f32.mrb[0].mxu0
      %4081 = vmatprep.mubr.f32.mxu0 %v3898
      %4082 = vmatmul.mubr.f32.gmra.mrb[0].mxu0 %v3796
      %v4083 = vpop.f32.mrb[0].mxu0
      %v4084 = vadd.f32 %v3859, %v4083
      %v4085 = vpop.f32.mrb[0].mxu0
      %4086 = vmatprep.mubr.f32.mxu0 %v3901
      %4087 = vmatmul.mubr.f32.gmra.mrb[0].mxu0 %v3798
      %v4088 = vpop.f32.mrb[0].mxu0
      %v4089 = vadd.f32 %v3859, %v4088
      %v4090 = vpop.f32.mrb[0].mxu0
      %4091 = vmatprep.mubr.f32.mxu0 %v3904
      %4092 = vmatmul.mubr.f32.gmra.mrb[0].mxu0 %v3800
      %v4093 = vpop.f32.mrb[0].mxu0
      %v4094 = vadd.f32 %v3859, %v4093
      %v4095 = vpop.f32.mrb[0].mxu0
      %4096 = vmatprep.mubr.f32.mxu0 %v3907
      %4097 = vmatmul.mubr.f32.gmra.mrb[0].mxu0 %v3802
      %v4098 = vpop.f32.mrb[0].mxu0
      %v4099 = vadd.f32 %v3859, %v4098
      %v4100 = vpop.f32.mrb[0].mxu0
      %4101 = vmatprep.mubr.f32.mxu0 %v3910
      %4102 = vmatmul.mubr.f32.gmra.mrb[0].mxu0 %v3804
      %v4103 = vpop.f32.mrb[0].mxu0
      %v4104 = vadd.f32 %v3859, %v4103
      %v4105 = vpop.f32.mrb[0].mxu0
      %4106 = vmatprep.mubr.f32.mxu0 %v3913
      %4107 = vmatmul.mubr.f32.gmra.mrb[0].mxu0 %v3806
      %v4108 = vpop.f32.mrb[0].mxu0
      %v4109 = vadd.f32 %v3859, %v4108
      %v4110 = vpop.f32.mrb[0].mxu0
      %4111 = vmatprep.mubr.f32.mxu0 %v3916
      %4112 = vmatmul.mubr.f32.gmra.mrb[0].mxu0 %v3808
      %v4113 = vpop.f32.mrb[0].mxu0
      %v4114 = vadd.f32 %v3859, %v4113
      %v4115 = vpop.f32.mrb[0].mxu0
      %4116 = vmatprep.mubr.f32.mxu0 %v3919
      %4117 = vmatmul.mubr.f32.gmra.mrb[0].mxu0 %v3810
      %v4118 = vpop.f32.mrb[0].mxu0
      %v4119 = vadd.f32 %v3859, %v4118
      %v4120 = vpop.f32.mrb[0].mxu0
      %4121 = vmatprep.mubr.f32.mxu0 %v3922
      %4122 = vmatmul.mubr.f32.gmra.mrb[0].mxu0 %v3812
      %v4123 = vpop.f32.mrb[0].mxu0
      %v4124 = vadd.f32 %v3859, %v4123
      %v4125 = vpop.f32.mrb[0].mxu0
      %4126 = vmatprep.mubr.f32.mxu0 %v3925
      %4127 = vmatmul.mubr.f32.gmra.mrb[0].mxu0 %v3814
      %v4128 = vpop.f32.mrb[0].mxu0
      %v4129 = vadd.f32 %v3859, %v4128
      %v4130 = vpop.f32.mrb[0].mxu0
      %4131 = vmatprep.mubr.f32.mxu0 %v3928
      %4132 = vmatmul.mubr.f32.gmra.mrb[0].mxu0 %v3816
      %v4133 = vpop.f32.mrb[0].mxu0
      %v4134 = vadd.f32 %v3859, %v4133
      %v4135 = vpop.f32.mrb[0].mxu0
      %4136 = vmatprep.mubr.f32.mxu0 %v3931
      %4137 = vmatmul.mubr.f32.gmra.mrb[0].mxu0 %v3818
      %v4138 = vpop.f32.mrb[0].mxu0
      %v4139 = vadd.f32 %v3859, %v4138
      %v4140 = vpop.f32.mrb[0].mxu0
      %4141 = vmatprep.mubr.f32.mxu0 %v3934
      %4142 = vmatmul.mubr.f32.gmra.mrb[0].mxu0 %v3820
      %v4143 = vpop.f32.mrb[0].mxu0
      %v4144 = vadd.f32 %v3859, %v4143
      %v4145 = vpop.f32.mrb[0].mxu0
      %4146 = vmatprep.mubr.f32.mxu0 %v3937
      %4147 = vmatmul.mubr.f32.gmra.mrb[0].mxu0 %v3822
      %v4148 = vpop.f32.mrb[0].mxu0
      %v4149 = vadd.f32 %v3859, %v4148
      %v4150 = vpop.f32.mrb[0].mxu0
      %4151 = vmatprep.mubr.f32.mxu0 %v3940
      %4152 = vmatmul.mubr.f32.gmra.mrb[0].mxu0 %v3824
      %v4153 = vpop.f32.mrb[0].mxu0
      %v4154 = vadd.f32 %v3859, %v4153
      %v4155 = vpop.f32.mrb[0].mxu0
      %4156 = vmatprep.mubr.f32.mxu0 %v3943
      %4157 = vmatmul.mubr.f32.gmra.mrb[0].mxu0 %v3826
      %v4158 = vpop.f32.mrb[0].mxu0
      %v4159 = vadd.f32 %v3859, %v4158
      %v4160 = vpop.f32.mrb[0].mxu0
      %4161 = vmatprep.mubr.f32.mxu0 %v3946
      %4162 = vmatmul.mubr.f32.gmra.mrb[0].mxu0 %v3828
      %v4163 = vpop.f32.mrb[0].mxu0
      %v4164 = vadd.f32 %v3859, %v4163
      %v4165 = vpop.f32.mrb[0].mxu0
      %4166 = vmatprep.mubr.f32.mxu0 %v3949
      %4167 = vmatmul.mubr.f32.gmra.mrb[0].mxu0 %v3830
      %v4168 = vpop.f32.mrb[0].mxu0
      %v4169 = vadd.f32 %v3859, %v4168
      %v4170 = vpop.f32.mrb[0].mxu0
      %4171 = vmatprep.mubr.f32.mxu0 %v3952
      %4172 = vmatmul.mubr.f32.gmra.mrb[0].mxu0 %v3832
      %v4173 = vpop.f32.mrb[0].mxu0
      %v4174 = vadd.f32 %v3859, %v4173
      %v4175 = vpop.f32.mrb[0].mxu0
      %4176 = vmatprep.mubr.f32.mxu0 %v3955
      %4177 = vmatmul.mubr.f32.gmra.mrb[0].mxu0 %v3834
      %v4178 = vpop.f32.mrb[0].mxu0
      %v4179 = vadd.f32 %v3859, %v4178
      %v4180 = vpop.f32.mrb[0].mxu0
      %4181 = vdwg.mxu0
      %v4182 = vadd.f32 %v4024, %v281
      %v4183 = vadd.f32 %v4029, %v282
      %v4184 = vadd.f32 %v4034, %v283
      %v4185 = vadd.f32 %v4039, %v284
      %v4186 = vadd.f32 %v4044, %v285
      %v4187 = vadd.f32 %v4049, %v286
      %v4188 = vadd.f32 %v4054, %v287
      %v4189 = vadd.f32 %v4059, %v288
      %v4190 = vadd.f32 %v4064, %v289
      %v4191 = vadd.f32 %v4069, %v290
      %v4192 = vadd.f32 %v4074, %v291
      %v4193 = vadd.f32 %v4079, %v292
      %v4194 = vadd.f32 %v4084, %v293
      %v4195 = vadd.f32 %v4089, %v294
      %v4196 = vadd.f32 %v4094, %v295
      %v4197 = vadd.f32 %v4099, %v296
      %v4198 = vadd.f32 %v4104, %v297
      %v4199 = vadd.f32 %v4109, %v298
      %v4200 = vadd.f32 %v4114, %v299
      %v4201 = vadd.f32 %v4119, %v300
      %v4202 = vadd.f32 %v4124, %v301
      %v4203 = vadd.f32 %v4129, %v302
      %v4204 = vadd.f32 %v4134, %v303
      %v4205 = vadd.f32 %v4139, %v304
      %v4206 = vadd.f32 %v4144, %v305
      %v4207 = vadd.f32 %v4149, %v306
      %v4208 = vadd.f32 %v4154, %v307
      %v4209 = vadd.f32 %v4159, %v308
      %v4210 = vadd.f32 %v4164, %v309
      %v4211 = vadd.f32 %v4169, %v310
      %v4212 = vadd.f32 %v4174, %v311
      %v4213 = vadd.f32 %v4179, %v312
      %v4214 = vmax.f32 %v4182, 0.0
      %v4215 = vmax.f32 %v4183, 0.0
      %v4216 = vmax.f32 %v4184, 0.0
      %v4217 = vmax.f32 %v4185, 0.0
      %v4218 = vmax.f32 %v4186, 0.0
      %v4219 = vmax.f32 %v4187, 0.0
      %v4220 = vmax.f32 %v4188, 0.0
      %v4221 = vmax.f32 %v4189, 0.0
      %v4222 = vmax.f32 %v4190, 0.0
      %v4223 = vmax.f32 %v4191, 0.0
      %v4224 = vmax.f32 %v4192, 0.0
      %v4225 = vmax.f32 %v4193, 0.0
      %v4226 = vmax.f32 %v4194, 0.0
      %v4227 = vmax.f32 %v4195, 0.0
      %v4228 = vmax.f32 %v4196, 0.0
      %v4229 = vmax.f32 %v4197, 0.0
      %v4230 = vmax.f32 %v4198, 0.0
      %v4231 = vmax.f32 %v4199, 0.0
      %v4232 = vmax.f32 %v4200, 0.0
      %v4233 = vmax.f32 %v4201, 0.0
      %v4234 = vmax.f32 %v4202, 0.0
      %v4235 = vmax.f32 %v4203, 0.0
      %v4236 = vmax.f32 %v4204, 0.0
      %v4237 = vmax.f32 %v4205, 0.0
      %v4238 = vmax.f32 %v4206, 0.0
      %v4239 = vmax.f32 %v4207, 0.0
      %v4240 = vmax.f32 %v4208, 0.0
      %v4241 = vmax.f32 %v4209, 0.0
      %v4242 = vmax.f32 %v4210, 0.0
      %v4243 = vmax.f32 %v4211, 0.0
      %v4244 = vmax.f32 %v4212, 0.0
      %v4245 = vmax.f32 %v4213, 0.0
      %4246 = vst.msk [vmem:[%s224] sm:$0xff] %vm225, %v4214
      %4247 = vst.msk [vmem:[%s224 + $0x8] sm:$0xff] %vm225, %v4215
      %4248 = vst.msk [vmem:[%s224 + $0x10] sm:$0xff] %vm225, %v4216
      %4249 = vst.msk [vmem:[%s224 + $0x18] sm:$0xff] %vm225, %v4217
      %4250 = vst.msk [vmem:[%s224 + $0x20] sm:$0xff] %vm225, %v4218
      %4251 = vst.msk [vmem:[%s224 + $0x28] sm:$0xff] %vm225, %v4219
      %4252 = vst.msk [vmem:[%s224 + $0x30] sm:$0xff] %vm225, %v4220
      %4253 = vst.msk [vmem:[%s224 + $0x38] sm:$0xff] %vm225, %v4221
      %4254 = vst.msk [vmem:[%s224 + $0x40] sm:$0xff] %vm225, %v4222
      %4255 = vst.msk [vmem:[%s224 + $0x48] sm:$0xff] %vm225, %v4223
      %4256 = vst.msk [vmem:[%s224 + $0x50] sm:$0xff] %vm225, %v4224
      %4257 = vst.msk [vmem:[%s224 + $0x58] sm:$0xff] %vm225, %v4225
      %4258 = vst.msk [vmem:[%s224 + $0x60] sm:$0xff] %vm225, %v4226
      %4259 = vst.msk [vmem:[%s224 + $0x68] sm:$0xff] %vm225, %v4227
      %4260 = vst.msk [vmem:[%s224 + $0x70] sm:$0xff] %vm225, %v4228
      %4261 = vst.msk [vmem:[%s224 + $0x78] sm:$0xff] %vm225, %v4229
      %4262 = vst.msk [vmem:[%s224 + $0x80] sm:$0xff] %vm225, %v4230
      %4263 = vst.msk [vmem:[%s224 + $0x88] sm:$0xff] %vm225, %v4231
      %4264 = vst.msk [vmem:[%s224 + $0x90] sm:$0xff] %vm225, %v4232
      %4265 = vst.msk [vmem:[%s224 + $0x98] sm:$0xff] %vm225, %v4233
      %4266 = vst.msk [vmem:[%s224 + $0xa0] sm:$0xff] %vm225, %v4234
      %4267 = vst.msk [vmem:[%s224 + $0xa8] sm:$0xff] %vm225, %v4235
      %4268 = vst.msk [vmem:[%s224 + $0xb0] sm:$0xff] %vm225, %v4236
      %4269 = vst.msk [vmem:[%s224 + $0xb8] sm:$0xff] %vm225, %v4237
      %4270 = vst.msk [vmem:[%s224 + $0xc0] sm:$0xff] %vm225, %v4238
      %4271 = vst.msk [vmem:[%s224 + $0xc8] sm:$0xff] %vm225, %v4239
      %4272 = vst.msk [vmem:[%s224 + $0xd0] sm:$0xff] %vm225, %v4240
      %4273 = vst.msk [vmem:[%s224 + $0xd8] sm:$0xff] %vm225, %v4241
      %4274 = vst.msk [vmem:[%s224 + $0xe0] sm:$0xff] %vm225, %v4242
      %4275 = vst.msk [vmem:[%s224 + $0xe8] sm:$0xff] %vm225, %v4243
      %4276 = vst.msk [vmem:[%s224 + $0xf0] sm:$0xff] %vm225, %v4244
      %4277 = vst.msk [vmem:[%s224 + $0xf8] sm:$0xff] %vm225, %v4245
      %p4278 = scmp.lt.s32.totalorder %s16, 1
      %s4279 = scalar_select %p4278, %s16, 1
      %s4280 = smul.addr %s4279, 32
      %s4281 = smul.addr %s4280, 8
      %s4282 = scalar_lea.vmem %s5, %s4281
      // Predicated region
      $region41: #{res_layer_2d.1} parent=39 // pred_check
        %p4283 = pneg %p144
      $region42: #{res_layer_2d.1} parent=39 // pred_check_branch
        %4285 = sbr.rel (%p4283) target = $region44
      $region43: #{res_layer_2d.1} parent=39 // pred_region
        _
      $region44: #{res_layer_2d.1} parent=39 // pred_fallthru
        _
    $region40: #{res_layer_2d.1} parent=5 // pred_fallthru
      _
    %p4286 = scmp.le.s32.totalorder 2, %s11
    // Predicated region
    $region45: #{res_layer_2d.1} parent=5 // pred_check
      %p4287 = pneg %p4286
    $region46: #{res_layer_2d.1} parent=5 // pred_check_branch
      %4289 = sbr.rel (%p4287) target = $region48
    $region47: #{res_layer_2d.1} parent=5 // pred_region
      %s4290 = ssub.s32 %s11, 2
      // Predicated region
      $region49: #{res_layer_2d.1} parent=47 // pred_check
        %p4291 = pneg %p150
      $region50: #{res_layer_2d.1} parent=47 // pred_check_branch
        %4293 = sbr.rel (%p4291) target = $region52
      $region51: #{res_layer_2d.1} parent=47 // pred_region
        %p4294 = scmp.lt.s32.totalorder %s17, 1
        %s4295 = scalar_select %p4294, %s17, 1
        %s4296 = smul.addr %s4295, 32
        %s4297 = smul.addr %s4296, 8
        %s4298 = scalar_lea.vmem %s5, %s4297
      $region52: #{res_layer_2d.1} parent=47 // pred_fallthru
        _
    $region48: #{res_layer_2d.1} parent=5 // pred_fallthru
      _
  $region6: #{res_layer_2d.1} parent=0 // loop_footer
    %s15 = sadd.s32 1, %s11
  $region7: #{res_layer_2d.1} parent=0 // loop_footer_branch
    %10 = sbr.rel target = $region3
  $region8: #{res_layer_2d.1} parent=0 // loop_exit
    _

</llo_original>
